<compile_context>
chip_gen: v6e
topology: v6e:2x2x1
jax: 0.10.0
libtpu: 0.0.40
codegen_flags: <defaults>
</compile_context>

<pallas_src>
import functools

import jax
import jax.numpy as jnp
from jax.experimental import pallas as pl
from jax.experimental.pallas import tpu as pltpu


_LANE = 128      # lane width (last-dim alignment)
_SUBLANE = 8     # f32 sublane multiple (second-to-last dim alignment)


def _round_up(x: int, m: int) -> int:
    return ((x + m - 1) // m) * m


def _pad_to(arr, target_shape):
    pads = [(0, t - s) for s, t in zip(arr.shape, target_shape)]
    if all(p == (0, 0) for p in pads):
        return arr
    return jnp.pad(arr, pads)


def _make_mlp_kernel(n_linear_layers: int, negative_slope: float = 0.2):
    """Kernel for `n_linear_layers` Linear layers; LeakyReLU after all but the last."""

    def kernel(*refs):
        x_ref = refs[0]
        out_ref = refs[-1]
        param_refs = refs[1:-1]  # interleaved (w0, b0, w1, b1, ..., wL, bL)

        compute_dtype = x_ref.dtype
        # Exact f32 matmul when operands are f32 (multi-pass MXU is free: HBM-bound kernel).
        # bf16 operands take the native single-pass path.
        precision = (jax.lax.Precision.HIGHEST
                     if compute_dtype == jnp.float32 else None)

        h = x_ref[...]
        for i in range(n_linear_layers):
            w = param_refs[2 * i][...]
            b = param_refs[2 * i + 1][...]
            acc = jnp.dot(h, w, preferred_element_type=jnp.float32, precision=precision)
            acc = acc + b.astype(jnp.float32)  # (1, out) bias broadcast, f32 epilogue
            if i < n_linear_layers - 1:
                # LeakyReLU(0.2) on the VPU, in f32.
                acc = jnp.where(acc > 0, acc, negative_slope * acc)
                h = acc.astype(compute_dtype)
            else:
                h = acc
        out_ref[...] = h.astype(out_ref.dtype)

    return kernel


def prepare_params(weights, biases, n_classes, compute_dtype=None):
    """One-time parameter prep (hoisted out of the per-call hot path).

    * W0's input-feature rows padded to a lane multiple (matches padded x columns).
    * Final layer's output columns (and bias) padded to a lane multiple so the output
      store is lane-dense.  Hidden widths stay UNPADDED.
    * Optional operand-dtype cast (e.g. jnp.bfloat16) to halve HBM bytes.
    Zero padding keeps numerics identical; the wrapper slices logits back.
    """
    n_linear = len(weights)
    in_feats = weights[0].shape[0]
    d0_pad = _round_up(in_feats, _LANE)
    dc_pad = _round_up(n_classes, _LANE)

    weights_p, biases_p = [], []
    for i, (w, b) in enumerate(zip(weights, biases)):
        rows = d0_pad if i == 0 else w.shape[0]
        cols = dc_pad if i == n_linear - 1 else w.shape[1]
        wp = _pad_to(w, (rows, cols))
        bp = _pad_to(b, (1, cols))
        if compute_dtype is not None:
            wp = wp.astype(compute_dtype)
            bp = bp.astype(compute_dtype)
        weights_p.append(wp)
        biases_p.append(bp)
    return weights_p, biases_p


@functools.partial(jax.jit, static_argnames=("n_classes", "tile_m"))
def fc_classifier_forward(x_nchw, weights_p, biases_p, *, n_classes, tile_m: int = 512):
    """Forward pass matching FCClassifier.forward.

    x_nchw   : (N, C, H, W)  -- flattened to (N, C*H*W) in the wrapper (glue).
    weights_p: list of pre-padded (in_f, out_f) arrays from prepare_params.
    biases_p : list of pre-padded (1, out_f) arrays from prepare_params.
    Returns logits of shape (N, n_classes).
    """
    n = x_nchw.shape[0]
    x_flat = x_nchw.reshape(n, -1)  # img_flat = x.view(x.size(0), -1)
    n_linear = len(weights_p)
    d0_pad = weights_p[0].shape[0]
    dc_pad = weights_p[-1].shape[1]

    # ---- batch tiling: sublane-aligned tm, capped at tile_m; for large batches keep the
    # "parallel" grid axis >= 2 steps so v7x can shard it across both TensorCores.
    n_pad_base = _round_up(max(n, 1), _SUBLANE)
    tm_cap = _round_up(tile_m, _SUBLANE)
    if n_pad_base <= 2 * _SUBLANE:
        tm = n_pad_base
    else:
        tm = min(tm_cap, _round_up((n_pad_base + 1) // 2, _SUBLANE))
    n_pad = _round_up(n_pad_base, tm)
    grid = n_pad // tm

    # Only x gets padded per call (fuses under jit); cast to the (prepped) weight dtype.
    x_p = _pad_to(x_flat, (n_pad, d0_pad)).astype(weights_p[0].dtype)

    kernel = _make_mlp_kernel(n_linear)

    inputs = [x_p]
    in_specs = [pl.BlockSpec((tm, d0_pad), lambda i: (i, 0))]
    for w, b in zip(weights_p, biases_p):
        inputs.append(w)
        in_specs.append(pl.BlockSpec(w.shape, lambda i: (0, 0)))  # VMEM-resident across grid
        inputs.append(b)
        in_specs.append(pl.BlockSpec(b.shape, lambda i: (0, 0)))
    out_specs = pl.BlockSpec((tm, dc_pad), lambda i: (i, 0))

    out_dtype = x_flat.dtype
    x_itemsize = jnp.dtype(x_p.dtype).itemsize
    out_itemsize = jnp.dtype(out_dtype).itemsize
    param_bytes = sum(int(a.size) * jnp.dtype(a.dtype).itemsize for a in inputs[1:])

    # Right-sized VMEM request (assume everything double-buffered + headroom), capped
    # well inside v7x's 64 MiB physical VMEM.
    vmem_needed = (2 * tm * d0_pad * x_itemsize
                   + 2 * tm * dc_pad * out_itemsize
                   + 2 * param_bytes)
    vmem_limit = int(min(max(2 * vmem_needed, 16 << 20), 48 << 20))

    # Advisory cost estimate for XLA's scheduler.
    flops = 2 * n_pad * sum(w.shape[0] * w.shape[1] for w in weights_p)
    bytes_accessed = (int(x_p.size) * x_itemsize + param_bytes
                      + n_pad * dc_pad * out_itemsize)
    cost = pl.CostEstimate(flops=flops, transcendentals=0, bytes_accessed=bytes_accessed)

    out_padded = pl.pallas_call(
        kernel,
        out_shape=jax.ShapeDtypeStruct((n_pad, dc_pad), out_dtype),
        grid=(grid,),
        in_specs=in_specs,
        out_specs=out_specs,
        compiler_params=pltpu.CompilerParams(
            dimension_semantics=("parallel",),
            vmem_limit_bytes=vmem_limit,
        ),
        cost_estimate=cost,
    )(*inputs)

    # Slice the zero-padded rows/cols back to the real logits.
    return out_padded[:n, :n_classes]


def init_params(key, n_feats, n_classes, dtype=jnp.float32):
    """Deterministic synthetic parameters (PyTorch-like uniform fan-in init)."""
    dims = list(n_feats) + [n_classes]
    weights, biases = [], []
    for fan_in, fan_out in zip(dims[:-1], dims[1:]):
        key, kw, kb = jax.random.split(key, 3)
        bound = 1.0 / jnp.sqrt(jnp.asarray(fan_in, dtype=jnp.float32))
        w = jax.random.uniform(kw, (fan_in, fan_out), dtype, -bound, bound)
        b = jax.random.uniform(kb, (1, fan_out), dtype, -bound, bound)
        weights.append(w)
        biases.append(b)
    return weights, biases


def reference_forward(x_nchw, weights, biases):
    """Pure-JAX reference for correctness check."""
    h = x_nchw.reshape(x_nchw.shape[0], -1).astype(jnp.float32)
    n_linear = len(weights)
    for i, (w, b) in enumerate(zip(weights, biases)):
        h = h @ w.astype(jnp.float32) + b.astype(jnp.float32)
        if i < n_linear - 1:
            h = jnp.where(h > 0, h, 0.2 * h)
    return h


if __name__ == "__main__":
    key = jax.random.PRNGKey(0)

    # Small shapes consistent with the module: batch=2, C=4, H=W=16.
    N, C, H, W = 2, 4, 16, 16
    in_feats = C * H * W                  # 1024
    n_hiddens = [64, 32]                  # Iterable[int]
    n_classes = 10                        # default
    n_feats = [in_feats] + n_hiddens      # self.n_feats

    key, kx = jax.random.split(key)
    x = jax.random.normal(kx, (N, C, H, W), dtype=jnp.float32)

    weights, biases = init_params(key, n_feats, n_classes)

    # One-time param prep (padding hoisted out of the hot path).  Pass
    # compute_dtype=jnp.bfloat16 here to halve HBM bytes if relaxed precision is OK.
    weights_p, biases_p = prepare_params(weights, biases, n_classes, compute_dtype=None)

    logits = fc_classifier_forward(x, weights_p, biases_p, n_classes=n_classes)
    logits = jax.block_until_ready(logits)

    ref = reference_forward(x, weights, biases)
    assert logits.shape == (N, n_classes), logits.shape
    assert jnp.allclose(logits, ref, atol=1e-4, rtol=1e-4), "mismatch vs reference"

    print("KERNEL_OK")
</pallas_src>

<mosaic_0001>
module attributes {stable_mosaic.version = 11 : i64} {
  func.func @kernel(%arg0: i32, %arg1: memref<8x1024xf32, #tpu.memory_space<vmem>>, %arg2: memref<1024x64xf32, #tpu.memory_space<vmem>>, %arg3: memref<1x64xf32, #tpu.memory_space<vmem>>, %arg4: memref<64x32xf32, #tpu.memory_space<vmem>>, %arg5: memref<1x32xf32, #tpu.memory_space<vmem>>, %arg6: memref<32x128xf32, #tpu.memory_space<vmem>>, %arg7: memref<1x128xf32, #tpu.memory_space<vmem>>, %arg8: memref<8x128xf32, #tpu.memory_space<vmem>>) attributes {dimension_semantics = [#tpu.dimension_semantics<parallel>], iteration_bounds = array<i64: 1>, scalar_prefetch = 0 : i64, scratch_operands = 0 : i64, tpu.core_type = #tpu.core_type<tc>, window_params = [{transform_indices = @transform_0, window_bounds = array<i64: 8, 1024>}, {pipeline_mode = #tpu.pipeline_mode<synchronous>, transform_indices = @transform_1, window_bounds = array<i64: 1024, 64>}, {pipeline_mode = #tpu.pipeline_mode<synchronous>, transform_indices = @transform_2, window_bounds = array<i64: 1, 64>}, {pipeline_mode = #tpu.pipeline_mode<synchronous>, transform_indices = @transform_3, window_bounds = array<i64: 64, 32>}, {pipeline_mode = #tpu.pipeline_mode<synchronous>, transform_indices = @transform_4, window_bounds = array<i64: 1, 32>}, {pipeline_mode = #tpu.pipeline_mode<synchronous>, transform_indices = @transform_5, window_bounds = array<i64: 32, 128>}, {pipeline_mode = #tpu.pipeline_mode<synchronous>, transform_indices = @transform_6, window_bounds = array<i64: 1, 128>}, {transform_indices = @transform_7, window_bounds = array<i64: 8, 128>}]} {
    %c0 = arith.constant 0 : index
    %c0_0 = arith.constant 0 : index
    %0 = vector.load %arg1[%c0, %c0_0] : memref<8x1024xf32, #tpu.memory_space<vmem>>, vector<8x1024xf32>
    %c0_1 = arith.constant 0 : index
    %c0_2 = arith.constant 0 : index
    %1 = vector.load %arg2[%c0_1, %c0_2] : memref<1024x64xf32, #tpu.memory_space<vmem>>, vector<1024x64xf32>
    %c0_3 = arith.constant 0 : index
    %c0_4 = arith.constant 0 : index
    %2 = vector.load %arg3[%c0_3, %c0_4] : memref<1x64xf32, #tpu.memory_space<vmem>>, vector<1x64xf32>
    %cst = arith.constant dense<0.000000e+00> : vector<8x64xf32>
    %3 = tpu.matmul %0, %1, %cst {dimension_numbers = #tpu.dot_dimension_numbers<[1], [0], [0], [1], [0, 0, 1, 1], [], []>, precision = #tpu.contract_precision<fp32>} : vector<8x1024xf32>, vector<1024x64xf32>, vector<8x64xf32> -> vector<8x64xf32>
    %4 = vector.broadcast %2 : vector<1x64xf32> to vector<8x64xf32>
    %5 = arith.addf %3, %4 : vector<8x64xf32>
    %cst_5 = arith.constant 0.000000e+00 : f32
    %6 = vector.broadcast %cst_5 : f32 to vector<8x64xf32>
    %7 = arith.cmpf ogt, %5, %6 : vector<8x64xf32>
    %cst_6 = arith.constant 2.000000e-01 : f32
    %8 = vector.broadcast %cst_6 : f32 to vector<8x64xf32>
    %9 = arith.mulf %8, %5 : vector<8x64xf32>
    %10 = arith.select %7, %5, %9 : vector<8x64xi1>, vector<8x64xf32>
    %c0_7 = arith.constant 0 : index
    %c0_8 = arith.constant 0 : index
    %11 = vector.load %arg4[%c0_7, %c0_8] : memref<64x32xf32, #tpu.memory_space<vmem>>, vector<64x32xf32>
    %c0_9 = arith.constant 0 : index
    %c0_10 = arith.constant 0 : index
    %12 = vector.load %arg5[%c0_9, %c0_10] : memref<1x32xf32, #tpu.memory_space<vmem>>, vector<1x32xf32>
    %cst_11 = arith.constant dense<0.000000e+00> : vector<8x32xf32>
    %13 = tpu.matmul %10, %11, %cst_11 {dimension_numbers = #tpu.dot_dimension_numbers<[1], [0], [0], [1], [0, 0, 1, 1], [], []>, precision = #tpu.contract_precision<fp32>} : vector<8x64xf32>, vector<64x32xf32>, vector<8x32xf32> -> vector<8x32xf32>
    %14 = vector.broadcast %12 : vector<1x32xf32> to vector<8x32xf32>
    %15 = arith.addf %13, %14 : vector<8x32xf32>
    %cst_12 = arith.constant 0.000000e+00 : f32
    %16 = vector.broadcast %cst_12 : f32 to vector<8x32xf32>
    %17 = arith.cmpf ogt, %15, %16 : vector<8x32xf32>
    %cst_13 = arith.constant 2.000000e-01 : f32
    %18 = vector.broadcast %cst_13 : f32 to vector<8x32xf32>
    %19 = arith.mulf %18, %15 : vector<8x32xf32>
    %20 = arith.select %17, %15, %19 : vector<8x32xi1>, vector<8x32xf32>
    %c0_14 = arith.constant 0 : index
    %c0_15 = arith.constant 0 : index
    %21 = vector.load %arg6[%c0_14, %c0_15] : memref<32x128xf32, #tpu.memory_space<vmem>>, vector<32x128xf32>
    %c0_16 = arith.constant 0 : index
    %c0_17 = arith.constant 0 : index
    %22 = vector.load %arg7[%c0_16, %c0_17] : memref<1x128xf32, #tpu.memory_space<vmem>>, vector<1x128xf32>
    %cst_18 = arith.constant dense<0.000000e+00> : vector<8x128xf32>
    %23 = tpu.matmul %20, %21, %cst_18 {dimension_numbers = #tpu.dot_dimension_numbers<[1], [0], [0], [1], [0, 0, 1, 1], [], []>, precision = #tpu.contract_precision<fp32>} : vector<8x32xf32>, vector<32x128xf32>, vector<8x128xf32> -> vector<8x128xf32>
    %24 = vector.broadcast %22 : vector<1x128xf32> to vector<8x128xf32>
    %25 = arith.addf %23, %24 : vector<8x128xf32>
    %c0_19 = arith.constant 0 : index
    %c0_20 = arith.constant 0 : index
    %26 = vector.load %arg8[%c0_19, %c0_20] : memref<8x128xf32, #tpu.memory_space<vmem>>, vector<8x128xf32>
    tpu.vector_store %arg8[%c0_19, %c0_20], %25 {strides = array<i32>} : memref<8x128xf32, #tpu.memory_space<vmem>>, vector<8x128xf32>,
    return
  }
  func.func @transform_0(%arg0: i32) -> (i32, i32) {
    %c0_i32 = arith.constant 0 : i32
    %c0_i32_0 = arith.constant 0 : i32
    return %arg0, %c0_i32 : i32, i32
  }
  func.func @transform_1(%arg0: i32) -> (i32, i32) {
    %c0_i32 = arith.constant 0 : i32
    %c0_i32_0 = arith.constant 0 : i32
    %c0_i32_1 = arith.constant 0 : i32
    return %c0_i32, %c0_i32_0 : i32, i32
  }
  func.func @transform_2(%arg0: i32) -> (i32, i32) {
    %c0_i32 = arith.constant 0 : i32
    %c0_i32_0 = arith.constant 0 : i32
    %c0_i32_1 = arith.constant 0 : i32
    return %c0_i32, %c0_i32_0 : i32, i32
  }
  func.func @transform_3(%arg0: i32) -> (i32, i32) {
    %c0_i32 = arith.constant 0 : i32
    %c0_i32_0 = arith.constant 0 : i32
    %c0_i32_1 = arith.constant 0 : i32
    return %c0_i32, %c0_i32_0 : i32, i32
  }
  func.func @transform_4(%arg0: i32) -> (i32, i32) {
    %c0_i32 = arith.constant 0 : i32
    %c0_i32_0 = arith.constant 0 : i32
    %c0_i32_1 = arith.constant 0 : i32
    return %c0_i32, %c0_i32_0 : i32, i32
  }
  func.func @transform_5(%arg0: i32) -> (i32, i32) {
    %c0_i32 = arith.constant 0 : i32
    %c0_i32_0 = arith.constant 0 : i32
    %c0_i32_1 = arith.constant 0 : i32
    return %c0_i32, %c0_i32_0 : i32, i32
  }
  func.func @transform_6(%arg0: i32) -> (i32, i32) {
    %c0_i32 = arith.constant 0 : i32
    %c0_i32_0 = arith.constant 0 : i32
    %c0_i32_1 = arith.constant 0 : i32
    return %c0_i32, %c0_i32_0 : i32, i32
  }
  func.func @transform_7(%arg0: i32) -> (i32, i32) {
    %c0_i32 = arith.constant 0 : i32
    %c0_i32_0 = arith.constant 0 : i32
    return %arg0, %c0_i32 : i32, i32
  }
}

</mosaic_0001>

<llo_original>
// kernel: fc_classifier_forward.1
$region0: #{fc_classifier_forward.1}
  #allocation0 [shape = 'u32[]', space=smem, size = 0x4, offset = 0x4, fixed_abs, tag = 'smem constant byte address 0x4 - core index']
  #allocation1 [shape = 'u32[144,128]{1,0:T(1,128)}', space=vmem, size = 0x12000, scoped, tag = 'internal scratch']
  %s0 = inlined_call_operand.vmem [shape: f32[8,1024], index: 0, kind: input, shape index: {}]
  %s1 = inlined_call_operand.vmem [shape: f32[1024,64], index: 1, kind: input, shape index: {}]
  %s2 = inlined_call_operand.vmem [shape: f32[1,64], index: 2, kind: input, shape index: {}]
  %s3 = inlined_call_operand.vmem [shape: f32[64,32], index: 3, kind: input, shape index: {}]
  %s4 = inlined_call_operand.vmem [shape: f32[1,32], index: 4, kind: input, shape index: {}]
  %s5 = inlined_call_operand.vmem [shape: f32[32,128], index: 5, kind: input, shape index: {}]
  %s6 = inlined_call_operand.vmem [shape: f32[1,128], index: 6, kind: input, shape index: {}]
  %s7 = inlined_call_operand.vmem [shape: f32[8,128], index: 7, kind: output, shape index: {}]
  %s8 = sld [smem:[#allocation0]]
  $region38: #{fc_classifier_forward.1} parent=0
    _
  %s10 = ssub.s32 1, %s8
  %s11 = scalar_select 0, %s10, %s8
  // Predicated region
  $region2: #{fc_classifier_forward.1} parent=0 // pred_check
    _
  $region3: #{fc_classifier_forward.1} parent=0 // pred_check_branch
    %13 = sbr.rel (0) target = $region5
  $region4: #{fc_classifier_forward.1} parent=0 // pred_region
    _
  $region5: #{fc_classifier_forward.1} parent=0 // pred_fallthru
    _
  // Predicated region
  $region6: #{fc_classifier_forward.1} parent=0 // pred_check
    _
  $region7: #{fc_classifier_forward.1} parent=0 // pred_check_branch
    %15 = sbr.rel (0) target = $region9
  $region8: #{fc_classifier_forward.1} parent=0 // pred_region
    _
  $region9: #{fc_classifier_forward.1} parent=0 // pred_fallthru
    _
  // Predicated region
  $region10: #{fc_classifier_forward.1} parent=0 // pred_check
    _
  $region11: #{fc_classifier_forward.1} parent=0 // pred_check_branch
    %17 = sbr.rel (0) target = $region13
  $region12: #{fc_classifier_forward.1} parent=0 // pred_region
    _
  $region13: #{fc_classifier_forward.1} parent=0 // pred_fallthru
    _
  // Predicated region
  $region14: #{fc_classifier_forward.1} parent=0 // pred_check
    _
  $region15: #{fc_classifier_forward.1} parent=0 // pred_check_branch
    %19 = sbr.rel (0) target = $region17
  $region16: #{fc_classifier_forward.1} parent=0 // pred_region
    _
  $region17: #{fc_classifier_forward.1} parent=0 // pred_fallthru
    _
  // Predicated region
  $region18: #{fc_classifier_forward.1} parent=0 // pred_check
    _
  $region19: #{fc_classifier_forward.1} parent=0 // pred_check_branch
    %21 = sbr.rel (0) target = $region21
  $region20: #{fc_classifier_forward.1} parent=0 // pred_region
    _
  $region21: #{fc_classifier_forward.1} parent=0 // pred_fallthru
    _
  // Predicated region
  $region22: #{fc_classifier_forward.1} parent=0 // pred_check
    _
  $region23: #{fc_classifier_forward.1} parent=0 // pred_check_branch
    %23 = sbr.rel (0) target = $region25
  $region24: #{fc_classifier_forward.1} parent=0 // pred_region
    _
  $region25: #{fc_classifier_forward.1} parent=0 // pred_fallthru
    _
  // Predicated region
  $region26: #{fc_classifier_forward.1} parent=0 // pred_check
    _
  $region27: #{fc_classifier_forward.1} parent=0 // pred_check_branch
    %25 = sbr.rel (0) target = $region29
  $region28: #{fc_classifier_forward.1} parent=0 // pred_region
    _
  $region29: #{fc_classifier_forward.1} parent=0 // pred_fallthru
    _
  %v26 = vld [vmem:[%s0] sm:$0xff]
  %v27 = vld [vmem:[%s0 + $0x8] sm:$0xff]
  %v28 = vld [vmem:[%s0 + $0x10] sm:$0xff]
  %v29 = vld [vmem:[%s0 + $0x18] sm:$0xff]
  %v30 = vld [vmem:[%s0 + $0x20] sm:$0xff]
  %v31 = vld [vmem:[%s0 + $0x28] sm:$0xff]
  %v32 = vld [vmem:[%s0 + $0x30] sm:$0xff]
  %v33 = vld [vmem:[%s0 + $0x38] sm:$0xff]
  %v34 = vld [vmem:[%s1] sm:$0xff]
  %v35 = vld [vmem:[%s1 + $0x8] sm:$0xff]
  %v36 = vld [vmem:[%s1 + $0x10] sm:$0xff]
  %v37 = vld [vmem:[%s1 + $0x18] sm:$0xff]
  %v38 = vld [vmem:[%s1 + $0x20] sm:$0xff]
  %v39 = vld [vmem:[%s1 + $0x28] sm:$0xff]
  %v40 = vld [vmem:[%s1 + $0x30] sm:$0xff]
  %v41 = vld [vmem:[%s1 + $0x38] sm:$0xff]
  %v42 = vld [vmem:[%s1 + $0x40] sm:$0xff]
  %v43 = vld [vmem:[%s1 + $0x48] sm:$0xff]
  %v44 = vld [vmem:[%s1 + $0x50] sm:$0xff]
  %v45 = vld [vmem:[%s1 + $0x58] sm:$0xff]
  %v46 = vld [vmem:[%s1 + $0x60] sm:$0xff]
  %v47 = vld [vmem:[%s1 + $0x68] sm:$0xff]
  %v48 = vld [vmem:[%s1 + $0x70] sm:$0xff]
  %v49 = vld [vmem:[%s1 + $0x78] sm:$0xff]
  %v50 = vld [vmem:[%s1 + $0x80] sm:$0xff]
  %v51 = vld [vmem:[%s1 + $0x88] sm:$0xff]
  %v52 = vld [vmem:[%s1 + $0x90] sm:$0xff]
  %v53 = vld [vmem:[%s1 + $0x98] sm:$0xff]
  %v54 = vld [vmem:[%s1 + $0xa0] sm:$0xff]
  %v55 = vld [vmem:[%s1 + $0xa8] sm:$0xff]
  %v56 = vld [vmem:[%s1 + $0xb0] sm:$0xff]
  %v57 = vld [vmem:[%s1 + $0xb8] sm:$0xff]
  %v58 = vld [vmem:[%s1 + $0xc0] sm:$0xff]
  %v59 = vld [vmem:[%s1 + $0xc8] sm:$0xff]
  %v60 = vld [vmem:[%s1 + $0xd0] sm:$0xff]
  %v61 = vld [vmem:[%s1 + $0xd8] sm:$0xff]
  %v62 = vld [vmem:[%s1 + $0xe0] sm:$0xff]
  %v63 = vld [vmem:[%s1 + $0xe8] sm:$0xff]
  %v64 = vld [vmem:[%s1 + $0xf0] sm:$0xff]
  %v65 = vld [vmem:[%s1 + $0xf8] sm:$0xff]
  %v66 = vld [vmem:[%s1 + $0x100] sm:$0xff]
  %v67 = vld [vmem:[%s1 + $0x108] sm:$0xff]
  %v68 = vld [vmem:[%s1 + $0x110] sm:$0xff]
  %v69 = vld [vmem:[%s1 + $0x118] sm:$0xff]
  %v70 = vld [vmem:[%s1 + $0x120] sm:$0xff]
  %v71 = vld [vmem:[%s1 + $0x128] sm:$0xff]
  %v72 = vld [vmem:[%s1 + $0x130] sm:$0xff]
  %v73 = vld [vmem:[%s1 + $0x138] sm:$0xff]
  %v74 = vld [vmem:[%s1 + $0x140] sm:$0xff]
  %v75 = vld [vmem:[%s1 + $0x148] sm:$0xff]
  %v76 = vld [vmem:[%s1 + $0x150] sm:$0xff]
  %v77 = vld [vmem:[%s1 + $0x158] sm:$0xff]
  %v78 = vld [vmem:[%s1 + $0x160] sm:$0xff]
  %v79 = vld [vmem:[%s1 + $0x168] sm:$0xff]
  %v80 = vld [vmem:[%s1 + $0x170] sm:$0xff]
  %v81 = vld [vmem:[%s1 + $0x178] sm:$0xff]
  %v82 = vld [vmem:[%s1 + $0x180] sm:$0xff]
  %v83 = vld [vmem:[%s1 + $0x188] sm:$0xff]
  %v84 = vld [vmem:[%s1 + $0x190] sm:$0xff]
  %v85 = vld [vmem:[%s1 + $0x198] sm:$0xff]
  %v86 = vld [vmem:[%s1 + $0x1a0] sm:$0xff]
  %v87 = vld [vmem:[%s1 + $0x1a8] sm:$0xff]
  %v88 = vld [vmem:[%s1 + $0x1b0] sm:$0xff]
  %v89 = vld [vmem:[%s1 + $0x1b8] sm:$0xff]
  %v90 = vld [vmem:[%s1 + $0x1c0] sm:$0xff]
  %v91 = vld [vmem:[%s1 + $0x1c8] sm:$0xff]
  %v92 = vld [vmem:[%s1 + $0x1d0] sm:$0xff]
  %v93 = vld [vmem:[%s1 + $0x1d8] sm:$0xff]
  %v94 = vld [vmem:[%s1 + $0x1e0] sm:$0xff]
  %v95 = vld [vmem:[%s1 + $0x1e8] sm:$0xff]
  %v96 = vld [vmem:[%s1 + $0x1f0] sm:$0xff]
  %v97 = vld [vmem:[%s1 + $0x1f8] sm:$0xff]
  %v98 = vld [vmem:[%s1 + $0x200] sm:$0xff]
  %v99 = vld [vmem:[%s1 + $0x208] sm:$0xff]
  %v100 = vld [vmem:[%s1 + $0x210] sm:$0xff]
  %v101 = vld [vmem:[%s1 + $0x218] sm:$0xff]
  %v102 = vld [vmem:[%s1 + $0x220] sm:$0xff]
  %v103 = vld [vmem:[%s1 + $0x228] sm:$0xff]
  %v104 = vld [vmem:[%s1 + $0x230] sm:$0xff]
  %v105 = vld [vmem:[%s1 + $0x238] sm:$0xff]
  %v106 = vld [vmem:[%s1 + $0x240] sm:$0xff]
  %v107 = vld [vmem:[%s1 + $0x248] sm:$0xff]
  %v108 = vld [vmem:[%s1 + $0x250] sm:$0xff]
  %v109 = vld [vmem:[%s1 + $0x258] sm:$0xff]
  %v110 = vld [vmem:[%s1 + $0x260] sm:$0xff]
  %v111 = vld [vmem:[%s1 + $0x268] sm:$0xff]
  %v112 = vld [vmem:[%s1 + $0x270] sm:$0xff]
  %v113 = vld [vmem:[%s1 + $0x278] sm:$0xff]
  %v114 = vld [vmem:[%s1 + $0x280] sm:$0xff]
  %v115 = vld [vmem:[%s1 + $0x288] sm:$0xff]
  %v116 = vld [vmem:[%s1 + $0x290] sm:$0xff]
  %v117 = vld [vmem:[%s1 + $0x298] sm:$0xff]
  %v118 = vld [vmem:[%s1 + $0x2a0] sm:$0xff]
  %v119 = vld [vmem:[%s1 + $0x2a8] sm:$0xff]
  %v120 = vld [vmem:[%s1 + $0x2b0] sm:$0xff]
  %v121 = vld [vmem:[%s1 + $0x2b8] sm:$0xff]
  %v122 = vld [vmem:[%s1 + $0x2c0] sm:$0xff]
  %v123 = vld [vmem:[%s1 + $0x2c8] sm:$0xff]
  %v124 = vld [vmem:[%s1 + $0x2d0] sm:$0xff]
  %v125 = vld [vmem:[%s1 + $0x2d8] sm:$0xff]
  %v126 = vld [vmem:[%s1 + $0x2e0] sm:$0xff]
  %v127 = vld [vmem:[%s1 + $0x2e8] sm:$0xff]
  %v128 = vld [vmem:[%s1 + $0x2f0] sm:$0xff]
  %v129 = vld [vmem:[%s1 + $0x2f8] sm:$0xff]
  %v130 = vld [vmem:[%s1 + $0x300] sm:$0xff]
  %v131 = vld [vmem:[%s1 + $0x308] sm:$0xff]
  %v132 = vld [vmem:[%s1 + $0x310] sm:$0xff]
  %v133 = vld [vmem:[%s1 + $0x318] sm:$0xff]
  %v134 = vld [vmem:[%s1 + $0x320] sm:$0xff]
  %v135 = vld [vmem:[%s1 + $0x328] sm:$0xff]
  %v136 = vld [vmem:[%s1 + $0x330] sm:$0xff]
  %v137 = vld [vmem:[%s1 + $0x338] sm:$0xff]
  %v138 = vld [vmem:[%s1 + $0x340] sm:$0xff]
  %v139 = vld [vmem:[%s1 + $0x348] sm:$0xff]
  %v140 = vld [vmem:[%s1 + $0x350] sm:$0xff]
  %v141 = vld [vmem:[%s1 + $0x358] sm:$0xff]
  %v142 = vld [vmem:[%s1 + $0x360] sm:$0xff]
  %v143 = vld [vmem:[%s1 + $0x368] sm:$0xff]
  %v144 = vld [vmem:[%s1 + $0x370] sm:$0xff]
  %v145 = vld [vmem:[%s1 + $0x378] sm:$0xff]
  %v146 = vld [vmem:[%s1 + $0x380] sm:$0xff]
  %v147 = vld [vmem:[%s1 + $0x388] sm:$0xff]
  %v148 = vld [vmem:[%s1 + $0x390] sm:$0xff]
  %v149 = vld [vmem:[%s1 + $0x398] sm:$0xff]
  %v150 = vld [vmem:[%s1 + $0x3a0] sm:$0xff]
  %v151 = vld [vmem:[%s1 + $0x3a8] sm:$0xff]
  %v152 = vld [vmem:[%s1 + $0x3b0] sm:$0xff]
  %v153 = vld [vmem:[%s1 + $0x3b8] sm:$0xff]
  %v154 = vld [vmem:[%s1 + $0x3c0] sm:$0xff]
  %v155 = vld [vmem:[%s1 + $0x3c8] sm:$0xff]
  %v156 = vld [vmem:[%s1 + $0x3d0] sm:$0xff]
  %v157 = vld [vmem:[%s1 + $0x3d8] sm:$0xff]
  %v158 = vld [vmem:[%s1 + $0x3e0] sm:$0xff]
  %v159 = vld [vmem:[%s1 + $0x3e8] sm:$0xff]
  %v160 = vld [vmem:[%s1 + $0x3f0] sm:$0xff]
  %v161 = vld [vmem:[%s1 + $0x3f8] sm:$0xff]
  %v162 = vld [vmem:[%s2] sm:$0x1]
  %v164 = vlaneseq
  %v165 = vshrl.u32 %v164, 7
  %v166 = vsub.s32 0, %v165
  %v167 = vrot.slane %v162, %v166
  %169 = vmatprep.subr.mxu0 0.0
  %v170 = vand.u32 %v49, 4294901760
  %171 = vmatpush1.msra.mxu0 %v170
  %172 = vmatprep.subr.mxu0 0.0
  %v173 = vand.u32 %v48, 4294901760
  %174 = vmatpush1.msra.mxu0 %v173
  %175 = vmatprep.subr.mxu0 0.0
  %v176 = vand.u32 %v47, 4294901760
  %177 = vmatpush1.msra.mxu0 %v176
  %178 = vmatprep.subr.mxu0 0.0
  %v179 = vand.u32 %v46, 4294901760
  %180 = vmatpush1.msra.mxu0 %v179
  %181 = vmatprep.subr.mxu0 0.0
  %v182 = vand.u32 %v45, 4294901760
  %183 = vmatpush1.msra.mxu0 %v182
  %184 = vmatprep.subr.mxu0 0.0
  %v185 = vand.u32 %v44, 4294901760
  %186 = vmatpush1.msra.mxu0 %v185
  %187 = vmatprep.subr.mxu0 0.0
  %v188 = vand.u32 %v43, 4294901760
  %189 = vmatpush1.msra.mxu0 %v188
  %190 = vmatprep.subr.mxu0 0.0
  %v191 = vand.u32 %v42, 4294901760
  %192 = vmatpush1.msra.mxu0 %v191
  %193 = vmatprep.subr.mxu0 0.0
  %v194 = vand.u32 %v41, 4294901760
  %195 = vmatpush1.msra.mxu0 %v194
  %196 = vmatprep.subr.mxu0 0.0
  %v197 = vand.u32 %v40, 4294901760
  %198 = vmatpush1.msra.mxu0 %v197
  %199 = vmatprep.subr.mxu0 0.0
  %v200 = vand.u32 %v39, 4294901760
  %201 = vmatpush1.msra.mxu0 %v200
  %202 = vmatprep.subr.mxu0 0.0
  %v203 = vand.u32 %v38, 4294901760
  %204 = vmatpush1.msra.mxu0 %v203
  %205 = vmatprep.subr.mxu0 0.0
  %v206 = vand.u32 %v37, 4294901760
  %207 = vmatpush1.msra.mxu0 %v206
  %208 = vmatprep.subr.mxu0 0.0
  %v209 = vand.u32 %v36, 4294901760
  %210 = vmatpush1.msra.mxu0 %v209
  %211 = vmatprep.subr.mxu0 0.0
  %v212 = vand.u32 %v35, 4294901760
  %213 = vmatpush1.msra.mxu0 %v212
  %214 = vmatprep.subr.mxu0 0.0
  %v215 = vand.u32 %v34, 4294901760
  %216 = vmatpush1.msra.mxu0 %v215
  %217 = vmatprep.subr.mxu0 0.0
  %v218 = vand.u32 %v65, 4294901760
  %219 = vmatpush2.msra.mxu0 %v218
  %220 = vmatprep.subr.mxu0 0.0
  %v221 = vand.u32 %v64, 4294901760
  %222 = vmatpush2.msra.mxu0 %v221
  %223 = vmatprep.subr.mxu0 0.0
  %v224 = vand.u32 %v63, 4294901760
  %225 = vmatpush2.msra.mxu0 %v224
  %226 = vmatprep.subr.mxu0 0.0
  %v227 = vand.u32 %v62, 4294901760
  %228 = vmatpush2.msra.mxu0 %v227
  %229 = vmatprep.subr.mxu0 0.0
  %v230 = vand.u32 %v61, 4294901760
  %231 = vmatpush2.msra.mxu0 %v230
  %232 = vmatprep.subr.mxu0 0.0
  %v233 = vand.u32 %v60, 4294901760
  %234 = vmatpush2.msra.mxu0 %v233
  %235 = vmatprep.subr.mxu0 0.0
  %v236 = vand.u32 %v59, 4294901760
  %237 = vmatpush2.msra.mxu0 %v236
  %238 = vmatprep.subr.mxu0 0.0
  %v239 = vand.u32 %v58, 4294901760
  %240 = vmatpush2.msra.mxu0 %v239
  %241 = vmatprep.subr.mxu0 0.0
  %v242 = vand.u32 %v57, 4294901760
  %243 = vmatpush2.msra.mxu0 %v242
  %244 = vmatprep.subr.mxu0 0.0
  %v245 = vand.u32 %v56, 4294901760
  %246 = vmatpush2.msra.mxu0 %v245
  %247 = vmatprep.subr.mxu0 0.0
  %v248 = vand.u32 %v55, 4294901760
  %249 = vmatpush2.msra.mxu0 %v248
  %250 = vmatprep.subr.mxu0 0.0
  %v251 = vand.u32 %v54, 4294901760
  %252 = vmatpush2.msra.mxu0 %v251
  %253 = vmatprep.subr.mxu0 0.0
  %v254 = vand.u32 %v53, 4294901760
  %255 = vmatpush2.msra.mxu0 %v254
  %256 = vmatprep.subr.mxu0 0.0
  %v257 = vand.u32 %v52, 4294901760
  %258 = vmatpush2.msra.mxu0 %v257
  %259 = vmatprep.subr.mxu0 0.0
  %v260 = vand.u32 %v51, 4294901760
  %261 = vmatpush2.msra.mxu0 %v260
  %262 = vmatprep.subr.mxu0 0.0
  %v263 = vand.u32 %v50, 4294901760
  %264 = vmatpush2.msra.mxu0 %v263
  %v265 = vand.u32 %v27, 4294901760
  %v266 = vsub.f32 %v27, %v265
  %v267 = vand.u32 %v266, 4294901760
  %v268 = vsub.f32 %v266, %v267
  %v269 = vand.u32 %v268, 4294901760
  %270 = vmatprep.mubr.f32.mxu0 %v269
  %v271 = vand.u32 %v26, 4294901760
  %v272 = vsub.f32 %v26, %v271
  %v273 = vand.u32 %v272, 4294901760
  %v274 = vsub.f32 %v272, %v273
  %v275 = vand.u32 %v274, 4294901760
  %276 = vmatmul.mubr.f32.gmra.mxu0 %v275
  %v277 = vpop.f32.mrf.mxu0
  %v278 = vadd.f32 %v167, %v277
  %v279 = vpop.f32.mrf.mxu0
  %280 = vdwg.mxu0
  %281 = vmatprep.subr.mxu0 0.0
  %v282 = vand.u32 %v49, 4294901760
  %v283 = vsub.f32 %v49, %v282
  %v284 = vand.u32 %v283, 4294901760
  %v285 = vsub.f32 %v283, %v284
  %v286 = vand.u32 %v285, 4294901760
  %287 = vmatpush1.msra.mxu0 %v286
  %288 = vmatprep.subr.mxu0 0.0
  %v289 = vand.u32 %v48, 4294901760
  %v290 = vsub.f32 %v48, %v289
  %v291 = vand.u32 %v290, 4294901760
  %v292 = vsub.f32 %v290, %v291
  %v293 = vand.u32 %v292, 4294901760
  %294 = vmatpush1.msra.mxu0 %v293
  %295 = vmatprep.subr.mxu0 0.0
  %v296 = vand.u32 %v47, 4294901760
  %v297 = vsub.f32 %v47, %v296
  %v298 = vand.u32 %v297, 4294901760
  %v299 = vsub.f32 %v297, %v298
  %v300 = vand.u32 %v299, 4294901760
  %301 = vmatpush1.msra.mxu0 %v300
  %302 = vmatprep.subr.mxu0 0.0
  %v303 = vand.u32 %v46, 4294901760
  %v304 = vsub.f32 %v46, %v303
  %v305 = vand.u32 %v304, 4294901760
  %v306 = vsub.f32 %v304, %v305
  %v307 = vand.u32 %v306, 4294901760
  %308 = vmatpush1.msra.mxu0 %v307
  %309 = vmatprep.subr.mxu0 0.0
  %v310 = vand.u32 %v45, 4294901760
  %v311 = vsub.f32 %v45, %v310
  %v312 = vand.u32 %v311, 4294901760
  %v313 = vsub.f32 %v311, %v312
  %v314 = vand.u32 %v313, 4294901760
  %315 = vmatpush1.msra.mxu0 %v314
  %316 = vmatprep.subr.mxu0 0.0
  %v317 = vand.u32 %v44, 4294901760
  %v318 = vsub.f32 %v44, %v317
  %v319 = vand.u32 %v318, 4294901760
  %v320 = vsub.f32 %v318, %v319
  %v321 = vand.u32 %v320, 4294901760
  %322 = vmatpush1.msra.mxu0 %v321
  %323 = vmatprep.subr.mxu0 0.0
  %v324 = vand.u32 %v43, 4294901760
  %v325 = vsub.f32 %v43, %v324
  %v326 = vand.u32 %v325, 4294901760
  %v327 = vsub.f32 %v325, %v326
  %v328 = vand.u32 %v327, 4294901760
  %329 = vmatpush1.msra.mxu0 %v328
  %330 = vmatprep.subr.mxu0 0.0
  %v331 = vand.u32 %v42, 4294901760
  %v332 = vsub.f32 %v42, %v331
  %v333 = vand.u32 %v332, 4294901760
  %v334 = vsub.f32 %v332, %v333
  %v335 = vand.u32 %v334, 4294901760
  %336 = vmatpush1.msra.mxu0 %v335
  %337 = vmatprep.subr.mxu0 0.0
  %v338 = vand.u32 %v41, 4294901760
  %v339 = vsub.f32 %v41, %v338
  %v340 = vand.u32 %v339, 4294901760
  %v341 = vsub.f32 %v339, %v340
  %v342 = vand.u32 %v341, 4294901760
  %343 = vmatpush1.msra.mxu0 %v342
  %344 = vmatprep.subr.mxu0 0.0
  %v345 = vand.u32 %v40, 4294901760
  %v346 = vsub.f32 %v40, %v345
  %v347 = vand.u32 %v346, 4294901760
  %v348 = vsub.f32 %v346, %v347
  %v349 = vand.u32 %v348, 4294901760
  %350 = vmatpush1.msra.mxu0 %v349
  %351 = vmatprep.subr.mxu0 0.0
  %v352 = vand.u32 %v39, 4294901760
  %v353 = vsub.f32 %v39, %v352
  %v354 = vand.u32 %v353, 4294901760
  %v355 = vsub.f32 %v353, %v354
  %v356 = vand.u32 %v355, 4294901760
  %357 = vmatpush1.msra.mxu0 %v356
  %358 = vmatprep.subr.mxu0 0.0
  %v359 = vand.u32 %v38, 4294901760
  %v360 = vsub.f32 %v38, %v359
  %v361 = vand.u32 %v360, 4294901760
  %v362 = vsub.f32 %v360, %v361
  %v363 = vand.u32 %v362, 4294901760
  %364 = vmatpush1.msra.mxu0 %v363
  %365 = vmatprep.subr.mxu0 0.0
  %v366 = vand.u32 %v37, 4294901760
  %v367 = vsub.f32 %v37, %v366
  %v368 = vand.u32 %v367, 4294901760
  %v369 = vsub.f32 %v367, %v368
  %v370 = vand.u32 %v369, 4294901760
  %371 = vmatpush1.msra.mxu0 %v370
  %372 = vmatprep.subr.mxu0 0.0
  %v373 = vand.u32 %v36, 4294901760
  %v374 = vsub.f32 %v36, %v373
  %v375 = vand.u32 %v374, 4294901760
  %v376 = vsub.f32 %v374, %v375
  %v377 = vand.u32 %v376, 4294901760
  %378 = vmatpush1.msra.mxu0 %v377
  %379 = vmatprep.subr.mxu0 0.0
  %v380 = vand.u32 %v35, 4294901760
  %v381 = vsub.f32 %v35, %v380
  %v382 = vand.u32 %v381, 4294901760
  %v383 = vsub.f32 %v381, %v382
  %v384 = vand.u32 %v383, 4294901760
  %385 = vmatpush1.msra.mxu0 %v384
  %386 = vmatprep.subr.mxu0 0.0
  %v387 = vand.u32 %v34, 4294901760
  %v388 = vsub.f32 %v34, %v387
  %v389 = vand.u32 %v388, 4294901760
  %v390 = vsub.f32 %v388, %v389
  %v391 = vand.u32 %v390, 4294901760
  %392 = vmatpush1.msra.mxu0 %v391
  %393 = vmatprep.subr.mxu0 0.0
  %v394 = vand.u32 %v65, 4294901760
  %v395 = vsub.f32 %v65, %v394
  %v396 = vand.u32 %v395, 4294901760
  %v397 = vsub.f32 %v395, %v396
  %v398 = vand.u32 %v397, 4294901760
  %399 = vmatpush2.msra.mxu0 %v398
  %400 = vmatprep.subr.mxu0 0.0
  %v401 = vand.u32 %v64, 4294901760
  %v402 = vsub.f32 %v64, %v401
  %v403 = vand.u32 %v402, 4294901760
  %v404 = vsub.f32 %v402, %v403
  %v405 = vand.u32 %v404, 4294901760
  %406 = vmatpush2.msra.mxu0 %v405
  %407 = vmatprep.subr.mxu0 0.0
  %v408 = vand.u32 %v63, 4294901760
  %v409 = vsub.f32 %v63, %v408
  %v410 = vand.u32 %v409, 4294901760
  %v411 = vsub.f32 %v409, %v410
  %v412 = vand.u32 %v411, 4294901760
  %413 = vmatpush2.msra.mxu0 %v412
  %414 = vmatprep.subr.mxu0 0.0
  %v415 = vand.u32 %v62, 4294901760
  %v416 = vsub.f32 %v62, %v415
  %v417 = vand.u32 %v416, 4294901760
  %v418 = vsub.f32 %v416, %v417
  %v419 = vand.u32 %v418, 4294901760
  %420 = vmatpush2.msra.mxu0 %v419
  %421 = vmatprep.subr.mxu0 0.0
  %v422 = vand.u32 %v61, 4294901760
  %v423 = vsub.f32 %v61, %v422
  %v424 = vand.u32 %v423, 4294901760
  %v425 = vsub.f32 %v423, %v424
  %v426 = vand.u32 %v425, 4294901760
  %427 = vmatpush2.msra.mxu0 %v426
  %428 = vmatprep.subr.mxu0 0.0
  %v429 = vand.u32 %v60, 4294901760
  %v430 = vsub.f32 %v60, %v429
  %v431 = vand.u32 %v430, 4294901760
  %v432 = vsub.f32 %v430, %v431
  %v433 = vand.u32 %v432, 4294901760
  %434 = vmatpush2.msra.mxu0 %v433
  %435 = vmatprep.subr.mxu0 0.0
  %v436 = vand.u32 %v59, 4294901760
  %v437 = vsub.f32 %v59, %v436
  %v438 = vand.u32 %v437, 4294901760
  %v439 = vsub.f32 %v437, %v438
  %v440 = vand.u32 %v439, 4294901760
  %441 = vmatpush2.msra.mxu0 %v440
  %442 = vmatprep.subr.mxu0 0.0
  %v443 = vand.u32 %v58, 4294901760
  %v444 = vsub.f32 %v58, %v443
  %v445 = vand.u32 %v444, 4294901760
  %v446 = vsub.f32 %v444, %v445
  %v447 = vand.u32 %v446, 4294901760
  %448 = vmatpush2.msra.mxu0 %v447
  %449 = vmatprep.subr.mxu0 0.0
  %v450 = vand.u32 %v57, 4294901760
  %v451 = vsub.f32 %v57, %v450
  %v452 = vand.u32 %v451, 4294901760
  %v453 = vsub.f32 %v451, %v452
  %v454 = vand.u32 %v453, 4294901760
  %455 = vmatpush2.msra.mxu0 %v454
  %456 = vmatprep.subr.mxu0 0.0
  %v457 = vand.u32 %v56, 4294901760
  %v458 = vsub.f32 %v56, %v457
  %v459 = vand.u32 %v458, 4294901760
  %v460 = vsub.f32 %v458, %v459
  %v461 = vand.u32 %v460, 4294901760
  %462 = vmatpush2.msra.mxu0 %v461
  %463 = vmatprep.subr.mxu0 0.0
  %v464 = vand.u32 %v55, 4294901760
  %v465 = vsub.f32 %v55, %v464
  %v466 = vand.u32 %v465, 4294901760
  %v467 = vsub.f32 %v465, %v466
  %v468 = vand.u32 %v467, 4294901760
  %469 = vmatpush2.msra.mxu0 %v468
  %470 = vmatprep.subr.mxu0 0.0
  %v471 = vand.u32 %v54, 4294901760
  %v472 = vsub.f32 %v54, %v471
  %v473 = vand.u32 %v472, 4294901760
  %v474 = vsub.f32 %v472, %v473
  %v475 = vand.u32 %v474, 4294901760
  %476 = vmatpush2.msra.mxu0 %v475
  %477 = vmatprep.subr.mxu0 0.0
  %v478 = vand.u32 %v53, 4294901760
  %v479 = vsub.f32 %v53, %v478
  %v480 = vand.u32 %v479, 4294901760
  %v481 = vsub.f32 %v479, %v480
  %v482 = vand.u32 %v481, 4294901760
  %483 = vmatpush2.msra.mxu0 %v482
  %484 = vmatprep.subr.mxu0 0.0
  %v485 = vand.u32 %v52, 4294901760
  %v486 = vsub.f32 %v52, %v485
  %v487 = vand.u32 %v486, 4294901760
  %v488 = vsub.f32 %v486, %v487
  %v489 = vand.u32 %v488, 4294901760
  %490 = vmatpush2.msra.mxu0 %v489
  %491 = vmatprep.subr.mxu0 0.0
  %v492 = vand.u32 %v51, 4294901760
  %v493 = vsub.f32 %v51, %v492
  %v494 = vand.u32 %v493, 4294901760
  %v495 = vsub.f32 %v493, %v494
  %v496 = vand.u32 %v495, 4294901760
  %497 = vmatpush2.msra.mxu0 %v496
  %498 = vmatprep.subr.mxu0 0.0
  %v499 = vand.u32 %v50, 4294901760
  %v500 = vsub.f32 %v50, %v499
  %v501 = vand.u32 %v500, 4294901760
  %v502 = vsub.f32 %v500, %v501
  %v503 = vand.u32 %v502, 4294901760
  %504 = vmatpush2.msra.mxu0 %v503
  %v505 = vand.u32 %v27, 4294901760
  %506 = vmatprep.mubr.f32.mxu0 %v505
  %v507 = vand.u32 %v26, 4294901760
  %508 = vmatmul.mubr.f32.gmra.mxu0 %v507
  %v509 = vpop.f32.mrf.mxu0
  %v510 = vadd.f32 %v278, %v509
  %v511 = vpop.f32.mrf.mxu0
  %512 = vdwg.mxu0
  %513 = vmatprep.subr.mxu0 0.0
  %v514 = vand.u32 %v49, 4294901760
  %v515 = vsub.f32 %v49, %v514
  %516 = vmatpush1.msra.mxu0 %v515
  %517 = vmatprep.subr.mxu0 0.0
  %v518 = vand.u32 %v48, 4294901760
  %v519 = vsub.f32 %v48, %v518
  %520 = vmatpush1.msra.mxu0 %v519
  %521 = vmatprep.subr.mxu0 0.0
  %v522 = vand.u32 %v47, 4294901760
  %v523 = vsub.f32 %v47, %v522
  %524 = vmatpush1.msra.mxu0 %v523
  %525 = vmatprep.subr.mxu0 0.0
  %v526 = vand.u32 %v46, 4294901760
  %v527 = vsub.f32 %v46, %v526
  %528 = vmatpush1.msra.mxu0 %v527
  %529 = vmatprep.subr.mxu0 0.0
  %v530 = vand.u32 %v45, 4294901760
  %v531 = vsub.f32 %v45, %v530
  %532 = vmatpush1.msra.mxu0 %v531
  %533 = vmatprep.subr.mxu0 0.0
  %v534 = vand.u32 %v44, 4294901760
  %v535 = vsub.f32 %v44, %v534
  %536 = vmatpush1.msra.mxu0 %v535
  %537 = vmatprep.subr.mxu0 0.0
  %v538 = vand.u32 %v43, 4294901760
  %v539 = vsub.f32 %v43, %v538
  %540 = vmatpush1.msra.mxu0 %v539
  %541 = vmatprep.subr.mxu0 0.0
  %v542 = vand.u32 %v42, 4294901760
  %v543 = vsub.f32 %v42, %v542
  %544 = vmatpush1.msra.mxu0 %v543
  %545 = vmatprep.subr.mxu0 0.0
  %v546 = vand.u32 %v41, 4294901760
  %v547 = vsub.f32 %v41, %v546
  %548 = vmatpush1.msra.mxu0 %v547
  %549 = vmatprep.subr.mxu0 0.0
  %v550 = vand.u32 %v40, 4294901760
  %v551 = vsub.f32 %v40, %v550
  %552 = vmatpush1.msra.mxu0 %v551
  %553 = vmatprep.subr.mxu0 0.0
  %v554 = vand.u32 %v39, 4294901760
  %v555 = vsub.f32 %v39, %v554
  %556 = vmatpush1.msra.mxu0 %v555
  %557 = vmatprep.subr.mxu0 0.0
  %v558 = vand.u32 %v38, 4294901760
  %v559 = vsub.f32 %v38, %v558
  %560 = vmatpush1.msra.mxu0 %v559
  %561 = vmatprep.subr.mxu0 0.0
  %v562 = vand.u32 %v37, 4294901760
  %v563 = vsub.f32 %v37, %v562
  %564 = vmatpush1.msra.mxu0 %v563
  %565 = vmatprep.subr.mxu0 0.0
  %v566 = vand.u32 %v36, 4294901760
  %v567 = vsub.f32 %v36, %v566
  %568 = vmatpush1.msra.mxu0 %v567
  %569 = vmatprep.subr.mxu0 0.0
  %v570 = vand.u32 %v35, 4294901760
  %v571 = vsub.f32 %v35, %v570
  %572 = vmatpush1.msra.mxu0 %v571
  %573 = vmatprep.subr.mxu0 0.0
  %v574 = vand.u32 %v34, 4294901760
  %v575 = vsub.f32 %v34, %v574
  %576 = vmatpush1.msra.mxu0 %v575
  %577 = vmatprep.subr.mxu0 0.0
  %v578 = vand.u32 %v65, 4294901760
  %v579 = vsub.f32 %v65, %v578
  %580 = vmatpush2.msra.mxu0 %v579
  %581 = vmatprep.subr.mxu0 0.0
  %v582 = vand.u32 %v64, 4294901760
  %v583 = vsub.f32 %v64, %v582
  %584 = vmatpush2.msra.mxu0 %v583
  %585 = vmatprep.subr.mxu0 0.0
  %v586 = vand.u32 %v63, 4294901760
  %v587 = vsub.f32 %v63, %v586
  %588 = vmatpush2.msra.mxu0 %v587
  %589 = vmatprep.subr.mxu0 0.0
  %v590 = vand.u32 %v62, 4294901760
  %v591 = vsub.f32 %v62, %v590
  %592 = vmatpush2.msra.mxu0 %v591
  %593 = vmatprep.subr.mxu0 0.0
  %v594 = vand.u32 %v61, 4294901760
  %v595 = vsub.f32 %v61, %v594
  %596 = vmatpush2.msra.mxu0 %v595
  %597 = vmatprep.subr.mxu0 0.0
  %v598 = vand.u32 %v60, 4294901760
  %v599 = vsub.f32 %v60, %v598
  %600 = vmatpush2.msra.mxu0 %v599
  %601 = vmatprep.subr.mxu0 0.0
  %v602 = vand.u32 %v59, 4294901760
  %v603 = vsub.f32 %v59, %v602
  %604 = vmatpush2.msra.mxu0 %v603
  %605 = vmatprep.subr.mxu0 0.0
  %v606 = vand.u32 %v58, 4294901760
  %v607 = vsub.f32 %v58, %v606
  %608 = vmatpush2.msra.mxu0 %v607
  %609 = vmatprep.subr.mxu0 0.0
  %v610 = vand.u32 %v57, 4294901760
  %v611 = vsub.f32 %v57, %v610
  %612 = vmatpush2.msra.mxu0 %v611
  %613 = vmatprep.subr.mxu0 0.0
  %v614 = vand.u32 %v56, 4294901760
  %v615 = vsub.f32 %v56, %v614
  %616 = vmatpush2.msra.mxu0 %v615
  %617 = vmatprep.subr.mxu0 0.0
  %v618 = vand.u32 %v55, 4294901760
  %v619 = vsub.f32 %v55, %v618
  %620 = vmatpush2.msra.mxu0 %v619
  %621 = vmatprep.subr.mxu0 0.0
  %v622 = vand.u32 %v54, 4294901760
  %v623 = vsub.f32 %v54, %v622
  %624 = vmatpush2.msra.mxu0 %v623
  %625 = vmatprep.subr.mxu0 0.0
  %v626 = vand.u32 %v53, 4294901760
  %v627 = vsub.f32 %v53, %v626
  %628 = vmatpush2.msra.mxu0 %v627
  %629 = vmatprep.subr.mxu0 0.0
  %v630 = vand.u32 %v52, 4294901760
  %v631 = vsub.f32 %v52, %v630
  %632 = vmatpush2.msra.mxu0 %v631
  %633 = vmatprep.subr.mxu0 0.0
  %v634 = vand.u32 %v51, 4294901760
  %v635 = vsub.f32 %v51, %v634
  %636 = vmatpush2.msra.mxu0 %v635
  %637 = vmatprep.subr.mxu0 0.0
  %v638 = vand.u32 %v50, 4294901760
  %v639 = vsub.f32 %v50, %v638
  %640 = vmatpush2.msra.mxu0 %v639
  %v641 = vand.u32 %v27, 4294901760
  %v642 = vsub.f32 %v27, %v641
  %643 = vmatprep.mubr.f32.mxu0 %v642
  %v644 = vand.u32 %v26, 4294901760
  %v645 = vsub.f32 %v26, %v644
  %646 = vmatmul.mubr.f32.gmra.mxu0 %v645
  %v647 = vpop.f32.mrf.mxu0
  %v648 = vadd.f32 %v510, %v647
  %v649 = vpop.f32.mrf.mxu0
  %650 = vdwg.mxu0
  %651 = vmatprep.subr.mxu0 0.0
  %v652 = vand.u32 %v49, 4294901760
  %653 = vmatpush1.msra.mxu0 %v652
  %654 = vmatprep.subr.mxu0 0.0
  %v655 = vand.u32 %v48, 4294901760
  %656 = vmatpush1.msra.mxu0 %v655
  %657 = vmatprep.subr.mxu0 0.0
  %v658 = vand.u32 %v47, 4294901760
  %659 = vmatpush1.msra.mxu0 %v658
  %660 = vmatprep.subr.mxu0 0.0
  %v661 = vand.u32 %v46, 4294901760
  %662 = vmatpush1.msra.mxu0 %v661
  %663 = vmatprep.subr.mxu0 0.0
  %v664 = vand.u32 %v45, 4294901760
  %665 = vmatpush1.msra.mxu0 %v664
  %666 = vmatprep.subr.mxu0 0.0
  %v667 = vand.u32 %v44, 4294901760
  %668 = vmatpush1.msra.mxu0 %v667
  %669 = vmatprep.subr.mxu0 0.0
  %v670 = vand.u32 %v43, 4294901760
  %671 = vmatpush1.msra.mxu0 %v670
  %672 = vmatprep.subr.mxu0 0.0
  %v673 = vand.u32 %v42, 4294901760
  %674 = vmatpush1.msra.mxu0 %v673
  %675 = vmatprep.subr.mxu0 0.0
  %v676 = vand.u32 %v41, 4294901760
  %677 = vmatpush1.msra.mxu0 %v676
  %678 = vmatprep.subr.mxu0 0.0
  %v679 = vand.u32 %v40, 4294901760
  %680 = vmatpush1.msra.mxu0 %v679
  %681 = vmatprep.subr.mxu0 0.0
  %v682 = vand.u32 %v39, 4294901760
  %683 = vmatpush1.msra.mxu0 %v682
  %684 = vmatprep.subr.mxu0 0.0
  %v685 = vand.u32 %v38, 4294901760
  %686 = vmatpush1.msra.mxu0 %v685
  %687 = vmatprep.subr.mxu0 0.0
  %v688 = vand.u32 %v37, 4294901760
  %689 = vmatpush1.msra.mxu0 %v688
  %690 = vmatprep.subr.mxu0 0.0
  %v691 = vand.u32 %v36, 4294901760
  %692 = vmatpush1.msra.mxu0 %v691
  %693 = vmatprep.subr.mxu0 0.0
  %v694 = vand.u32 %v35, 4294901760
  %695 = vmatpush1.msra.mxu0 %v694
  %696 = vmatprep.subr.mxu0 0.0
  %v697 = vand.u32 %v34, 4294901760
  %698 = vmatpush1.msra.mxu0 %v697
  %699 = vmatprep.subr.mxu0 0.0
  %v700 = vand.u32 %v65, 4294901760
  %701 = vmatpush2.msra.mxu0 %v700
  %702 = vmatprep.subr.mxu0 0.0
  %v703 = vand.u32 %v64, 4294901760
  %704 = vmatpush2.msra.mxu0 %v703
  %705 = vmatprep.subr.mxu0 0.0
  %v706 = vand.u32 %v63, 4294901760
  %707 = vmatpush2.msra.mxu0 %v706
  %708 = vmatprep.subr.mxu0 0.0
  %v709 = vand.u32 %v62, 4294901760
  %710 = vmatpush2.msra.mxu0 %v709
  %711 = vmatprep.subr.mxu0 0.0
  %v712 = vand.u32 %v61, 4294901760
  %713 = vmatpush2.msra.mxu0 %v712
  %714 = vmatprep.subr.mxu0 0.0
  %v715 = vand.u32 %v60, 4294901760
  %716 = vmatpush2.msra.mxu0 %v715
  %717 = vmatprep.subr.mxu0 0.0
  %v718 = vand.u32 %v59, 4294901760
  %719 = vmatpush2.msra.mxu0 %v718
  %720 = vmatprep.subr.mxu0 0.0
  %v721 = vand.u32 %v58, 4294901760
  %722 = vmatpush2.msra.mxu0 %v721
  %723 = vmatprep.subr.mxu0 0.0
  %v724 = vand.u32 %v57, 4294901760
  %725 = vmatpush2.msra.mxu0 %v724
  %726 = vmatprep.subr.mxu0 0.0
  %v727 = vand.u32 %v56, 4294901760
  %728 = vmatpush2.msra.mxu0 %v727
  %729 = vmatprep.subr.mxu0 0.0
  %v730 = vand.u32 %v55, 4294901760
  %731 = vmatpush2.msra.mxu0 %v730
  %732 = vmatprep.subr.mxu0 0.0
  %v733 = vand.u32 %v54, 4294901760
  %734 = vmatpush2.msra.mxu0 %v733
  %735 = vmatprep.subr.mxu0 0.0
  %v736 = vand.u32 %v53, 4294901760
  %737 = vmatpush2.msra.mxu0 %v736
  %738 = vmatprep.subr.mxu0 0.0
  %v739 = vand.u32 %v52, 4294901760
  %740 = vmatpush2.msra.mxu0 %v739
  %741 = vmatprep.subr.mxu0 0.0
  %v742 = vand.u32 %v51, 4294901760
  %743 = vmatpush2.msra.mxu0 %v742
  %744 = vmatprep.subr.mxu0 0.0
  %v745 = vand.u32 %v50, 4294901760
  %746 = vmatpush2.msra.mxu0 %v745
  %v747 = vand.u32 %v27, 4294901760
  %v748 = vsub.f32 %v27, %v747
  %v749 = vand.u32 %v748, 4294901760
  %750 = vmatprep.mubr.f32.mxu0 %v749
  %v751 = vand.u32 %v26, 4294901760
  %v752 = vsub.f32 %v26, %v751
  %v753 = vand.u32 %v752, 4294901760
  %754 = vmatmul.mubr.f32.gmra.mxu0 %v753
  %v755 = vpop.f32.mrf.mxu0
  %v756 = vadd.f32 %v648, %v755
  %v757 = vpop.f32.mrf.mxu0
  %758 = vdwg.mxu0
  %759 = vmatprep.subr.mxu0 0.0
  %v760 = vand.u32 %v49, 4294901760
  %v761 = vsub.f32 %v49, %v760
  %v762 = vand.u32 %v761, 4294901760
  %763 = vmatpush1.msra.mxu0 %v762
  %764 = vmatprep.subr.mxu0 0.0
  %v765 = vand.u32 %v48, 4294901760
  %v766 = vsub.f32 %v48, %v765
  %v767 = vand.u32 %v766, 4294901760
  %768 = vmatpush1.msra.mxu0 %v767
  %769 = vmatprep.subr.mxu0 0.0
  %v770 = vand.u32 %v47, 4294901760
  %v771 = vsub.f32 %v47, %v770
  %v772 = vand.u32 %v771, 4294901760
  %773 = vmatpush1.msra.mxu0 %v772
  %774 = vmatprep.subr.mxu0 0.0
  %v775 = vand.u32 %v46, 4294901760
  %v776 = vsub.f32 %v46, %v775
  %v777 = vand.u32 %v776, 4294901760
  %778 = vmatpush1.msra.mxu0 %v777
  %779 = vmatprep.subr.mxu0 0.0
  %v780 = vand.u32 %v45, 4294901760
  %v781 = vsub.f32 %v45, %v780
  %v782 = vand.u32 %v781, 4294901760
  %783 = vmatpush1.msra.mxu0 %v782
  %784 = vmatprep.subr.mxu0 0.0
  %v785 = vand.u32 %v44, 4294901760
  %v786 = vsub.f32 %v44, %v785
  %v787 = vand.u32 %v786, 4294901760
  %788 = vmatpush1.msra.mxu0 %v787
  %789 = vmatprep.subr.mxu0 0.0
  %v790 = vand.u32 %v43, 4294901760
  %v791 = vsub.f32 %v43, %v790
  %v792 = vand.u32 %v791, 4294901760
  %793 = vmatpush1.msra.mxu0 %v792
  %794 = vmatprep.subr.mxu0 0.0
  %v795 = vand.u32 %v42, 4294901760
  %v796 = vsub.f32 %v42, %v795
  %v797 = vand.u32 %v796, 4294901760
  %798 = vmatpush1.msra.mxu0 %v797
  %799 = vmatprep.subr.mxu0 0.0
  %v800 = vand.u32 %v41, 4294901760
  %v801 = vsub.f32 %v41, %v800
  %v802 = vand.u32 %v801, 4294901760
  %803 = vmatpush1.msra.mxu0 %v802
  %804 = vmatprep.subr.mxu0 0.0
  %v805 = vand.u32 %v40, 4294901760
  %v806 = vsub.f32 %v40, %v805
  %v807 = vand.u32 %v806, 4294901760
  %808 = vmatpush1.msra.mxu0 %v807
  %809 = vmatprep.subr.mxu0 0.0
  %v810 = vand.u32 %v39, 4294901760
  %v811 = vsub.f32 %v39, %v810
  %v812 = vand.u32 %v811, 4294901760
  %813 = vmatpush1.msra.mxu0 %v812
  %814 = vmatprep.subr.mxu0 0.0
  %v815 = vand.u32 %v38, 4294901760
  %v816 = vsub.f32 %v38, %v815
  %v817 = vand.u32 %v816, 4294901760
  %818 = vmatpush1.msra.mxu0 %v817
  %819 = vmatprep.subr.mxu0 0.0
  %v820 = vand.u32 %v37, 4294901760
  %v821 = vsub.f32 %v37, %v820
  %v822 = vand.u32 %v821, 4294901760
  %823 = vmatpush1.msra.mxu0 %v822
  %824 = vmatprep.subr.mxu0 0.0
  %v825 = vand.u32 %v36, 4294901760
  %v826 = vsub.f32 %v36, %v825
  %v827 = vand.u32 %v826, 4294901760
  %828 = vmatpush1.msra.mxu0 %v827
  %829 = vmatprep.subr.mxu0 0.0
  %v830 = vand.u32 %v35, 4294901760
  %v831 = vsub.f32 %v35, %v830
  %v832 = vand.u32 %v831, 4294901760
  %833 = vmatpush1.msra.mxu0 %v832
  %834 = vmatprep.subr.mxu0 0.0
  %v835 = vand.u32 %v34, 4294901760
  %v836 = vsub.f32 %v34, %v835
  %v837 = vand.u32 %v836, 4294901760
  %838 = vmatpush1.msra.mxu0 %v837
  %839 = vmatprep.subr.mxu0 0.0
  %v840 = vand.u32 %v65, 4294901760
  %v841 = vsub.f32 %v65, %v840
  %v842 = vand.u32 %v841, 4294901760
  %843 = vmatpush2.msra.mxu0 %v842
  %844 = vmatprep.subr.mxu0 0.0
  %v845 = vand.u32 %v64, 4294901760
  %v846 = vsub.f32 %v64, %v845
  %v847 = vand.u32 %v846, 4294901760
  %848 = vmatpush2.msra.mxu0 %v847
  %849 = vmatprep.subr.mxu0 0.0
  %v850 = vand.u32 %v63, 4294901760
  %v851 = vsub.f32 %v63, %v850
  %v852 = vand.u32 %v851, 4294901760
  %853 = vmatpush2.msra.mxu0 %v852
  %854 = vmatprep.subr.mxu0 0.0
  %v855 = vand.u32 %v62, 4294901760
  %v856 = vsub.f32 %v62, %v855
  %v857 = vand.u32 %v856, 4294901760
  %858 = vmatpush2.msra.mxu0 %v857
  %859 = vmatprep.subr.mxu0 0.0
  %v860 = vand.u32 %v61, 4294901760
  %v861 = vsub.f32 %v61, %v860
  %v862 = vand.u32 %v861, 4294901760
  %863 = vmatpush2.msra.mxu0 %v862
  %864 = vmatprep.subr.mxu0 0.0
  %v865 = vand.u32 %v60, 4294901760
  %v866 = vsub.f32 %v60, %v865
  %v867 = vand.u32 %v866, 4294901760
  %868 = vmatpush2.msra.mxu0 %v867
  %869 = vmatprep.subr.mxu0 0.0
  %v870 = vand.u32 %v59, 4294901760
  %v871 = vsub.f32 %v59, %v870
  %v872 = vand.u32 %v871, 4294901760
  %873 = vmatpush2.msra.mxu0 %v872
  %874 = vmatprep.subr.mxu0 0.0
  %v875 = vand.u32 %v58, 4294901760
  %v876 = vsub.f32 %v58, %v875
  %v877 = vand.u32 %v876, 4294901760
  %878 = vmatpush2.msra.mxu0 %v877
  %879 = vmatprep.subr.mxu0 0.0
  %v880 = vand.u32 %v57, 4294901760
  %v881 = vsub.f32 %v57, %v880
  %v882 = vand.u32 %v881, 4294901760
  %883 = vmatpush2.msra.mxu0 %v882
  %884 = vmatprep.subr.mxu0 0.0
  %v885 = vand.u32 %v56, 4294901760
  %v886 = vsub.f32 %v56, %v885
  %v887 = vand.u32 %v886, 4294901760
  %888 = vmatpush2.msra.mxu0 %v887
  %889 = vmatprep.subr.mxu0 0.0
  %v890 = vand.u32 %v55, 4294901760
  %v891 = vsub.f32 %v55, %v890
  %v892 = vand.u32 %v891, 4294901760
  %893 = vmatpush2.msra.mxu0 %v892
  %894 = vmatprep.subr.mxu0 0.0
  %v895 = vand.u32 %v54, 4294901760
  %v896 = vsub.f32 %v54, %v895
  %v897 = vand.u32 %v896, 4294901760
  %898 = vmatpush2.msra.mxu0 %v897
  %899 = vmatprep.subr.mxu0 0.0
  %v900 = vand.u32 %v53, 4294901760
  %v901 = vsub.f32 %v53, %v900
  %v902 = vand.u32 %v901, 4294901760
  %903 = vmatpush2.msra.mxu0 %v902
  %904 = vmatprep.subr.mxu0 0.0
  %v905 = vand.u32 %v52, 4294901760
  %v906 = vsub.f32 %v52, %v905
  %v907 = vand.u32 %v906, 4294901760
  %908 = vmatpush2.msra.mxu0 %v907
  %909 = vmatprep.subr.mxu0 0.0
  %v910 = vand.u32 %v51, 4294901760
  %v911 = vsub.f32 %v51, %v910
  %v912 = vand.u32 %v911, 4294901760
  %913 = vmatpush2.msra.mxu0 %v912
  %914 = vmatprep.subr.mxu0 0.0
  %v915 = vand.u32 %v50, 4294901760
  %v916 = vsub.f32 %v50, %v915
  %v917 = vand.u32 %v916, 4294901760
  %918 = vmatpush2.msra.mxu0 %v917
  %v919 = vand.u32 %v27, 4294901760
  %920 = vmatprep.mubr.f32.mxu0 %v919
  %v921 = vand.u32 %v26, 4294901760
  %922 = vmatmul.mubr.f32.gmra.mxu0 %v921
  %v923 = vpop.f32.mrf.mxu0
  %v924 = vadd.f32 %v756, %v923
  %v925 = vpop.f32.mrf.mxu0
  %926 = vdwg.mxu0
  %927 = vmatprep.subr.mxu0 0.0
  %v928 = vand.u32 %v49, 4294901760
  %929 = vmatpush1.msra.mxu0 %v928
  %930 = vmatprep.subr.mxu0 0.0
  %v931 = vand.u32 %v48, 4294901760
  %932 = vmatpush1.msra.mxu0 %v931
  %933 = vmatprep.subr.mxu0 0.0
  %v934 = vand.u32 %v47, 4294901760
  %935 = vmatpush1.msra.mxu0 %v934
  %936 = vmatprep.subr.mxu0 0.0
  %v937 = vand.u32 %v46, 4294901760
  %938 = vmatpush1.msra.mxu0 %v937
  %939 = vmatprep.subr.mxu0 0.0
  %v940 = vand.u32 %v45, 4294901760
  %941 = vmatpush1.msra.mxu0 %v940
  %942 = vmatprep.subr.mxu0 0.0
  %v943 = vand.u32 %v44, 4294901760
  %944 = vmatpush1.msra.mxu0 %v943
  %945 = vmatprep.subr.mxu0 0.0
  %v946 = vand.u32 %v43, 4294901760
  %947 = vmatpush1.msra.mxu0 %v946
  %948 = vmatprep.subr.mxu0 0.0
  %v949 = vand.u32 %v42, 4294901760
  %950 = vmatpush1.msra.mxu0 %v949
  %951 = vmatprep.subr.mxu0 0.0
  %v952 = vand.u32 %v41, 4294901760
  %953 = vmatpush1.msra.mxu0 %v952
  %954 = vmatprep.subr.mxu0 0.0
  %v955 = vand.u32 %v40, 4294901760
  %956 = vmatpush1.msra.mxu0 %v955
  %957 = vmatprep.subr.mxu0 0.0
  %v958 = vand.u32 %v39, 4294901760
  %959 = vmatpush1.msra.mxu0 %v958
  %960 = vmatprep.subr.mxu0 0.0
  %v961 = vand.u32 %v38, 4294901760
  %962 = vmatpush1.msra.mxu0 %v961
  %963 = vmatprep.subr.mxu0 0.0
  %v964 = vand.u32 %v37, 4294901760
  %965 = vmatpush1.msra.mxu0 %v964
  %966 = vmatprep.subr.mxu0 0.0
  %v967 = vand.u32 %v36, 4294901760
  %968 = vmatpush1.msra.mxu0 %v967
  %969 = vmatprep.subr.mxu0 0.0
  %v970 = vand.u32 %v35, 4294901760
  %971 = vmatpush1.msra.mxu0 %v970
  %972 = vmatprep.subr.mxu0 0.0
  %v973 = vand.u32 %v34, 4294901760
  %974 = vmatpush1.msra.mxu0 %v973
  %975 = vmatprep.subr.mxu0 0.0
  %v976 = vand.u32 %v65, 4294901760
  %977 = vmatpush2.msra.mxu0 %v976
  %978 = vmatprep.subr.mxu0 0.0
  %v979 = vand.u32 %v64, 4294901760
  %980 = vmatpush2.msra.mxu0 %v979
  %981 = vmatprep.subr.mxu0 0.0
  %v982 = vand.u32 %v63, 4294901760
  %983 = vmatpush2.msra.mxu0 %v982
  %984 = vmatprep.subr.mxu0 0.0
  %v985 = vand.u32 %v62, 4294901760
  %986 = vmatpush2.msra.mxu0 %v985
  %987 = vmatprep.subr.mxu0 0.0
  %v988 = vand.u32 %v61, 4294901760
  %989 = vmatpush2.msra.mxu0 %v988
  %990 = vmatprep.subr.mxu0 0.0
  %v991 = vand.u32 %v60, 4294901760
  %992 = vmatpush2.msra.mxu0 %v991
  %993 = vmatprep.subr.mxu0 0.0
  %v994 = vand.u32 %v59, 4294901760
  %995 = vmatpush2.msra.mxu0 %v994
  %996 = vmatprep.subr.mxu0 0.0
  %v997 = vand.u32 %v58, 4294901760
  %998 = vmatpush2.msra.mxu0 %v997
  %999 = vmatprep.subr.mxu0 0.0
  %v1000 = vand.u32 %v57, 4294901760
  %1001 = vmatpush2.msra.mxu0 %v1000
  %1002 = vmatprep.subr.mxu0 0.0
  %v1003 = vand.u32 %v56, 4294901760
  %1004 = vmatpush2.msra.mxu0 %v1003
  %1005 = vmatprep.subr.mxu0 0.0
  %v1006 = vand.u32 %v55, 4294901760
  %1007 = vmatpush2.msra.mxu0 %v1006
  %1008 = vmatprep.subr.mxu0 0.0
  %v1009 = vand.u32 %v54, 4294901760
  %1010 = vmatpush2.msra.mxu0 %v1009
  %1011 = vmatprep.subr.mxu0 0.0
  %v1012 = vand.u32 %v53, 4294901760
  %1013 = vmatpush2.msra.mxu0 %v1012
  %1014 = vmatprep.subr.mxu0 0.0
  %v1015 = vand.u32 %v52, 4294901760
  %1016 = vmatpush2.msra.mxu0 %v1015
  %1017 = vmatprep.subr.mxu0 0.0
  %v1018 = vand.u32 %v51, 4294901760
  %1019 = vmatpush2.msra.mxu0 %v1018
  %1020 = vmatprep.subr.mxu0 0.0
  %v1021 = vand.u32 %v50, 4294901760
  %1022 = vmatpush2.msra.mxu0 %v1021
  %v1023 = vand.u32 %v27, 4294901760
  %1024 = vmatprep.mubr.f32.mxu0 %v1023
  %v1025 = vand.u32 %v26, 4294901760
  %1026 = vmatmul.mubr.f32.gmra.mxu0 %v1025
  %v1027 = vpop.f32.mrf.mxu0
  %v1028 = vadd.f32 %v924, %v1027
  %v1029 = vpop.f32.mrf.mxu0
  %1030 = vdwg.mxu0
  %1031 = vmatprep.subr.mxu0 0.0
  %v1032 = vand.u32 %v81, 4294901760
  %1033 = vmatpush1.msra.mxu0 %v1032
  %1034 = vmatprep.subr.mxu0 0.0
  %v1035 = vand.u32 %v80, 4294901760
  %1036 = vmatpush1.msra.mxu0 %v1035
  %1037 = vmatprep.subr.mxu0 0.0
  %v1038 = vand.u32 %v79, 4294901760
  %1039 = vmatpush1.msra.mxu0 %v1038
  %1040 = vmatprep.subr.mxu0 0.0
  %v1041 = vand.u32 %v78, 4294901760
  %1042 = vmatpush1.msra.mxu0 %v1041
  %1043 = vmatprep.subr.mxu0 0.0
  %v1044 = vand.u32 %v77, 4294901760
  %1045 = vmatpush1.msra.mxu0 %v1044
  %1046 = vmatprep.subr.mxu0 0.0
  %v1047 = vand.u32 %v76, 4294901760
  %1048 = vmatpush1.msra.mxu0 %v1047
  %1049 = vmatprep.subr.mxu0 0.0
  %v1050 = vand.u32 %v75, 4294901760
  %1051 = vmatpush1.msra.mxu0 %v1050
  %1052 = vmatprep.subr.mxu0 0.0
  %v1053 = vand.u32 %v74, 4294901760
  %1054 = vmatpush1.msra.mxu0 %v1053
  %1055 = vmatprep.subr.mxu0 0.0
  %v1056 = vand.u32 %v73, 4294901760
  %1057 = vmatpush1.msra.mxu0 %v1056
  %1058 = vmatprep.subr.mxu0 0.0
  %v1059 = vand.u32 %v72, 4294901760
  %1060 = vmatpush1.msra.mxu0 %v1059
  %1061 = vmatprep.subr.mxu0 0.0
  %v1062 = vand.u32 %v71, 4294901760
  %1063 = vmatpush1.msra.mxu0 %v1062
  %1064 = vmatprep.subr.mxu0 0.0
  %v1065 = vand.u32 %v70, 4294901760
  %1066 = vmatpush1.msra.mxu0 %v1065
  %1067 = vmatprep.subr.mxu0 0.0
  %v1068 = vand.u32 %v69, 4294901760
  %1069 = vmatpush1.msra.mxu0 %v1068
  %1070 = vmatprep.subr.mxu0 0.0
  %v1071 = vand.u32 %v68, 4294901760
  %1072 = vmatpush1.msra.mxu0 %v1071
  %1073 = vmatprep.subr.mxu0 0.0
  %v1074 = vand.u32 %v67, 4294901760
  %1075 = vmatpush1.msra.mxu0 %v1074
  %1076 = vmatprep.subr.mxu0 0.0
  %v1077 = vand.u32 %v66, 4294901760
  %1078 = vmatpush1.msra.mxu0 %v1077
  %1079 = vmatprep.subr.mxu0 0.0
  %v1080 = vand.u32 %v97, 4294901760
  %1081 = vmatpush2.msra.mxu0 %v1080
  %1082 = vmatprep.subr.mxu0 0.0
  %v1083 = vand.u32 %v96, 4294901760
  %1084 = vmatpush2.msra.mxu0 %v1083
  %1085 = vmatprep.subr.mxu0 0.0
  %v1086 = vand.u32 %v95, 4294901760
  %1087 = vmatpush2.msra.mxu0 %v1086
  %1088 = vmatprep.subr.mxu0 0.0
  %v1089 = vand.u32 %v94, 4294901760
  %1090 = vmatpush2.msra.mxu0 %v1089
  %1091 = vmatprep.subr.mxu0 0.0
  %v1092 = vand.u32 %v93, 4294901760
  %1093 = vmatpush2.msra.mxu0 %v1092
  %1094 = vmatprep.subr.mxu0 0.0
  %v1095 = vand.u32 %v92, 4294901760
  %1096 = vmatpush2.msra.mxu0 %v1095
  %1097 = vmatprep.subr.mxu0 0.0
  %v1098 = vand.u32 %v91, 4294901760
  %1099 = vmatpush2.msra.mxu0 %v1098
  %1100 = vmatprep.subr.mxu0 0.0
  %v1101 = vand.u32 %v90, 4294901760
  %1102 = vmatpush2.msra.mxu0 %v1101
  %1103 = vmatprep.subr.mxu0 0.0
  %v1104 = vand.u32 %v89, 4294901760
  %1105 = vmatpush2.msra.mxu0 %v1104
  %1106 = vmatprep.subr.mxu0 0.0
  %v1107 = vand.u32 %v88, 4294901760
  %1108 = vmatpush2.msra.mxu0 %v1107
  %1109 = vmatprep.subr.mxu0 0.0
  %v1110 = vand.u32 %v87, 4294901760
  %1111 = vmatpush2.msra.mxu0 %v1110
  %1112 = vmatprep.subr.mxu0 0.0
  %v1113 = vand.u32 %v86, 4294901760
  %1114 = vmatpush2.msra.mxu0 %v1113
  %1115 = vmatprep.subr.mxu0 0.0
  %v1116 = vand.u32 %v85, 4294901760
  %1117 = vmatpush2.msra.mxu0 %v1116
  %1118 = vmatprep.subr.mxu0 0.0
  %v1119 = vand.u32 %v84, 4294901760
  %1120 = vmatpush2.msra.mxu0 %v1119
  %1121 = vmatprep.subr.mxu0 0.0
  %v1122 = vand.u32 %v83, 4294901760
  %1123 = vmatpush2.msra.mxu0 %v1122
  %1124 = vmatprep.subr.mxu0 0.0
  %v1125 = vand.u32 %v82, 4294901760
  %1126 = vmatpush2.msra.mxu0 %v1125
  %v1127 = vand.u32 %v29, 4294901760
  %v1128 = vsub.f32 %v29, %v1127
  %v1129 = vand.u32 %v1128, 4294901760
  %v1130 = vsub.f32 %v1128, %v1129
  %v1131 = vand.u32 %v1130, 4294901760
  %1132 = vmatprep.mubr.f32.mxu0 %v1131
  %v1133 = vand.u32 %v28, 4294901760
  %v1134 = vsub.f32 %v28, %v1133
  %v1135 = vand.u32 %v1134, 4294901760
  %v1136 = vsub.f32 %v1134, %v1135
  %v1137 = vand.u32 %v1136, 4294901760
  %1138 = vmatmul.mubr.f32.gmra.mxu0 %v1137
  %v1139 = vpop.f32.mrf.mxu0
  %v1140 = vadd.f32 %v1028, %v1139
  %v1141 = vpop.f32.mrf.mxu0
  %1142 = vdwg.mxu0
  %1143 = vmatprep.subr.mxu0 0.0
  %v1144 = vand.u32 %v81, 4294901760
  %v1145 = vsub.f32 %v81, %v1144
  %v1146 = vand.u32 %v1145, 4294901760
  %v1147 = vsub.f32 %v1145, %v1146
  %v1148 = vand.u32 %v1147, 4294901760
  %1149 = vmatpush1.msra.mxu0 %v1148
  %1150 = vmatprep.subr.mxu0 0.0
  %v1151 = vand.u32 %v80, 4294901760
  %v1152 = vsub.f32 %v80, %v1151
  %v1153 = vand.u32 %v1152, 4294901760
  %v1154 = vsub.f32 %v1152, %v1153
  %v1155 = vand.u32 %v1154, 4294901760
  %1156 = vmatpush1.msra.mxu0 %v1155
  %1157 = vmatprep.subr.mxu0 0.0
  %v1158 = vand.u32 %v79, 4294901760
  %v1159 = vsub.f32 %v79, %v1158
  %v1160 = vand.u32 %v1159, 4294901760
  %v1161 = vsub.f32 %v1159, %v1160
  %v1162 = vand.u32 %v1161, 4294901760
  %1163 = vmatpush1.msra.mxu0 %v1162
  %1164 = vmatprep.subr.mxu0 0.0
  %v1165 = vand.u32 %v78, 4294901760
  %v1166 = vsub.f32 %v78, %v1165
  %v1167 = vand.u32 %v1166, 4294901760
  %v1168 = vsub.f32 %v1166, %v1167
  %v1169 = vand.u32 %v1168, 4294901760
  %1170 = vmatpush1.msra.mxu0 %v1169
  %1171 = vmatprep.subr.mxu0 0.0
  %v1172 = vand.u32 %v77, 4294901760
  %v1173 = vsub.f32 %v77, %v1172
  %v1174 = vand.u32 %v1173, 4294901760
  %v1175 = vsub.f32 %v1173, %v1174
  %v1176 = vand.u32 %v1175, 4294901760
  %1177 = vmatpush1.msra.mxu0 %v1176
  %1178 = vmatprep.subr.mxu0 0.0
  %v1179 = vand.u32 %v76, 4294901760
  %v1180 = vsub.f32 %v76, %v1179
  %v1181 = vand.u32 %v1180, 4294901760
  %v1182 = vsub.f32 %v1180, %v1181
  %v1183 = vand.u32 %v1182, 4294901760
  %1184 = vmatpush1.msra.mxu0 %v1183
  %1185 = vmatprep.subr.mxu0 0.0
  %v1186 = vand.u32 %v75, 4294901760
  %v1187 = vsub.f32 %v75, %v1186
  %v1188 = vand.u32 %v1187, 4294901760
  %v1189 = vsub.f32 %v1187, %v1188
  %v1190 = vand.u32 %v1189, 4294901760
  %1191 = vmatpush1.msra.mxu0 %v1190
  %1192 = vmatprep.subr.mxu0 0.0
  %v1193 = vand.u32 %v74, 4294901760
  %v1194 = vsub.f32 %v74, %v1193
  %v1195 = vand.u32 %v1194, 4294901760
  %v1196 = vsub.f32 %v1194, %v1195
  %v1197 = vand.u32 %v1196, 4294901760
  %1198 = vmatpush1.msra.mxu0 %v1197
  %1199 = vmatprep.subr.mxu0 0.0
  %v1200 = vand.u32 %v73, 4294901760
  %v1201 = vsub.f32 %v73, %v1200
  %v1202 = vand.u32 %v1201, 4294901760
  %v1203 = vsub.f32 %v1201, %v1202
  %v1204 = vand.u32 %v1203, 4294901760
  %1205 = vmatpush1.msra.mxu0 %v1204
  %1206 = vmatprep.subr.mxu0 0.0
  %v1207 = vand.u32 %v72, 4294901760
  %v1208 = vsub.f32 %v72, %v1207
  %v1209 = vand.u32 %v1208, 4294901760
  %v1210 = vsub.f32 %v1208, %v1209
  %v1211 = vand.u32 %v1210, 4294901760
  %1212 = vmatpush1.msra.mxu0 %v1211
  %1213 = vmatprep.subr.mxu0 0.0
  %v1214 = vand.u32 %v71, 4294901760
  %v1215 = vsub.f32 %v71, %v1214
  %v1216 = vand.u32 %v1215, 4294901760
  %v1217 = vsub.f32 %v1215, %v1216
  %v1218 = vand.u32 %v1217, 4294901760
  %1219 = vmatpush1.msra.mxu0 %v1218
  %1220 = vmatprep.subr.mxu0 0.0
  %v1221 = vand.u32 %v70, 4294901760
  %v1222 = vsub.f32 %v70, %v1221
  %v1223 = vand.u32 %v1222, 4294901760
  %v1224 = vsub.f32 %v1222, %v1223
  %v1225 = vand.u32 %v1224, 4294901760
  %1226 = vmatpush1.msra.mxu0 %v1225
  %1227 = vmatprep.subr.mxu0 0.0
  %v1228 = vand.u32 %v69, 4294901760
  %v1229 = vsub.f32 %v69, %v1228
  %v1230 = vand.u32 %v1229, 4294901760
  %v1231 = vsub.f32 %v1229, %v1230
  %v1232 = vand.u32 %v1231, 4294901760
  %1233 = vmatpush1.msra.mxu0 %v1232
  %1234 = vmatprep.subr.mxu0 0.0
  %v1235 = vand.u32 %v68, 4294901760
  %v1236 = vsub.f32 %v68, %v1235
  %v1237 = vand.u32 %v1236, 4294901760
  %v1238 = vsub.f32 %v1236, %v1237
  %v1239 = vand.u32 %v1238, 4294901760
  %1240 = vmatpush1.msra.mxu0 %v1239
  %1241 = vmatprep.subr.mxu0 0.0
  %v1242 = vand.u32 %v67, 4294901760
  %v1243 = vsub.f32 %v67, %v1242
  %v1244 = vand.u32 %v1243, 4294901760
  %v1245 = vsub.f32 %v1243, %v1244
  %v1246 = vand.u32 %v1245, 4294901760
  %1247 = vmatpush1.msra.mxu0 %v1246
  %1248 = vmatprep.subr.mxu0 0.0
  %v1249 = vand.u32 %v66, 4294901760
  %v1250 = vsub.f32 %v66, %v1249
  %v1251 = vand.u32 %v1250, 4294901760
  %v1252 = vsub.f32 %v1250, %v1251
  %v1253 = vand.u32 %v1252, 4294901760
  %1254 = vmatpush1.msra.mxu0 %v1253
  %1255 = vmatprep.subr.mxu0 0.0
  %v1256 = vand.u32 %v97, 4294901760
  %v1257 = vsub.f32 %v97, %v1256
  %v1258 = vand.u32 %v1257, 4294901760
  %v1259 = vsub.f32 %v1257, %v1258
  %v1260 = vand.u32 %v1259, 4294901760
  %1261 = vmatpush2.msra.mxu0 %v1260
  %1262 = vmatprep.subr.mxu0 0.0
  %v1263 = vand.u32 %v96, 4294901760
  %v1264 = vsub.f32 %v96, %v1263
  %v1265 = vand.u32 %v1264, 4294901760
  %v1266 = vsub.f32 %v1264, %v1265
  %v1267 = vand.u32 %v1266, 4294901760
  %1268 = vmatpush2.msra.mxu0 %v1267
  %1269 = vmatprep.subr.mxu0 0.0
  %v1270 = vand.u32 %v95, 4294901760
  %v1271 = vsub.f32 %v95, %v1270
  %v1272 = vand.u32 %v1271, 4294901760
  %v1273 = vsub.f32 %v1271, %v1272
  %v1274 = vand.u32 %v1273, 4294901760
  %1275 = vmatpush2.msra.mxu0 %v1274
  %1276 = vmatprep.subr.mxu0 0.0
  %v1277 = vand.u32 %v94, 4294901760
  %v1278 = vsub.f32 %v94, %v1277
  %v1279 = vand.u32 %v1278, 4294901760
  %v1280 = vsub.f32 %v1278, %v1279
  %v1281 = vand.u32 %v1280, 4294901760
  %1282 = vmatpush2.msra.mxu0 %v1281
  %1283 = vmatprep.subr.mxu0 0.0
  %v1284 = vand.u32 %v93, 4294901760
  %v1285 = vsub.f32 %v93, %v1284
  %v1286 = vand.u32 %v1285, 4294901760
  %v1287 = vsub.f32 %v1285, %v1286
  %v1288 = vand.u32 %v1287, 4294901760
  %1289 = vmatpush2.msra.mxu0 %v1288
  %1290 = vmatprep.subr.mxu0 0.0
  %v1291 = vand.u32 %v92, 4294901760
  %v1292 = vsub.f32 %v92, %v1291
  %v1293 = vand.u32 %v1292, 4294901760
  %v1294 = vsub.f32 %v1292, %v1293
  %v1295 = vand.u32 %v1294, 4294901760
  %1296 = vmatpush2.msra.mxu0 %v1295
  %1297 = vmatprep.subr.mxu0 0.0
  %v1298 = vand.u32 %v91, 4294901760
  %v1299 = vsub.f32 %v91, %v1298
  %v1300 = vand.u32 %v1299, 4294901760
  %v1301 = vsub.f32 %v1299, %v1300
  %v1302 = vand.u32 %v1301, 4294901760
  %1303 = vmatpush2.msra.mxu0 %v1302
  %1304 = vmatprep.subr.mxu0 0.0
  %v1305 = vand.u32 %v90, 4294901760
  %v1306 = vsub.f32 %v90, %v1305
  %v1307 = vand.u32 %v1306, 4294901760
  %v1308 = vsub.f32 %v1306, %v1307
  %v1309 = vand.u32 %v1308, 4294901760
  %1310 = vmatpush2.msra.mxu0 %v1309
  %1311 = vmatprep.subr.mxu0 0.0
  %v1312 = vand.u32 %v89, 4294901760
  %v1313 = vsub.f32 %v89, %v1312
  %v1314 = vand.u32 %v1313, 4294901760
  %v1315 = vsub.f32 %v1313, %v1314
  %v1316 = vand.u32 %v1315, 4294901760
  %1317 = vmatpush2.msra.mxu0 %v1316
  %1318 = vmatprep.subr.mxu0 0.0
  %v1319 = vand.u32 %v88, 4294901760
  %v1320 = vsub.f32 %v88, %v1319
  %v1321 = vand.u32 %v1320, 4294901760
  %v1322 = vsub.f32 %v1320, %v1321
  %v1323 = vand.u32 %v1322, 4294901760
  %1324 = vmatpush2.msra.mxu0 %v1323
  %1325 = vmatprep.subr.mxu0 0.0
  %v1326 = vand.u32 %v87, 4294901760
  %v1327 = vsub.f32 %v87, %v1326
  %v1328 = vand.u32 %v1327, 4294901760
  %v1329 = vsub.f32 %v1327, %v1328
  %v1330 = vand.u32 %v1329, 4294901760
  %1331 = vmatpush2.msra.mxu0 %v1330
  %1332 = vmatprep.subr.mxu0 0.0
  %v1333 = vand.u32 %v86, 4294901760
  %v1334 = vsub.f32 %v86, %v1333
  %v1335 = vand.u32 %v1334, 4294901760
  %v1336 = vsub.f32 %v1334, %v1335
  %v1337 = vand.u32 %v1336, 4294901760
  %1338 = vmatpush2.msra.mxu0 %v1337
  %1339 = vmatprep.subr.mxu0 0.0
  %v1340 = vand.u32 %v85, 4294901760
  %v1341 = vsub.f32 %v85, %v1340
  %v1342 = vand.u32 %v1341, 4294901760
  %v1343 = vsub.f32 %v1341, %v1342
  %v1344 = vand.u32 %v1343, 4294901760
  %1345 = vmatpush2.msra.mxu0 %v1344
  %1346 = vmatprep.subr.mxu0 0.0
  %v1347 = vand.u32 %v84, 4294901760
  %v1348 = vsub.f32 %v84, %v1347
  %v1349 = vand.u32 %v1348, 4294901760
  %v1350 = vsub.f32 %v1348, %v1349
  %v1351 = vand.u32 %v1350, 4294901760
  %1352 = vmatpush2.msra.mxu0 %v1351
  %1353 = vmatprep.subr.mxu0 0.0
  %v1354 = vand.u32 %v83, 4294901760
  %v1355 = vsub.f32 %v83, %v1354
  %v1356 = vand.u32 %v1355, 4294901760
  %v1357 = vsub.f32 %v1355, %v1356
  %v1358 = vand.u32 %v1357, 4294901760
  %1359 = vmatpush2.msra.mxu0 %v1358
  %1360 = vmatprep.subr.mxu0 0.0
  %v1361 = vand.u32 %v82, 4294901760
  %v1362 = vsub.f32 %v82, %v1361
  %v1363 = vand.u32 %v1362, 4294901760
  %v1364 = vsub.f32 %v1362, %v1363
  %v1365 = vand.u32 %v1364, 4294901760
  %1366 = vmatpush2.msra.mxu0 %v1365
  %v1367 = vand.u32 %v29, 4294901760
  %1368 = vmatprep.mubr.f32.mxu0 %v1367
  %v1369 = vand.u32 %v28, 4294901760
  %1370 = vmatmul.mubr.f32.gmra.mxu0 %v1369
  %v1371 = vpop.f32.mrf.mxu0
  %v1372 = vadd.f32 %v1140, %v1371
  %v1373 = vpop.f32.mrf.mxu0
  %1374 = vdwg.mxu0
  %1375 = vmatprep.subr.mxu0 0.0
  %v1376 = vand.u32 %v81, 4294901760
  %v1377 = vsub.f32 %v81, %v1376
  %1378 = vmatpush1.msra.mxu0 %v1377
  %1379 = vmatprep.subr.mxu0 0.0
  %v1380 = vand.u32 %v80, 4294901760
  %v1381 = vsub.f32 %v80, %v1380
  %1382 = vmatpush1.msra.mxu0 %v1381
  %1383 = vmatprep.subr.mxu0 0.0
  %v1384 = vand.u32 %v79, 4294901760
  %v1385 = vsub.f32 %v79, %v1384
  %1386 = vmatpush1.msra.mxu0 %v1385
  %1387 = vmatprep.subr.mxu0 0.0
  %v1388 = vand.u32 %v78, 4294901760
  %v1389 = vsub.f32 %v78, %v1388
  %1390 = vmatpush1.msra.mxu0 %v1389
  %1391 = vmatprep.subr.mxu0 0.0
  %v1392 = vand.u32 %v77, 4294901760
  %v1393 = vsub.f32 %v77, %v1392
  %1394 = vmatpush1.msra.mxu0 %v1393
  %1395 = vmatprep.subr.mxu0 0.0
  %v1396 = vand.u32 %v76, 4294901760
  %v1397 = vsub.f32 %v76, %v1396
  %1398 = vmatpush1.msra.mxu0 %v1397
  %1399 = vmatprep.subr.mxu0 0.0
  %v1400 = vand.u32 %v75, 4294901760
  %v1401 = vsub.f32 %v75, %v1400
  %1402 = vmatpush1.msra.mxu0 %v1401
  %1403 = vmatprep.subr.mxu0 0.0
  %v1404 = vand.u32 %v74, 4294901760
  %v1405 = vsub.f32 %v74, %v1404
  %1406 = vmatpush1.msra.mxu0 %v1405
  %1407 = vmatprep.subr.mxu0 0.0
  %v1408 = vand.u32 %v73, 4294901760
  %v1409 = vsub.f32 %v73, %v1408
  %1410 = vmatpush1.msra.mxu0 %v1409
  %1411 = vmatprep.subr.mxu0 0.0
  %v1412 = vand.u32 %v72, 4294901760
  %v1413 = vsub.f32 %v72, %v1412
  %1414 = vmatpush1.msra.mxu0 %v1413
  %1415 = vmatprep.subr.mxu0 0.0
  %v1416 = vand.u32 %v71, 4294901760
  %v1417 = vsub.f32 %v71, %v1416
  %1418 = vmatpush1.msra.mxu0 %v1417
  %1419 = vmatprep.subr.mxu0 0.0
  %v1420 = vand.u32 %v70, 4294901760
  %v1421 = vsub.f32 %v70, %v1420
  %1422 = vmatpush1.msra.mxu0 %v1421
  %1423 = vmatprep.subr.mxu0 0.0
  %v1424 = vand.u32 %v69, 4294901760
  %v1425 = vsub.f32 %v69, %v1424
  %1426 = vmatpush1.msra.mxu0 %v1425
  %1427 = vmatprep.subr.mxu0 0.0
  %v1428 = vand.u32 %v68, 4294901760
  %v1429 = vsub.f32 %v68, %v1428
  %1430 = vmatpush1.msra.mxu0 %v1429
  %1431 = vmatprep.subr.mxu0 0.0
  %v1432 = vand.u32 %v67, 4294901760
  %v1433 = vsub.f32 %v67, %v1432
  %1434 = vmatpush1.msra.mxu0 %v1433
  %1435 = vmatprep.subr.mxu0 0.0
  %v1436 = vand.u32 %v66, 4294901760
  %v1437 = vsub.f32 %v66, %v1436
  %1438 = vmatpush1.msra.mxu0 %v1437
  %1439 = vmatprep.subr.mxu0 0.0
  %v1440 = vand.u32 %v97, 4294901760
  %v1441 = vsub.f32 %v97, %v1440
  %1442 = vmatpush2.msra.mxu0 %v1441
  %1443 = vmatprep.subr.mxu0 0.0
  %v1444 = vand.u32 %v96, 4294901760
  %v1445 = vsub.f32 %v96, %v1444
  %1446 = vmatpush2.msra.mxu0 %v1445
  %1447 = vmatprep.subr.mxu0 0.0
  %v1448 = vand.u32 %v95, 4294901760
  %v1449 = vsub.f32 %v95, %v1448
  %1450 = vmatpush2.msra.mxu0 %v1449
  %1451 = vmatprep.subr.mxu0 0.0
  %v1452 = vand.u32 %v94, 4294901760
  %v1453 = vsub.f32 %v94, %v1452
  %1454 = vmatpush2.msra.mxu0 %v1453
  %1455 = vmatprep.subr.mxu0 0.0
  %v1456 = vand.u32 %v93, 4294901760
  %v1457 = vsub.f32 %v93, %v1456
  %1458 = vmatpush2.msra.mxu0 %v1457
  %1459 = vmatprep.subr.mxu0 0.0
  %v1460 = vand.u32 %v92, 4294901760
  %v1461 = vsub.f32 %v92, %v1460
  %1462 = vmatpush2.msra.mxu0 %v1461
  %1463 = vmatprep.subr.mxu0 0.0
  %v1464 = vand.u32 %v91, 4294901760
  %v1465 = vsub.f32 %v91, %v1464
  %1466 = vmatpush2.msra.mxu0 %v1465
  %1467 = vmatprep.subr.mxu0 0.0
  %v1468 = vand.u32 %v90, 4294901760
  %v1469 = vsub.f32 %v90, %v1468
  %1470 = vmatpush2.msra.mxu0 %v1469
  %1471 = vmatprep.subr.mxu0 0.0
  %v1472 = vand.u32 %v89, 4294901760
  %v1473 = vsub.f32 %v89, %v1472
  %1474 = vmatpush2.msra.mxu0 %v1473
  %1475 = vmatprep.subr.mxu0 0.0
  %v1476 = vand.u32 %v88, 4294901760
  %v1477 = vsub.f32 %v88, %v1476
  %1478 = vmatpush2.msra.mxu0 %v1477
  %1479 = vmatprep.subr.mxu0 0.0
  %v1480 = vand.u32 %v87, 4294901760
  %v1481 = vsub.f32 %v87, %v1480
  %1482 = vmatpush2.msra.mxu0 %v1481
  %1483 = vmatprep.subr.mxu0 0.0
  %v1484 = vand.u32 %v86, 4294901760
  %v1485 = vsub.f32 %v86, %v1484
  %1486 = vmatpush2.msra.mxu0 %v1485
  %1487 = vmatprep.subr.mxu0 0.0
  %v1488 = vand.u32 %v85, 4294901760
  %v1489 = vsub.f32 %v85, %v1488
  %1490 = vmatpush2.msra.mxu0 %v1489
  %1491 = vmatprep.subr.mxu0 0.0
  %v1492 = vand.u32 %v84, 4294901760
  %v1493 = vsub.f32 %v84, %v1492
  %1494 = vmatpush2.msra.mxu0 %v1493
  %1495 = vmatprep.subr.mxu0 0.0
  %v1496 = vand.u32 %v83, 4294901760
  %v1497 = vsub.f32 %v83, %v1496
  %1498 = vmatpush2.msra.mxu0 %v1497
  %1499 = vmatprep.subr.mxu0 0.0
  %v1500 = vand.u32 %v82, 4294901760
  %v1501 = vsub.f32 %v82, %v1500
  %1502 = vmatpush2.msra.mxu0 %v1501
  %v1503 = vand.u32 %v29, 4294901760
  %v1504 = vsub.f32 %v29, %v1503
  %1505 = vmatprep.mubr.f32.mxu0 %v1504
  %v1506 = vand.u32 %v28, 4294901760
  %v1507 = vsub.f32 %v28, %v1506
  %1508 = vmatmul.mubr.f32.gmra.mxu0 %v1507
  %v1509 = vpop.f32.mrf.mxu0
  %v1510 = vadd.f32 %v1372, %v1509
  %v1511 = vpop.f32.mrf.mxu0
  %1512 = vdwg.mxu0
  %1513 = vmatprep.subr.mxu0 0.0
  %v1514 = vand.u32 %v81, 4294901760
  %1515 = vmatpush1.msra.mxu0 %v1514
  %1516 = vmatprep.subr.mxu0 0.0
  %v1517 = vand.u32 %v80, 4294901760
  %1518 = vmatpush1.msra.mxu0 %v1517
  %1519 = vmatprep.subr.mxu0 0.0
  %v1520 = vand.u32 %v79, 4294901760
  %1521 = vmatpush1.msra.mxu0 %v1520
  %1522 = vmatprep.subr.mxu0 0.0
  %v1523 = vand.u32 %v78, 4294901760
  %1524 = vmatpush1.msra.mxu0 %v1523
  %1525 = vmatprep.subr.mxu0 0.0
  %v1526 = vand.u32 %v77, 4294901760
  %1527 = vmatpush1.msra.mxu0 %v1526
  %1528 = vmatprep.subr.mxu0 0.0
  %v1529 = vand.u32 %v76, 4294901760
  %1530 = vmatpush1.msra.mxu0 %v1529
  %1531 = vmatprep.subr.mxu0 0.0
  %v1532 = vand.u32 %v75, 4294901760
  %1533 = vmatpush1.msra.mxu0 %v1532
  %1534 = vmatprep.subr.mxu0 0.0
  %v1535 = vand.u32 %v74, 4294901760
  %1536 = vmatpush1.msra.mxu0 %v1535
  %1537 = vmatprep.subr.mxu0 0.0
  %v1538 = vand.u32 %v73, 4294901760
  %1539 = vmatpush1.msra.mxu0 %v1538
  %1540 = vmatprep.subr.mxu0 0.0
  %v1541 = vand.u32 %v72, 4294901760
  %1542 = vmatpush1.msra.mxu0 %v1541
  %1543 = vmatprep.subr.mxu0 0.0
  %v1544 = vand.u32 %v71, 4294901760
  %1545 = vmatpush1.msra.mxu0 %v1544
  %1546 = vmatprep.subr.mxu0 0.0
  %v1547 = vand.u32 %v70, 4294901760
  %1548 = vmatpush1.msra.mxu0 %v1547
  %1549 = vmatprep.subr.mxu0 0.0
  %v1550 = vand.u32 %v69, 4294901760
  %1551 = vmatpush1.msra.mxu0 %v1550
  %1552 = vmatprep.subr.mxu0 0.0
  %v1553 = vand.u32 %v68, 4294901760
  %1554 = vmatpush1.msra.mxu0 %v1553
  %1555 = vmatprep.subr.mxu0 0.0
  %v1556 = vand.u32 %v67, 4294901760
  %1557 = vmatpush1.msra.mxu0 %v1556
  %1558 = vmatprep.subr.mxu0 0.0
  %v1559 = vand.u32 %v66, 4294901760
  %1560 = vmatpush1.msra.mxu0 %v1559
  %1561 = vmatprep.subr.mxu0 0.0
  %v1562 = vand.u32 %v97, 4294901760
  %1563 = vmatpush2.msra.mxu0 %v1562
  %1564 = vmatprep.subr.mxu0 0.0
  %v1565 = vand.u32 %v96, 4294901760
  %1566 = vmatpush2.msra.mxu0 %v1565
  %1567 = vmatprep.subr.mxu0 0.0
  %v1568 = vand.u32 %v95, 4294901760
  %1569 = vmatpush2.msra.mxu0 %v1568
  %1570 = vmatprep.subr.mxu0 0.0
  %v1571 = vand.u32 %v94, 4294901760
  %1572 = vmatpush2.msra.mxu0 %v1571
  %1573 = vmatprep.subr.mxu0 0.0
  %v1574 = vand.u32 %v93, 4294901760
  %1575 = vmatpush2.msra.mxu0 %v1574
  %1576 = vmatprep.subr.mxu0 0.0
  %v1577 = vand.u32 %v92, 4294901760
  %1578 = vmatpush2.msra.mxu0 %v1577
  %1579 = vmatprep.subr.mxu0 0.0
  %v1580 = vand.u32 %v91, 4294901760
  %1581 = vmatpush2.msra.mxu0 %v1580
  %1582 = vmatprep.subr.mxu0 0.0
  %v1583 = vand.u32 %v90, 4294901760
  %1584 = vmatpush2.msra.mxu0 %v1583
  %1585 = vmatprep.subr.mxu0 0.0
  %v1586 = vand.u32 %v89, 4294901760
  %1587 = vmatpush2.msra.mxu0 %v1586
  %1588 = vmatprep.subr.mxu0 0.0
  %v1589 = vand.u32 %v88, 4294901760
  %1590 = vmatpush2.msra.mxu0 %v1589
  %1591 = vmatprep.subr.mxu0 0.0
  %v1592 = vand.u32 %v87, 4294901760
  %1593 = vmatpush2.msra.mxu0 %v1592
  %1594 = vmatprep.subr.mxu0 0.0
  %v1595 = vand.u32 %v86, 4294901760
  %1596 = vmatpush2.msra.mxu0 %v1595
  %1597 = vmatprep.subr.mxu0 0.0
  %v1598 = vand.u32 %v85, 4294901760
  %1599 = vmatpush2.msra.mxu0 %v1598
  %1600 = vmatprep.subr.mxu0 0.0
  %v1601 = vand.u32 %v84, 4294901760
  %1602 = vmatpush2.msra.mxu0 %v1601
  %1603 = vmatprep.subr.mxu0 0.0
  %v1604 = vand.u32 %v83, 4294901760
  %1605 = vmatpush2.msra.mxu0 %v1604
  %1606 = vmatprep.subr.mxu0 0.0
  %v1607 = vand.u32 %v82, 4294901760
  %1608 = vmatpush2.msra.mxu0 %v1607
  %v1609 = vand.u32 %v29, 4294901760
  %v1610 = vsub.f32 %v29, %v1609
  %v1611 = vand.u32 %v1610, 4294901760
  %1612 = vmatprep.mubr.f32.mxu0 %v1611
  %v1613 = vand.u32 %v28, 4294901760
  %v1614 = vsub.f32 %v28, %v1613
  %v1615 = vand.u32 %v1614, 4294901760
  %1616 = vmatmul.mubr.f32.gmra.mxu0 %v1615
  %v1617 = vpop.f32.mrf.mxu0
  %v1618 = vadd.f32 %v1510, %v1617
  %v1619 = vpop.f32.mrf.mxu0
  %1620 = vdwg.mxu0
  %1621 = vmatprep.subr.mxu0 0.0
  %v1622 = vand.u32 %v81, 4294901760
  %v1623 = vsub.f32 %v81, %v1622
  %v1624 = vand.u32 %v1623, 4294901760
  %1625 = vmatpush1.msra.mxu0 %v1624
  %1626 = vmatprep.subr.mxu0 0.0
  %v1627 = vand.u32 %v80, 4294901760
  %v1628 = vsub.f32 %v80, %v1627
  %v1629 = vand.u32 %v1628, 4294901760
  %1630 = vmatpush1.msra.mxu0 %v1629
  %1631 = vmatprep.subr.mxu0 0.0
  %v1632 = vand.u32 %v79, 4294901760
  %v1633 = vsub.f32 %v79, %v1632
  %v1634 = vand.u32 %v1633, 4294901760
  %1635 = vmatpush1.msra.mxu0 %v1634
  %1636 = vmatprep.subr.mxu0 0.0
  %v1637 = vand.u32 %v78, 4294901760
  %v1638 = vsub.f32 %v78, %v1637
  %v1639 = vand.u32 %v1638, 4294901760
  %1640 = vmatpush1.msra.mxu0 %v1639
  %1641 = vmatprep.subr.mxu0 0.0
  %v1642 = vand.u32 %v77, 4294901760
  %v1643 = vsub.f32 %v77, %v1642
  %v1644 = vand.u32 %v1643, 4294901760
  %1645 = vmatpush1.msra.mxu0 %v1644
  %1646 = vmatprep.subr.mxu0 0.0
  %v1647 = vand.u32 %v76, 4294901760
  %v1648 = vsub.f32 %v76, %v1647
  %v1649 = vand.u32 %v1648, 4294901760
  %1650 = vmatpush1.msra.mxu0 %v1649
  %1651 = vmatprep.subr.mxu0 0.0
  %v1652 = vand.u32 %v75, 4294901760
  %v1653 = vsub.f32 %v75, %v1652
  %v1654 = vand.u32 %v1653, 4294901760
  %1655 = vmatpush1.msra.mxu0 %v1654
  %1656 = vmatprep.subr.mxu0 0.0
  %v1657 = vand.u32 %v74, 4294901760
  %v1658 = vsub.f32 %v74, %v1657
  %v1659 = vand.u32 %v1658, 4294901760
  %1660 = vmatpush1.msra.mxu0 %v1659
  %1661 = vmatprep.subr.mxu0 0.0
  %v1662 = vand.u32 %v73, 4294901760
  %v1663 = vsub.f32 %v73, %v1662
  %v1664 = vand.u32 %v1663, 4294901760
  %1665 = vmatpush1.msra.mxu0 %v1664
  %1666 = vmatprep.subr.mxu0 0.0
  %v1667 = vand.u32 %v72, 4294901760
  %v1668 = vsub.f32 %v72, %v1667
  %v1669 = vand.u32 %v1668, 4294901760
  %1670 = vmatpush1.msra.mxu0 %v1669
  %1671 = vmatprep.subr.mxu0 0.0
  %v1672 = vand.u32 %v71, 4294901760
  %v1673 = vsub.f32 %v71, %v1672
  %v1674 = vand.u32 %v1673, 4294901760
  %1675 = vmatpush1.msra.mxu0 %v1674
  %1676 = vmatprep.subr.mxu0 0.0
  %v1677 = vand.u32 %v70, 4294901760
  %v1678 = vsub.f32 %v70, %v1677
  %v1679 = vand.u32 %v1678, 4294901760
  %1680 = vmatpush1.msra.mxu0 %v1679
  %1681 = vmatprep.subr.mxu0 0.0
  %v1682 = vand.u32 %v69, 4294901760
  %v1683 = vsub.f32 %v69, %v1682
  %v1684 = vand.u32 %v1683, 4294901760
  %1685 = vmatpush1.msra.mxu0 %v1684
  %1686 = vmatprep.subr.mxu0 0.0
  %v1687 = vand.u32 %v68, 4294901760
  %v1688 = vsub.f32 %v68, %v1687
  %v1689 = vand.u32 %v1688, 4294901760
  %1690 = vmatpush1.msra.mxu0 %v1689
  %1691 = vmatprep.subr.mxu0 0.0
  %v1692 = vand.u32 %v67, 4294901760
  %v1693 = vsub.f32 %v67, %v1692
  %v1694 = vand.u32 %v1693, 4294901760
  %1695 = vmatpush1.msra.mxu0 %v1694
  %1696 = vmatprep.subr.mxu0 0.0
  %v1697 = vand.u32 %v66, 4294901760
  %v1698 = vsub.f32 %v66, %v1697
  %v1699 = vand.u32 %v1698, 4294901760
  %1700 = vmatpush1.msra.mxu0 %v1699
  %1701 = vmatprep.subr.mxu0 0.0
  %v1702 = vand.u32 %v97, 4294901760
  %v1703 = vsub.f32 %v97, %v1702
  %v1704 = vand.u32 %v1703, 4294901760
  %1705 = vmatpush2.msra.mxu0 %v1704
  %1706 = vmatprep.subr.mxu0 0.0
  %v1707 = vand.u32 %v96, 4294901760
  %v1708 = vsub.f32 %v96, %v1707
  %v1709 = vand.u32 %v1708, 4294901760
  %1710 = vmatpush2.msra.mxu0 %v1709
  %1711 = vmatprep.subr.mxu0 0.0
  %v1712 = vand.u32 %v95, 4294901760
  %v1713 = vsub.f32 %v95, %v1712
  %v1714 = vand.u32 %v1713, 4294901760
  %1715 = vmatpush2.msra.mxu0 %v1714
  %1716 = vmatprep.subr.mxu0 0.0
  %v1717 = vand.u32 %v94, 4294901760
  %v1718 = vsub.f32 %v94, %v1717
  %v1719 = vand.u32 %v1718, 4294901760
  %1720 = vmatpush2.msra.mxu0 %v1719
  %1721 = vmatprep.subr.mxu0 0.0
  %v1722 = vand.u32 %v93, 4294901760
  %v1723 = vsub.f32 %v93, %v1722
  %v1724 = vand.u32 %v1723, 4294901760
  %1725 = vmatpush2.msra.mxu0 %v1724
  %1726 = vmatprep.subr.mxu0 0.0
  %v1727 = vand.u32 %v92, 4294901760
  %v1728 = vsub.f32 %v92, %v1727
  %v1729 = vand.u32 %v1728, 4294901760
  %1730 = vmatpush2.msra.mxu0 %v1729
  %1731 = vmatprep.subr.mxu0 0.0
  %v1732 = vand.u32 %v91, 4294901760
  %v1733 = vsub.f32 %v91, %v1732
  %v1734 = vand.u32 %v1733, 4294901760
  %1735 = vmatpush2.msra.mxu0 %v1734
  %1736 = vmatprep.subr.mxu0 0.0
  %v1737 = vand.u32 %v90, 4294901760
  %v1738 = vsub.f32 %v90, %v1737
  %v1739 = vand.u32 %v1738, 4294901760
  %1740 = vmatpush2.msra.mxu0 %v1739
  %1741 = vmatprep.subr.mxu0 0.0
  %v1742 = vand.u32 %v89, 4294901760
  %v1743 = vsub.f32 %v89, %v1742
  %v1744 = vand.u32 %v1743, 4294901760
  %1745 = vmatpush2.msra.mxu0 %v1744
  %1746 = vmatprep.subr.mxu0 0.0
  %v1747 = vand.u32 %v88, 4294901760
  %v1748 = vsub.f32 %v88, %v1747
  %v1749 = vand.u32 %v1748, 4294901760
  %1750 = vmatpush2.msra.mxu0 %v1749
  %1751 = vmatprep.subr.mxu0 0.0
  %v1752 = vand.u32 %v87, 4294901760
  %v1753 = vsub.f32 %v87, %v1752
  %v1754 = vand.u32 %v1753, 4294901760
  %1755 = vmatpush2.msra.mxu0 %v1754
  %1756 = vmatprep.subr.mxu0 0.0
  %v1757 = vand.u32 %v86, 4294901760
  %v1758 = vsub.f32 %v86, %v1757
  %v1759 = vand.u32 %v1758, 4294901760
  %1760 = vmatpush2.msra.mxu0 %v1759
  %1761 = vmatprep.subr.mxu0 0.0
  %v1762 = vand.u32 %v85, 4294901760
  %v1763 = vsub.f32 %v85, %v1762
  %v1764 = vand.u32 %v1763, 4294901760
  %1765 = vmatpush2.msra.mxu0 %v1764
  %1766 = vmatprep.subr.mxu0 0.0
  %v1767 = vand.u32 %v84, 4294901760
  %v1768 = vsub.f32 %v84, %v1767
  %v1769 = vand.u32 %v1768, 4294901760
  %1770 = vmatpush2.msra.mxu0 %v1769
  %1771 = vmatprep.subr.mxu0 0.0
  %v1772 = vand.u32 %v83, 4294901760
  %v1773 = vsub.f32 %v83, %v1772
  %v1774 = vand.u32 %v1773, 4294901760
  %1775 = vmatpush2.msra.mxu0 %v1774
  %1776 = vmatprep.subr.mxu0 0.0
  %v1777 = vand.u32 %v82, 4294901760
  %v1778 = vsub.f32 %v82, %v1777
  %v1779 = vand.u32 %v1778, 4294901760
  %1780 = vmatpush2.msra.mxu0 %v1779
  %v1781 = vand.u32 %v29, 4294901760
  %1782 = vmatprep.mubr.f32.mxu0 %v1781
  %v1783 = vand.u32 %v28, 4294901760
  %1784 = vmatmul.mubr.f32.gmra.mxu0 %v1783
  %v1785 = vpop.f32.mrf.mxu0
  %v1786 = vadd.f32 %v1618, %v1785
  %v1787 = vpop.f32.mrf.mxu0
  %1788 = vdwg.mxu0
  %1789 = vmatprep.subr.mxu0 0.0
  %v1790 = vand.u32 %v81, 4294901760
  %1791 = vmatpush1.msra.mxu0 %v1790
  %1792 = vmatprep.subr.mxu0 0.0
  %v1793 = vand.u32 %v80, 4294901760
  %1794 = vmatpush1.msra.mxu0 %v1793
  %1795 = vmatprep.subr.mxu0 0.0
  %v1796 = vand.u32 %v79, 4294901760
  %1797 = vmatpush1.msra.mxu0 %v1796
  %1798 = vmatprep.subr.mxu0 0.0
  %v1799 = vand.u32 %v78, 4294901760
  %1800 = vmatpush1.msra.mxu0 %v1799
  %1801 = vmatprep.subr.mxu0 0.0
  %v1802 = vand.u32 %v77, 4294901760
  %1803 = vmatpush1.msra.mxu0 %v1802
  %1804 = vmatprep.subr.mxu0 0.0
  %v1805 = vand.u32 %v76, 4294901760
  %1806 = vmatpush1.msra.mxu0 %v1805
  %1807 = vmatprep.subr.mxu0 0.0
  %v1808 = vand.u32 %v75, 4294901760
  %1809 = vmatpush1.msra.mxu0 %v1808
  %1810 = vmatprep.subr.mxu0 0.0
  %v1811 = vand.u32 %v74, 4294901760
  %1812 = vmatpush1.msra.mxu0 %v1811
  %1813 = vmatprep.subr.mxu0 0.0
  %v1814 = vand.u32 %v73, 4294901760
  %1815 = vmatpush1.msra.mxu0 %v1814
  %1816 = vmatprep.subr.mxu0 0.0
  %v1817 = vand.u32 %v72, 4294901760
  %1818 = vmatpush1.msra.mxu0 %v1817
  %1819 = vmatprep.subr.mxu0 0.0
  %v1820 = vand.u32 %v71, 4294901760
  %1821 = vmatpush1.msra.mxu0 %v1820
  %1822 = vmatprep.subr.mxu0 0.0
  %v1823 = vand.u32 %v70, 4294901760
  %1824 = vmatpush1.msra.mxu0 %v1823
  %1825 = vmatprep.subr.mxu0 0.0
  %v1826 = vand.u32 %v69, 4294901760
  %1827 = vmatpush1.msra.mxu0 %v1826
  %1828 = vmatprep.subr.mxu0 0.0
  %v1829 = vand.u32 %v68, 4294901760
  %1830 = vmatpush1.msra.mxu0 %v1829
  %1831 = vmatprep.subr.mxu0 0.0
  %v1832 = vand.u32 %v67, 4294901760
  %1833 = vmatpush1.msra.mxu0 %v1832
  %1834 = vmatprep.subr.mxu0 0.0
  %v1835 = vand.u32 %v66, 4294901760
  %1836 = vmatpush1.msra.mxu0 %v1835
  %1837 = vmatprep.subr.mxu0 0.0
  %v1838 = vand.u32 %v97, 4294901760
  %1839 = vmatpush2.msra.mxu0 %v1838
  %1840 = vmatprep.subr.mxu0 0.0
  %v1841 = vand.u32 %v96, 4294901760
  %1842 = vmatpush2.msra.mxu0 %v1841
  %1843 = vmatprep.subr.mxu0 0.0
  %v1844 = vand.u32 %v95, 4294901760
  %1845 = vmatpush2.msra.mxu0 %v1844
  %1846 = vmatprep.subr.mxu0 0.0
  %v1847 = vand.u32 %v94, 4294901760
  %1848 = vmatpush2.msra.mxu0 %v1847
  %1849 = vmatprep.subr.mxu0 0.0
  %v1850 = vand.u32 %v93, 4294901760
  %1851 = vmatpush2.msra.mxu0 %v1850
  %1852 = vmatprep.subr.mxu0 0.0
  %v1853 = vand.u32 %v92, 4294901760
  %1854 = vmatpush2.msra.mxu0 %v1853
  %1855 = vmatprep.subr.mxu0 0.0
  %v1856 = vand.u32 %v91, 4294901760
  %1857 = vmatpush2.msra.mxu0 %v1856
  %1858 = vmatprep.subr.mxu0 0.0
  %v1859 = vand.u32 %v90, 4294901760
  %1860 = vmatpush2.msra.mxu0 %v1859
  %1861 = vmatprep.subr.mxu0 0.0
  %v1862 = vand.u32 %v89, 4294901760
  %1863 = vmatpush2.msra.mxu0 %v1862
  %1864 = vmatprep.subr.mxu0 0.0
  %v1865 = vand.u32 %v88, 4294901760
  %1866 = vmatpush2.msra.mxu0 %v1865
  %1867 = vmatprep.subr.mxu0 0.0
  %v1868 = vand.u32 %v87, 4294901760
  %1869 = vmatpush2.msra.mxu0 %v1868
  %1870 = vmatprep.subr.mxu0 0.0
  %v1871 = vand.u32 %v86, 4294901760
  %1872 = vmatpush2.msra.mxu0 %v1871
  %1873 = vmatprep.subr.mxu0 0.0
  %v1874 = vand.u32 %v85, 4294901760
  %1875 = vmatpush2.msra.mxu0 %v1874
  %1876 = vmatprep.subr.mxu0 0.0
  %v1877 = vand.u32 %v84, 4294901760
  %1878 = vmatpush2.msra.mxu0 %v1877
  %1879 = vmatprep.subr.mxu0 0.0
  %v1880 = vand.u32 %v83, 4294901760
  %1881 = vmatpush2.msra.mxu0 %v1880
  %1882 = vmatprep.subr.mxu0 0.0
  %v1883 = vand.u32 %v82, 4294901760
  %1884 = vmatpush2.msra.mxu0 %v1883
  %v1885 = vand.u32 %v29, 4294901760
  %1886 = vmatprep.mubr.f32.mxu0 %v1885
  %v1887 = vand.u32 %v28, 4294901760
  %1888 = vmatmul.mubr.f32.gmra.mxu0 %v1887
  %v1889 = vpop.f32.mrf.mxu0
  %v1890 = vadd.f32 %v1786, %v1889
  %v1891 = vpop.f32.mrf.mxu0
  %1892 = vdwg.mxu0
  %1893 = vmatprep.subr.mxu0 0.0
  %v1894 = vand.u32 %v113, 4294901760
  %1895 = vmatpush1.msra.mxu0 %v1894
  %1896 = vmatprep.subr.mxu0 0.0
  %v1897 = vand.u32 %v112, 4294901760
  %1898 = vmatpush1.msra.mxu0 %v1897
  %1899 = vmatprep.subr.mxu0 0.0
  %v1900 = vand.u32 %v111, 4294901760
  %1901 = vmatpush1.msra.mxu0 %v1900
  %1902 = vmatprep.subr.mxu0 0.0
  %v1903 = vand.u32 %v110, 4294901760
  %1904 = vmatpush1.msra.mxu0 %v1903
  %1905 = vmatprep.subr.mxu0 0.0
  %v1906 = vand.u32 %v109, 4294901760
  %1907 = vmatpush1.msra.mxu0 %v1906
  %1908 = vmatprep.subr.mxu0 0.0
  %v1909 = vand.u32 %v108, 4294901760
  %1910 = vmatpush1.msra.mxu0 %v1909
  %1911 = vmatprep.subr.mxu0 0.0
  %v1912 = vand.u32 %v107, 4294901760
  %1913 = vmatpush1.msra.mxu0 %v1912
  %1914 = vmatprep.subr.mxu0 0.0
  %v1915 = vand.u32 %v106, 4294901760
  %1916 = vmatpush1.msra.mxu0 %v1915
  %1917 = vmatprep.subr.mxu0 0.0
  %v1918 = vand.u32 %v105, 4294901760
  %1919 = vmatpush1.msra.mxu0 %v1918
  %1920 = vmatprep.subr.mxu0 0.0
  %v1921 = vand.u32 %v104, 4294901760
  %1922 = vmatpush1.msra.mxu0 %v1921
  %1923 = vmatprep.subr.mxu0 0.0
  %v1924 = vand.u32 %v103, 4294901760
  %1925 = vmatpush1.msra.mxu0 %v1924
  %1926 = vmatprep.subr.mxu0 0.0
  %v1927 = vand.u32 %v102, 4294901760
  %1928 = vmatpush1.msra.mxu0 %v1927
  %1929 = vmatprep.subr.mxu0 0.0
  %v1930 = vand.u32 %v101, 4294901760
  %1931 = vmatpush1.msra.mxu0 %v1930
  %1932 = vmatprep.subr.mxu0 0.0
  %v1933 = vand.u32 %v100, 4294901760
  %1934 = vmatpush1.msra.mxu0 %v1933
  %1935 = vmatprep.subr.mxu0 0.0
  %v1936 = vand.u32 %v99, 4294901760
  %1937 = vmatpush1.msra.mxu0 %v1936
  %1938 = vmatprep.subr.mxu0 0.0
  %v1939 = vand.u32 %v98, 4294901760
  %1940 = vmatpush1.msra.mxu0 %v1939
  %1941 = vmatprep.subr.mxu0 0.0
  %v1942 = vand.u32 %v129, 4294901760
  %1943 = vmatpush2.msra.mxu0 %v1942
  %1944 = vmatprep.subr.mxu0 0.0
  %v1945 = vand.u32 %v128, 4294901760
  %1946 = vmatpush2.msra.mxu0 %v1945
  %1947 = vmatprep.subr.mxu0 0.0
  %v1948 = vand.u32 %v127, 4294901760
  %1949 = vmatpush2.msra.mxu0 %v1948
  %1950 = vmatprep.subr.mxu0 0.0
  %v1951 = vand.u32 %v126, 4294901760
  %1952 = vmatpush2.msra.mxu0 %v1951
  %1953 = vmatprep.subr.mxu0 0.0
  %v1954 = vand.u32 %v125, 4294901760
  %1955 = vmatpush2.msra.mxu0 %v1954
  %1956 = vmatprep.subr.mxu0 0.0
  %v1957 = vand.u32 %v124, 4294901760
  %1958 = vmatpush2.msra.mxu0 %v1957
  %1959 = vmatprep.subr.mxu0 0.0
  %v1960 = vand.u32 %v123, 4294901760
  %1961 = vmatpush2.msra.mxu0 %v1960
  %1962 = vmatprep.subr.mxu0 0.0
  %v1963 = vand.u32 %v122, 4294901760
  %1964 = vmatpush2.msra.mxu0 %v1963
  %1965 = vmatprep.subr.mxu0 0.0
  %v1966 = vand.u32 %v121, 4294901760
  %1967 = vmatpush2.msra.mxu0 %v1966
  %1968 = vmatprep.subr.mxu0 0.0
  %v1969 = vand.u32 %v120, 4294901760
  %1970 = vmatpush2.msra.mxu0 %v1969
  %1971 = vmatprep.subr.mxu0 0.0
  %v1972 = vand.u32 %v119, 4294901760
  %1973 = vmatpush2.msra.mxu0 %v1972
  %1974 = vmatprep.subr.mxu0 0.0
  %v1975 = vand.u32 %v118, 4294901760
  %1976 = vmatpush2.msra.mxu0 %v1975
  %1977 = vmatprep.subr.mxu0 0.0
  %v1978 = vand.u32 %v117, 4294901760
  %1979 = vmatpush2.msra.mxu0 %v1978
  %1980 = vmatprep.subr.mxu0 0.0
  %v1981 = vand.u32 %v116, 4294901760
  %1982 = vmatpush2.msra.mxu0 %v1981
  %1983 = vmatprep.subr.mxu0 0.0
  %v1984 = vand.u32 %v115, 4294901760
  %1985 = vmatpush2.msra.mxu0 %v1984
  %1986 = vmatprep.subr.mxu0 0.0
  %v1987 = vand.u32 %v114, 4294901760
  %1988 = vmatpush2.msra.mxu0 %v1987
  %v1989 = vand.u32 %v31, 4294901760
  %v1990 = vsub.f32 %v31, %v1989
  %v1991 = vand.u32 %v1990, 4294901760
  %v1992 = vsub.f32 %v1990, %v1991
  %v1993 = vand.u32 %v1992, 4294901760
  %1994 = vmatprep.mubr.f32.mxu0 %v1993
  %v1995 = vand.u32 %v30, 4294901760
  %v1996 = vsub.f32 %v30, %v1995
  %v1997 = vand.u32 %v1996, 4294901760
  %v1998 = vsub.f32 %v1996, %v1997
  %v1999 = vand.u32 %v1998, 4294901760
  %2000 = vmatmul.mubr.f32.gmra.mxu0 %v1999
  %v2001 = vpop.f32.mrf.mxu0
  %v2002 = vadd.f32 %v1890, %v2001
  %v2003 = vpop.f32.mrf.mxu0
  %2004 = vdwg.mxu0
  %2005 = vmatprep.subr.mxu0 0.0
  %v2006 = vand.u32 %v113, 4294901760
  %v2007 = vsub.f32 %v113, %v2006
  %v2008 = vand.u32 %v2007, 4294901760
  %v2009 = vsub.f32 %v2007, %v2008
  %v2010 = vand.u32 %v2009, 4294901760
  %2011 = vmatpush1.msra.mxu0 %v2010
  %2012 = vmatprep.subr.mxu0 0.0
  %v2013 = vand.u32 %v112, 4294901760
  %v2014 = vsub.f32 %v112, %v2013
  %v2015 = vand.u32 %v2014, 4294901760
  %v2016 = vsub.f32 %v2014, %v2015
  %v2017 = vand.u32 %v2016, 4294901760
  %2018 = vmatpush1.msra.mxu0 %v2017
  %2019 = vmatprep.subr.mxu0 0.0
  %v2020 = vand.u32 %v111, 4294901760
  %v2021 = vsub.f32 %v111, %v2020
  %v2022 = vand.u32 %v2021, 4294901760
  %v2023 = vsub.f32 %v2021, %v2022
  %v2024 = vand.u32 %v2023, 4294901760
  %2025 = vmatpush1.msra.mxu0 %v2024
  %2026 = vmatprep.subr.mxu0 0.0
  %v2027 = vand.u32 %v110, 4294901760
  %v2028 = vsub.f32 %v110, %v2027
  %v2029 = vand.u32 %v2028, 4294901760
  %v2030 = vsub.f32 %v2028, %v2029
  %v2031 = vand.u32 %v2030, 4294901760
  %2032 = vmatpush1.msra.mxu0 %v2031
  %2033 = vmatprep.subr.mxu0 0.0
  %v2034 = vand.u32 %v109, 4294901760
  %v2035 = vsub.f32 %v109, %v2034
  %v2036 = vand.u32 %v2035, 4294901760
  %v2037 = vsub.f32 %v2035, %v2036
  %v2038 = vand.u32 %v2037, 4294901760
  %2039 = vmatpush1.msra.mxu0 %v2038
  %2040 = vmatprep.subr.mxu0 0.0
  %v2041 = vand.u32 %v108, 4294901760
  %v2042 = vsub.f32 %v108, %v2041
  %v2043 = vand.u32 %v2042, 4294901760
  %v2044 = vsub.f32 %v2042, %v2043
  %v2045 = vand.u32 %v2044, 4294901760
  %2046 = vmatpush1.msra.mxu0 %v2045
  %2047 = vmatprep.subr.mxu0 0.0
  %v2048 = vand.u32 %v107, 4294901760
  %v2049 = vsub.f32 %v107, %v2048
  %v2050 = vand.u32 %v2049, 4294901760
  %v2051 = vsub.f32 %v2049, %v2050
  %v2052 = vand.u32 %v2051, 4294901760
  %2053 = vmatpush1.msra.mxu0 %v2052
  %2054 = vmatprep.subr.mxu0 0.0
  %v2055 = vand.u32 %v106, 4294901760
  %v2056 = vsub.f32 %v106, %v2055
  %v2057 = vand.u32 %v2056, 4294901760
  %v2058 = vsub.f32 %v2056, %v2057
  %v2059 = vand.u32 %v2058, 4294901760
  %2060 = vmatpush1.msra.mxu0 %v2059
  %2061 = vmatprep.subr.mxu0 0.0
  %v2062 = vand.u32 %v105, 4294901760
  %v2063 = vsub.f32 %v105, %v2062
  %v2064 = vand.u32 %v2063, 4294901760
  %v2065 = vsub.f32 %v2063, %v2064
  %v2066 = vand.u32 %v2065, 4294901760
  %2067 = vmatpush1.msra.mxu0 %v2066
  %2068 = vmatprep.subr.mxu0 0.0
  %v2069 = vand.u32 %v104, 4294901760
  %v2070 = vsub.f32 %v104, %v2069
  %v2071 = vand.u32 %v2070, 4294901760
  %v2072 = vsub.f32 %v2070, %v2071
  %v2073 = vand.u32 %v2072, 4294901760
  %2074 = vmatpush1.msra.mxu0 %v2073
  %2075 = vmatprep.subr.mxu0 0.0
  %v2076 = vand.u32 %v103, 4294901760
  %v2077 = vsub.f32 %v103, %v2076
  %v2078 = vand.u32 %v2077, 4294901760
  %v2079 = vsub.f32 %v2077, %v2078
  %v2080 = vand.u32 %v2079, 4294901760
  %2081 = vmatpush1.msra.mxu0 %v2080
  %2082 = vmatprep.subr.mxu0 0.0
  %v2083 = vand.u32 %v102, 4294901760
  %v2084 = vsub.f32 %v102, %v2083
  %v2085 = vand.u32 %v2084, 4294901760
  %v2086 = vsub.f32 %v2084, %v2085
  %v2087 = vand.u32 %v2086, 4294901760
  %2088 = vmatpush1.msra.mxu0 %v2087
  %2089 = vmatprep.subr.mxu0 0.0
  %v2090 = vand.u32 %v101, 4294901760
  %v2091 = vsub.f32 %v101, %v2090
  %v2092 = vand.u32 %v2091, 4294901760
  %v2093 = vsub.f32 %v2091, %v2092
  %v2094 = vand.u32 %v2093, 4294901760
  %2095 = vmatpush1.msra.mxu0 %v2094
  %2096 = vmatprep.subr.mxu0 0.0
  %v2097 = vand.u32 %v100, 4294901760
  %v2098 = vsub.f32 %v100, %v2097
  %v2099 = vand.u32 %v2098, 4294901760
  %v2100 = vsub.f32 %v2098, %v2099
  %v2101 = vand.u32 %v2100, 4294901760
  %2102 = vmatpush1.msra.mxu0 %v2101
  %2103 = vmatprep.subr.mxu0 0.0
  %v2104 = vand.u32 %v99, 4294901760
  %v2105 = vsub.f32 %v99, %v2104
  %v2106 = vand.u32 %v2105, 4294901760
  %v2107 = vsub.f32 %v2105, %v2106
  %v2108 = vand.u32 %v2107, 4294901760
  %2109 = vmatpush1.msra.mxu0 %v2108
  %2110 = vmatprep.subr.mxu0 0.0
  %v2111 = vand.u32 %v98, 4294901760
  %v2112 = vsub.f32 %v98, %v2111
  %v2113 = vand.u32 %v2112, 4294901760
  %v2114 = vsub.f32 %v2112, %v2113
  %v2115 = vand.u32 %v2114, 4294901760
  %2116 = vmatpush1.msra.mxu0 %v2115
  %2117 = vmatprep.subr.mxu0 0.0
  %v2118 = vand.u32 %v129, 4294901760
  %v2119 = vsub.f32 %v129, %v2118
  %v2120 = vand.u32 %v2119, 4294901760
  %v2121 = vsub.f32 %v2119, %v2120
  %v2122 = vand.u32 %v2121, 4294901760
  %2123 = vmatpush2.msra.mxu0 %v2122
  %2124 = vmatprep.subr.mxu0 0.0
  %v2125 = vand.u32 %v128, 4294901760
  %v2126 = vsub.f32 %v128, %v2125
  %v2127 = vand.u32 %v2126, 4294901760
  %v2128 = vsub.f32 %v2126, %v2127
  %v2129 = vand.u32 %v2128, 4294901760
  %2130 = vmatpush2.msra.mxu0 %v2129
  %2131 = vmatprep.subr.mxu0 0.0
  %v2132 = vand.u32 %v127, 4294901760
  %v2133 = vsub.f32 %v127, %v2132
  %v2134 = vand.u32 %v2133, 4294901760
  %v2135 = vsub.f32 %v2133, %v2134
  %v2136 = vand.u32 %v2135, 4294901760
  %2137 = vmatpush2.msra.mxu0 %v2136
  %2138 = vmatprep.subr.mxu0 0.0
  %v2139 = vand.u32 %v126, 4294901760
  %v2140 = vsub.f32 %v126, %v2139
  %v2141 = vand.u32 %v2140, 4294901760
  %v2142 = vsub.f32 %v2140, %v2141
  %v2143 = vand.u32 %v2142, 4294901760
  %2144 = vmatpush2.msra.mxu0 %v2143
  %2145 = vmatprep.subr.mxu0 0.0
  %v2146 = vand.u32 %v125, 4294901760
  %v2147 = vsub.f32 %v125, %v2146
  %v2148 = vand.u32 %v2147, 4294901760
  %v2149 = vsub.f32 %v2147, %v2148
  %v2150 = vand.u32 %v2149, 4294901760
  %2151 = vmatpush2.msra.mxu0 %v2150
  %2152 = vmatprep.subr.mxu0 0.0
  %v2153 = vand.u32 %v124, 4294901760
  %v2154 = vsub.f32 %v124, %v2153
  %v2155 = vand.u32 %v2154, 4294901760
  %v2156 = vsub.f32 %v2154, %v2155
  %v2157 = vand.u32 %v2156, 4294901760
  %2158 = vmatpush2.msra.mxu0 %v2157
  %2159 = vmatprep.subr.mxu0 0.0
  %v2160 = vand.u32 %v123, 4294901760
  %v2161 = vsub.f32 %v123, %v2160
  %v2162 = vand.u32 %v2161, 4294901760
  %v2163 = vsub.f32 %v2161, %v2162
  %v2164 = vand.u32 %v2163, 4294901760
  %2165 = vmatpush2.msra.mxu0 %v2164
  %2166 = vmatprep.subr.mxu0 0.0
  %v2167 = vand.u32 %v122, 4294901760
  %v2168 = vsub.f32 %v122, %v2167
  %v2169 = vand.u32 %v2168, 4294901760
  %v2170 = vsub.f32 %v2168, %v2169
  %v2171 = vand.u32 %v2170, 4294901760
  %2172 = vmatpush2.msra.mxu0 %v2171
  %2173 = vmatprep.subr.mxu0 0.0
  %v2174 = vand.u32 %v121, 4294901760
  %v2175 = vsub.f32 %v121, %v2174
  %v2176 = vand.u32 %v2175, 4294901760
  %v2177 = vsub.f32 %v2175, %v2176
  %v2178 = vand.u32 %v2177, 4294901760
  %2179 = vmatpush2.msra.mxu0 %v2178
  %2180 = vmatprep.subr.mxu0 0.0
  %v2181 = vand.u32 %v120, 4294901760
  %v2182 = vsub.f32 %v120, %v2181
  %v2183 = vand.u32 %v2182, 4294901760
  %v2184 = vsub.f32 %v2182, %v2183
  %v2185 = vand.u32 %v2184, 4294901760
  %2186 = vmatpush2.msra.mxu0 %v2185
  %2187 = vmatprep.subr.mxu0 0.0
  %v2188 = vand.u32 %v119, 4294901760
  %v2189 = vsub.f32 %v119, %v2188
  %v2190 = vand.u32 %v2189, 4294901760
  %v2191 = vsub.f32 %v2189, %v2190
  %v2192 = vand.u32 %v2191, 4294901760
  %2193 = vmatpush2.msra.mxu0 %v2192
  %2194 = vmatprep.subr.mxu0 0.0
  %v2195 = vand.u32 %v118, 4294901760
  %v2196 = vsub.f32 %v118, %v2195
  %v2197 = vand.u32 %v2196, 4294901760
  %v2198 = vsub.f32 %v2196, %v2197
  %v2199 = vand.u32 %v2198, 4294901760
  %2200 = vmatpush2.msra.mxu0 %v2199
  %2201 = vmatprep.subr.mxu0 0.0
  %v2202 = vand.u32 %v117, 4294901760
  %v2203 = vsub.f32 %v117, %v2202
  %v2204 = vand.u32 %v2203, 4294901760
  %v2205 = vsub.f32 %v2203, %v2204
  %v2206 = vand.u32 %v2205, 4294901760
  %2207 = vmatpush2.msra.mxu0 %v2206
  %2208 = vmatprep.subr.mxu0 0.0
  %v2209 = vand.u32 %v116, 4294901760
  %v2210 = vsub.f32 %v116, %v2209
  %v2211 = vand.u32 %v2210, 4294901760
  %v2212 = vsub.f32 %v2210, %v2211
  %v2213 = vand.u32 %v2212, 4294901760
  %2214 = vmatpush2.msra.mxu0 %v2213
  %2215 = vmatprep.subr.mxu0 0.0
  %v2216 = vand.u32 %v115, 4294901760
  %v2217 = vsub.f32 %v115, %v2216
  %v2218 = vand.u32 %v2217, 4294901760
  %v2219 = vsub.f32 %v2217, %v2218
  %v2220 = vand.u32 %v2219, 4294901760
  %2221 = vmatpush2.msra.mxu0 %v2220
  %2222 = vmatprep.subr.mxu0 0.0
  %v2223 = vand.u32 %v114, 4294901760
  %v2224 = vsub.f32 %v114, %v2223
  %v2225 = vand.u32 %v2224, 4294901760
  %v2226 = vsub.f32 %v2224, %v2225
  %v2227 = vand.u32 %v2226, 4294901760
  %2228 = vmatpush2.msra.mxu0 %v2227
  %v2229 = vand.u32 %v31, 4294901760
  %2230 = vmatprep.mubr.f32.mxu0 %v2229
  %v2231 = vand.u32 %v30, 4294901760
  %2232 = vmatmul.mubr.f32.gmra.mxu0 %v2231
  %v2233 = vpop.f32.mrf.mxu0
  %v2234 = vadd.f32 %v2002, %v2233
  %v2235 = vpop.f32.mrf.mxu0
  %2236 = vdwg.mxu0
  %2237 = vmatprep.subr.mxu0 0.0
  %v2238 = vand.u32 %v113, 4294901760
  %v2239 = vsub.f32 %v113, %v2238
  %2240 = vmatpush1.msra.mxu0 %v2239
  %2241 = vmatprep.subr.mxu0 0.0
  %v2242 = vand.u32 %v112, 4294901760
  %v2243 = vsub.f32 %v112, %v2242
  %2244 = vmatpush1.msra.mxu0 %v2243
  %2245 = vmatprep.subr.mxu0 0.0
  %v2246 = vand.u32 %v111, 4294901760
  %v2247 = vsub.f32 %v111, %v2246
  %2248 = vmatpush1.msra.mxu0 %v2247
  %2249 = vmatprep.subr.mxu0 0.0
  %v2250 = vand.u32 %v110, 4294901760
  %v2251 = vsub.f32 %v110, %v2250
  %2252 = vmatpush1.msra.mxu0 %v2251
  %2253 = vmatprep.subr.mxu0 0.0
  %v2254 = vand.u32 %v109, 4294901760
  %v2255 = vsub.f32 %v109, %v2254
  %2256 = vmatpush1.msra.mxu0 %v2255
  %2257 = vmatprep.subr.mxu0 0.0
  %v2258 = vand.u32 %v108, 4294901760
  %v2259 = vsub.f32 %v108, %v2258
  %2260 = vmatpush1.msra.mxu0 %v2259
  %2261 = vmatprep.subr.mxu0 0.0
  %v2262 = vand.u32 %v107, 4294901760
  %v2263 = vsub.f32 %v107, %v2262
  %2264 = vmatpush1.msra.mxu0 %v2263
  %2265 = vmatprep.subr.mxu0 0.0
  %v2266 = vand.u32 %v106, 4294901760
  %v2267 = vsub.f32 %v106, %v2266
  %2268 = vmatpush1.msra.mxu0 %v2267
  %2269 = vmatprep.subr.mxu0 0.0
  %v2270 = vand.u32 %v105, 4294901760
  %v2271 = vsub.f32 %v105, %v2270
  %2272 = vmatpush1.msra.mxu0 %v2271
  %2273 = vmatprep.subr.mxu0 0.0
  %v2274 = vand.u32 %v104, 4294901760
  %v2275 = vsub.f32 %v104, %v2274
  %2276 = vmatpush1.msra.mxu0 %v2275
  %2277 = vmatprep.subr.mxu0 0.0
  %v2278 = vand.u32 %v103, 4294901760
  %v2279 = vsub.f32 %v103, %v2278
  %2280 = vmatpush1.msra.mxu0 %v2279
  %2281 = vmatprep.subr.mxu0 0.0
  %v2282 = vand.u32 %v102, 4294901760
  %v2283 = vsub.f32 %v102, %v2282
  %2284 = vmatpush1.msra.mxu0 %v2283
  %2285 = vmatprep.subr.mxu0 0.0
  %v2286 = vand.u32 %v101, 4294901760
  %v2287 = vsub.f32 %v101, %v2286
  %2288 = vmatpush1.msra.mxu0 %v2287
  %2289 = vmatprep.subr.mxu0 0.0
  %v2290 = vand.u32 %v100, 4294901760
  %v2291 = vsub.f32 %v100, %v2290
  %2292 = vmatpush1.msra.mxu0 %v2291
  %2293 = vmatprep.subr.mxu0 0.0
  %v2294 = vand.u32 %v99, 4294901760
  %v2295 = vsub.f32 %v99, %v2294
  %2296 = vmatpush1.msra.mxu0 %v2295
  %2297 = vmatprep.subr.mxu0 0.0
  %v2298 = vand.u32 %v98, 4294901760
  %v2299 = vsub.f32 %v98, %v2298
  %2300 = vmatpush1.msra.mxu0 %v2299
  %2301 = vmatprep.subr.mxu0 0.0
  %v2302 = vand.u32 %v129, 4294901760
  %v2303 = vsub.f32 %v129, %v2302
  %2304 = vmatpush2.msra.mxu0 %v2303
  %2305 = vmatprep.subr.mxu0 0.0
  %v2306 = vand.u32 %v128, 4294901760
  %v2307 = vsub.f32 %v128, %v2306
  %2308 = vmatpush2.msra.mxu0 %v2307
  %2309 = vmatprep.subr.mxu0 0.0
  %v2310 = vand.u32 %v127, 4294901760
  %v2311 = vsub.f32 %v127, %v2310
  %2312 = vmatpush2.msra.mxu0 %v2311
  %2313 = vmatprep.subr.mxu0 0.0
  %v2314 = vand.u32 %v126, 4294901760
  %v2315 = vsub.f32 %v126, %v2314
  %2316 = vmatpush2.msra.mxu0 %v2315
  %2317 = vmatprep.subr.mxu0 0.0
  %v2318 = vand.u32 %v125, 4294901760
  %v2319 = vsub.f32 %v125, %v2318
  %2320 = vmatpush2.msra.mxu0 %v2319
  %2321 = vmatprep.subr.mxu0 0.0
  %v2322 = vand.u32 %v124, 4294901760
  %v2323 = vsub.f32 %v124, %v2322
  %2324 = vmatpush2.msra.mxu0 %v2323
  %2325 = vmatprep.subr.mxu0 0.0
  %v2326 = vand.u32 %v123, 4294901760
  %v2327 = vsub.f32 %v123, %v2326
  %2328 = vmatpush2.msra.mxu0 %v2327
  %2329 = vmatprep.subr.mxu0 0.0
  %v2330 = vand.u32 %v122, 4294901760
  %v2331 = vsub.f32 %v122, %v2330
  %2332 = vmatpush2.msra.mxu0 %v2331
  %2333 = vmatprep.subr.mxu0 0.0
  %v2334 = vand.u32 %v121, 4294901760
  %v2335 = vsub.f32 %v121, %v2334
  %2336 = vmatpush2.msra.mxu0 %v2335
  %2337 = vmatprep.subr.mxu0 0.0
  %v2338 = vand.u32 %v120, 4294901760
  %v2339 = vsub.f32 %v120, %v2338
  %2340 = vmatpush2.msra.mxu0 %v2339
  %2341 = vmatprep.subr.mxu0 0.0
  %v2342 = vand.u32 %v119, 4294901760
  %v2343 = vsub.f32 %v119, %v2342
  %2344 = vmatpush2.msra.mxu0 %v2343
  %2345 = vmatprep.subr.mxu0 0.0
  %v2346 = vand.u32 %v118, 4294901760
  %v2347 = vsub.f32 %v118, %v2346
  %2348 = vmatpush2.msra.mxu0 %v2347
  %2349 = vmatprep.subr.mxu0 0.0
  %v2350 = vand.u32 %v117, 4294901760
  %v2351 = vsub.f32 %v117, %v2350
  %2352 = vmatpush2.msra.mxu0 %v2351
  %2353 = vmatprep.subr.mxu0 0.0
  %v2354 = vand.u32 %v116, 4294901760
  %v2355 = vsub.f32 %v116, %v2354
  %2356 = vmatpush2.msra.mxu0 %v2355
  %2357 = vmatprep.subr.mxu0 0.0
  %v2358 = vand.u32 %v115, 4294901760
  %v2359 = vsub.f32 %v115, %v2358
  %2360 = vmatpush2.msra.mxu0 %v2359
  %2361 = vmatprep.subr.mxu0 0.0
  %v2362 = vand.u32 %v114, 4294901760
  %v2363 = vsub.f32 %v114, %v2362
  %2364 = vmatpush2.msra.mxu0 %v2363
  %v2365 = vand.u32 %v31, 4294901760
  %v2366 = vsub.f32 %v31, %v2365
  %2367 = vmatprep.mubr.f32.mxu0 %v2366
  %v2368 = vand.u32 %v30, 4294901760
  %v2369 = vsub.f32 %v30, %v2368
  %2370 = vmatmul.mubr.f32.gmra.mxu0 %v2369
  %v2371 = vpop.f32.mrf.mxu0
  %v2372 = vadd.f32 %v2234, %v2371
  %v2373 = vpop.f32.mrf.mxu0
  %2374 = vdwg.mxu0
  %2375 = vmatprep.subr.mxu0 0.0
  %v2376 = vand.u32 %v113, 4294901760
  %2377 = vmatpush1.msra.mxu0 %v2376
  %2378 = vmatprep.subr.mxu0 0.0
  %v2379 = vand.u32 %v112, 4294901760
  %2380 = vmatpush1.msra.mxu0 %v2379
  %2381 = vmatprep.subr.mxu0 0.0
  %v2382 = vand.u32 %v111, 4294901760
  %2383 = vmatpush1.msra.mxu0 %v2382
  %2384 = vmatprep.subr.mxu0 0.0
  %v2385 = vand.u32 %v110, 4294901760
  %2386 = vmatpush1.msra.mxu0 %v2385
  %2387 = vmatprep.subr.mxu0 0.0
  %v2388 = vand.u32 %v109, 4294901760
  %2389 = vmatpush1.msra.mxu0 %v2388
  %2390 = vmatprep.subr.mxu0 0.0
  %v2391 = vand.u32 %v108, 4294901760
  %2392 = vmatpush1.msra.mxu0 %v2391
  %2393 = vmatprep.subr.mxu0 0.0
  %v2394 = vand.u32 %v107, 4294901760
  %2395 = vmatpush1.msra.mxu0 %v2394
  %2396 = vmatprep.subr.mxu0 0.0
  %v2397 = vand.u32 %v106, 4294901760
  %2398 = vmatpush1.msra.mxu0 %v2397
  %2399 = vmatprep.subr.mxu0 0.0
  %v2400 = vand.u32 %v105, 4294901760
  %2401 = vmatpush1.msra.mxu0 %v2400
  %2402 = vmatprep.subr.mxu0 0.0
  %v2403 = vand.u32 %v104, 4294901760
  %2404 = vmatpush1.msra.mxu0 %v2403
  %2405 = vmatprep.subr.mxu0 0.0
  %v2406 = vand.u32 %v103, 4294901760
  %2407 = vmatpush1.msra.mxu0 %v2406
  %2408 = vmatprep.subr.mxu0 0.0
  %v2409 = vand.u32 %v102, 4294901760
  %2410 = vmatpush1.msra.mxu0 %v2409
  %2411 = vmatprep.subr.mxu0 0.0
  %v2412 = vand.u32 %v101, 4294901760
  %2413 = vmatpush1.msra.mxu0 %v2412
  %2414 = vmatprep.subr.mxu0 0.0
  %v2415 = vand.u32 %v100, 4294901760
  %2416 = vmatpush1.msra.mxu0 %v2415
  %2417 = vmatprep.subr.mxu0 0.0
  %v2418 = vand.u32 %v99, 4294901760
  %2419 = vmatpush1.msra.mxu0 %v2418
  %2420 = vmatprep.subr.mxu0 0.0
  %v2421 = vand.u32 %v98, 4294901760
  %2422 = vmatpush1.msra.mxu0 %v2421
  %2423 = vmatprep.subr.mxu0 0.0
  %v2424 = vand.u32 %v129, 4294901760
  %2425 = vmatpush2.msra.mxu0 %v2424
  %2426 = vmatprep.subr.mxu0 0.0
  %v2427 = vand.u32 %v128, 4294901760
  %2428 = vmatpush2.msra.mxu0 %v2427
  %2429 = vmatprep.subr.mxu0 0.0
  %v2430 = vand.u32 %v127, 4294901760
  %2431 = vmatpush2.msra.mxu0 %v2430
  %2432 = vmatprep.subr.mxu0 0.0
  %v2433 = vand.u32 %v126, 4294901760
  %2434 = vmatpush2.msra.mxu0 %v2433
  %2435 = vmatprep.subr.mxu0 0.0
  %v2436 = vand.u32 %v125, 4294901760
  %2437 = vmatpush2.msra.mxu0 %v2436
  %2438 = vmatprep.subr.mxu0 0.0
  %v2439 = vand.u32 %v124, 4294901760
  %2440 = vmatpush2.msra.mxu0 %v2439
  %2441 = vmatprep.subr.mxu0 0.0
  %v2442 = vand.u32 %v123, 4294901760
  %2443 = vmatpush2.msra.mxu0 %v2442
  %2444 = vmatprep.subr.mxu0 0.0
  %v2445 = vand.u32 %v122, 4294901760
  %2446 = vmatpush2.msra.mxu0 %v2445
  %2447 = vmatprep.subr.mxu0 0.0
  %v2448 = vand.u32 %v121, 4294901760
  %2449 = vmatpush2.msra.mxu0 %v2448
  %2450 = vmatprep.subr.mxu0 0.0
  %v2451 = vand.u32 %v120, 4294901760
  %2452 = vmatpush2.msra.mxu0 %v2451
  %2453 = vmatprep.subr.mxu0 0.0
  %v2454 = vand.u32 %v119, 4294901760
  %2455 = vmatpush2.msra.mxu0 %v2454
  %2456 = vmatprep.subr.mxu0 0.0
  %v2457 = vand.u32 %v118, 4294901760
  %2458 = vmatpush2.msra.mxu0 %v2457
  %2459 = vmatprep.subr.mxu0 0.0
  %v2460 = vand.u32 %v117, 4294901760
  %2461 = vmatpush2.msra.mxu0 %v2460
  %2462 = vmatprep.subr.mxu0 0.0
  %v2463 = vand.u32 %v116, 4294901760
  %2464 = vmatpush2.msra.mxu0 %v2463
  %2465 = vmatprep.subr.mxu0 0.0
  %v2466 = vand.u32 %v115, 4294901760
  %2467 = vmatpush2.msra.mxu0 %v2466
  %2468 = vmatprep.subr.mxu0 0.0
  %v2469 = vand.u32 %v114, 4294901760
  %2470 = vmatpush2.msra.mxu0 %v2469
  %v2471 = vand.u32 %v31, 4294901760
  %v2472 = vsub.f32 %v31, %v2471
  %v2473 = vand.u32 %v2472, 4294901760
  %2474 = vmatprep.mubr.f32.mxu0 %v2473
  %v2475 = vand.u32 %v30, 4294901760
  %v2476 = vsub.f32 %v30, %v2475
  %v2477 = vand.u32 %v2476, 4294901760
  %2478 = vmatmul.mubr.f32.gmra.mxu0 %v2477
  %v2479 = vpop.f32.mrf.mxu0
  %v2480 = vadd.f32 %v2372, %v2479
  %v2481 = vpop.f32.mrf.mxu0
  %2482 = vdwg.mxu0
  %2483 = vmatprep.subr.mxu0 0.0
  %v2484 = vand.u32 %v113, 4294901760
  %v2485 = vsub.f32 %v113, %v2484
  %v2486 = vand.u32 %v2485, 4294901760
  %2487 = vmatpush1.msra.mxu0 %v2486
  %2488 = vmatprep.subr.mxu0 0.0
  %v2489 = vand.u32 %v112, 4294901760
  %v2490 = vsub.f32 %v112, %v2489
  %v2491 = vand.u32 %v2490, 4294901760
  %2492 = vmatpush1.msra.mxu0 %v2491
  %2493 = vmatprep.subr.mxu0 0.0
  %v2494 = vand.u32 %v111, 4294901760
  %v2495 = vsub.f32 %v111, %v2494
  %v2496 = vand.u32 %v2495, 4294901760
  %2497 = vmatpush1.msra.mxu0 %v2496
  %2498 = vmatprep.subr.mxu0 0.0
  %v2499 = vand.u32 %v110, 4294901760
  %v2500 = vsub.f32 %v110, %v2499
  %v2501 = vand.u32 %v2500, 4294901760
  %2502 = vmatpush1.msra.mxu0 %v2501
  %2503 = vmatprep.subr.mxu0 0.0
  %v2504 = vand.u32 %v109, 4294901760
  %v2505 = vsub.f32 %v109, %v2504
  %v2506 = vand.u32 %v2505, 4294901760
  %2507 = vmatpush1.msra.mxu0 %v2506
  %2508 = vmatprep.subr.mxu0 0.0
  %v2509 = vand.u32 %v108, 4294901760
  %v2510 = vsub.f32 %v108, %v2509
  %v2511 = vand.u32 %v2510, 4294901760
  %2512 = vmatpush1.msra.mxu0 %v2511
  %2513 = vmatprep.subr.mxu0 0.0
  %v2514 = vand.u32 %v107, 4294901760
  %v2515 = vsub.f32 %v107, %v2514
  %v2516 = vand.u32 %v2515, 4294901760
  %2517 = vmatpush1.msra.mxu0 %v2516
  %2518 = vmatprep.subr.mxu0 0.0
  %v2519 = vand.u32 %v106, 4294901760
  %v2520 = vsub.f32 %v106, %v2519
  %v2521 = vand.u32 %v2520, 4294901760
  %2522 = vmatpush1.msra.mxu0 %v2521
  %2523 = vmatprep.subr.mxu0 0.0
  %v2524 = vand.u32 %v105, 4294901760
  %v2525 = vsub.f32 %v105, %v2524
  %v2526 = vand.u32 %v2525, 4294901760
  %2527 = vmatpush1.msra.mxu0 %v2526
  %2528 = vmatprep.subr.mxu0 0.0
  %v2529 = vand.u32 %v104, 4294901760
  %v2530 = vsub.f32 %v104, %v2529
  %v2531 = vand.u32 %v2530, 4294901760
  %2532 = vmatpush1.msra.mxu0 %v2531
  %2533 = vmatprep.subr.mxu0 0.0
  %v2534 = vand.u32 %v103, 4294901760
  %v2535 = vsub.f32 %v103, %v2534
  %v2536 = vand.u32 %v2535, 4294901760
  %2537 = vmatpush1.msra.mxu0 %v2536
  %2538 = vmatprep.subr.mxu0 0.0
  %v2539 = vand.u32 %v102, 4294901760
  %v2540 = vsub.f32 %v102, %v2539
  %v2541 = vand.u32 %v2540, 4294901760
  %2542 = vmatpush1.msra.mxu0 %v2541
  %2543 = vmatprep.subr.mxu0 0.0
  %v2544 = vand.u32 %v101, 4294901760
  %v2545 = vsub.f32 %v101, %v2544
  %v2546 = vand.u32 %v2545, 4294901760
  %2547 = vmatpush1.msra.mxu0 %v2546
  %2548 = vmatprep.subr.mxu0 0.0
  %v2549 = vand.u32 %v100, 4294901760
  %v2550 = vsub.f32 %v100, %v2549
  %v2551 = vand.u32 %v2550, 4294901760
  %2552 = vmatpush1.msra.mxu0 %v2551
  %2553 = vmatprep.subr.mxu0 0.0
  %v2554 = vand.u32 %v99, 4294901760
  %v2555 = vsub.f32 %v99, %v2554
  %v2556 = vand.u32 %v2555, 4294901760
  %2557 = vmatpush1.msra.mxu0 %v2556
  %2558 = vmatprep.subr.mxu0 0.0
  %v2559 = vand.u32 %v98, 4294901760
  %v2560 = vsub.f32 %v98, %v2559
  %v2561 = vand.u32 %v2560, 4294901760
  %2562 = vmatpush1.msra.mxu0 %v2561
  %2563 = vmatprep.subr.mxu0 0.0
  %v2564 = vand.u32 %v129, 4294901760
  %v2565 = vsub.f32 %v129, %v2564
  %v2566 = vand.u32 %v2565, 4294901760
  %2567 = vmatpush2.msra.mxu0 %v2566
  %2568 = vmatprep.subr.mxu0 0.0
  %v2569 = vand.u32 %v128, 4294901760
  %v2570 = vsub.f32 %v128, %v2569
  %v2571 = vand.u32 %v2570, 4294901760
  %2572 = vmatpush2.msra.mxu0 %v2571
  %2573 = vmatprep.subr.mxu0 0.0
  %v2574 = vand.u32 %v127, 4294901760
  %v2575 = vsub.f32 %v127, %v2574
  %v2576 = vand.u32 %v2575, 4294901760
  %2577 = vmatpush2.msra.mxu0 %v2576
  %2578 = vmatprep.subr.mxu0 0.0
  %v2579 = vand.u32 %v126, 4294901760
  %v2580 = vsub.f32 %v126, %v2579
  %v2581 = vand.u32 %v2580, 4294901760
  %2582 = vmatpush2.msra.mxu0 %v2581
  %2583 = vmatprep.subr.mxu0 0.0
  %v2584 = vand.u32 %v125, 4294901760
  %v2585 = vsub.f32 %v125, %v2584
  %v2586 = vand.u32 %v2585, 4294901760
  %2587 = vmatpush2.msra.mxu0 %v2586
  %2588 = vmatprep.subr.mxu0 0.0
  %v2589 = vand.u32 %v124, 4294901760
  %v2590 = vsub.f32 %v124, %v2589
  %v2591 = vand.u32 %v2590, 4294901760
  %2592 = vmatpush2.msra.mxu0 %v2591
  %2593 = vmatprep.subr.mxu0 0.0
  %v2594 = vand.u32 %v123, 4294901760
  %v2595 = vsub.f32 %v123, %v2594
  %v2596 = vand.u32 %v2595, 4294901760
  %2597 = vmatpush2.msra.mxu0 %v2596
  %2598 = vmatprep.subr.mxu0 0.0
  %v2599 = vand.u32 %v122, 4294901760
  %v2600 = vsub.f32 %v122, %v2599
  %v2601 = vand.u32 %v2600, 4294901760
  %2602 = vmatpush2.msra.mxu0 %v2601
  %2603 = vmatprep.subr.mxu0 0.0
  %v2604 = vand.u32 %v121, 4294901760
  %v2605 = vsub.f32 %v121, %v2604
  %v2606 = vand.u32 %v2605, 4294901760
  %2607 = vmatpush2.msra.mxu0 %v2606
  %2608 = vmatprep.subr.mxu0 0.0
  %v2609 = vand.u32 %v120, 4294901760
  %v2610 = vsub.f32 %v120, %v2609
  %v2611 = vand.u32 %v2610, 4294901760
  %2612 = vmatpush2.msra.mxu0 %v2611
  %2613 = vmatprep.subr.mxu0 0.0
  %v2614 = vand.u32 %v119, 4294901760
  %v2615 = vsub.f32 %v119, %v2614
  %v2616 = vand.u32 %v2615, 4294901760
  %2617 = vmatpush2.msra.mxu0 %v2616
  %2618 = vmatprep.subr.mxu0 0.0
  %v2619 = vand.u32 %v118, 4294901760
  %v2620 = vsub.f32 %v118, %v2619
  %v2621 = vand.u32 %v2620, 4294901760
  %2622 = vmatpush2.msra.mxu0 %v2621
  %2623 = vmatprep.subr.mxu0 0.0
  %v2624 = vand.u32 %v117, 4294901760
  %v2625 = vsub.f32 %v117, %v2624
  %v2626 = vand.u32 %v2625, 4294901760
  %2627 = vmatpush2.msra.mxu0 %v2626
  %2628 = vmatprep.subr.mxu0 0.0
  %v2629 = vand.u32 %v116, 4294901760
  %v2630 = vsub.f32 %v116, %v2629
  %v2631 = vand.u32 %v2630, 4294901760
  %2632 = vmatpush2.msra.mxu0 %v2631
  %2633 = vmatprep.subr.mxu0 0.0
  %v2634 = vand.u32 %v115, 4294901760
  %v2635 = vsub.f32 %v115, %v2634
  %v2636 = vand.u32 %v2635, 4294901760
  %2637 = vmatpush2.msra.mxu0 %v2636
  %2638 = vmatprep.subr.mxu0 0.0
  %v2639 = vand.u32 %v114, 4294901760
  %v2640 = vsub.f32 %v114, %v2639
  %v2641 = vand.u32 %v2640, 4294901760
  %2642 = vmatpush2.msra.mxu0 %v2641
  %v2643 = vand.u32 %v31, 4294901760
  %2644 = vmatprep.mubr.f32.mxu0 %v2643
  %v2645 = vand.u32 %v30, 4294901760
  %2646 = vmatmul.mubr.f32.gmra.mxu0 %v2645
  %v2647 = vpop.f32.mrf.mxu0
  %v2648 = vadd.f32 %v2480, %v2647
  %v2649 = vpop.f32.mrf.mxu0
  %2650 = vdwg.mxu0
  %2651 = vmatprep.subr.mxu0 0.0
  %v2652 = vand.u32 %v113, 4294901760
  %2653 = vmatpush1.msra.mxu0 %v2652
  %2654 = vmatprep.subr.mxu0 0.0
  %v2655 = vand.u32 %v112, 4294901760
  %2656 = vmatpush1.msra.mxu0 %v2655
  %2657 = vmatprep.subr.mxu0 0.0
  %v2658 = vand.u32 %v111, 4294901760
  %2659 = vmatpush1.msra.mxu0 %v2658
  %2660 = vmatprep.subr.mxu0 0.0
  %v2661 = vand.u32 %v110, 4294901760
  %2662 = vmatpush1.msra.mxu0 %v2661
  %2663 = vmatprep.subr.mxu0 0.0
  %v2664 = vand.u32 %v109, 4294901760
  %2665 = vmatpush1.msra.mxu0 %v2664
  %2666 = vmatprep.subr.mxu0 0.0
  %v2667 = vand.u32 %v108, 4294901760
  %2668 = vmatpush1.msra.mxu0 %v2667
  %2669 = vmatprep.subr.mxu0 0.0
  %v2670 = vand.u32 %v107, 4294901760
  %2671 = vmatpush1.msra.mxu0 %v2670
  %2672 = vmatprep.subr.mxu0 0.0
  %v2673 = vand.u32 %v106, 4294901760
  %2674 = vmatpush1.msra.mxu0 %v2673
  %2675 = vmatprep.subr.mxu0 0.0
  %v2676 = vand.u32 %v105, 4294901760
  %2677 = vmatpush1.msra.mxu0 %v2676
  %2678 = vmatprep.subr.mxu0 0.0
  %v2679 = vand.u32 %v104, 4294901760
  %2680 = vmatpush1.msra.mxu0 %v2679
  %2681 = vmatprep.subr.mxu0 0.0
  %v2682 = vand.u32 %v103, 4294901760
  %2683 = vmatpush1.msra.mxu0 %v2682
  %2684 = vmatprep.subr.mxu0 0.0
  %v2685 = vand.u32 %v102, 4294901760
  %2686 = vmatpush1.msra.mxu0 %v2685
  %2687 = vmatprep.subr.mxu0 0.0
  %v2688 = vand.u32 %v101, 4294901760
  %2689 = vmatpush1.msra.mxu0 %v2688
  %2690 = vmatprep.subr.mxu0 0.0
  %v2691 = vand.u32 %v100, 4294901760
  %2692 = vmatpush1.msra.mxu0 %v2691
  %2693 = vmatprep.subr.mxu0 0.0
  %v2694 = vand.u32 %v99, 4294901760
  %2695 = vmatpush1.msra.mxu0 %v2694
  %2696 = vmatprep.subr.mxu0 0.0
  %v2697 = vand.u32 %v98, 4294901760
  %2698 = vmatpush1.msra.mxu0 %v2697
  %2699 = vmatprep.subr.mxu0 0.0
  %v2700 = vand.u32 %v129, 4294901760
  %2701 = vmatpush2.msra.mxu0 %v2700
  %2702 = vmatprep.subr.mxu0 0.0
  %v2703 = vand.u32 %v128, 4294901760
  %2704 = vmatpush2.msra.mxu0 %v2703
  %2705 = vmatprep.subr.mxu0 0.0
  %v2706 = vand.u32 %v127, 4294901760
  %2707 = vmatpush2.msra.mxu0 %v2706
  %2708 = vmatprep.subr.mxu0 0.0
  %v2709 = vand.u32 %v126, 4294901760
  %2710 = vmatpush2.msra.mxu0 %v2709
  %2711 = vmatprep.subr.mxu0 0.0
  %v2712 = vand.u32 %v125, 4294901760
  %2713 = vmatpush2.msra.mxu0 %v2712
  %2714 = vmatprep.subr.mxu0 0.0
  %v2715 = vand.u32 %v124, 4294901760
  %2716 = vmatpush2.msra.mxu0 %v2715
  %2717 = vmatprep.subr.mxu0 0.0
  %v2718 = vand.u32 %v123, 4294901760
  %2719 = vmatpush2.msra.mxu0 %v2718
  %2720 = vmatprep.subr.mxu0 0.0
  %v2721 = vand.u32 %v122, 4294901760
  %2722 = vmatpush2.msra.mxu0 %v2721
  %2723 = vmatprep.subr.mxu0 0.0
  %v2724 = vand.u32 %v121, 4294901760
  %2725 = vmatpush2.msra.mxu0 %v2724
  %2726 = vmatprep.subr.mxu0 0.0
  %v2727 = vand.u32 %v120, 4294901760
  %2728 = vmatpush2.msra.mxu0 %v2727
  %2729 = vmatprep.subr.mxu0 0.0
  %v2730 = vand.u32 %v119, 4294901760
  %2731 = vmatpush2.msra.mxu0 %v2730
  %2732 = vmatprep.subr.mxu0 0.0
  %v2733 = vand.u32 %v118, 4294901760
  %2734 = vmatpush2.msra.mxu0 %v2733
  %2735 = vmatprep.subr.mxu0 0.0
  %v2736 = vand.u32 %v117, 4294901760
  %2737 = vmatpush2.msra.mxu0 %v2736
  %2738 = vmatprep.subr.mxu0 0.0
  %v2739 = vand.u32 %v116, 4294901760
  %2740 = vmatpush2.msra.mxu0 %v2739
  %2741 = vmatprep.subr.mxu0 0.0
  %v2742 = vand.u32 %v115, 4294901760
  %2743 = vmatpush2.msra.mxu0 %v2742
  %2744 = vmatprep.subr.mxu0 0.0
  %v2745 = vand.u32 %v114, 4294901760
  %2746 = vmatpush2.msra.mxu0 %v2745
  %v2747 = vand.u32 %v31, 4294901760
  %2748 = vmatprep.mubr.f32.mxu0 %v2747
  %v2749 = vand.u32 %v30, 4294901760
  %2750 = vmatmul.mubr.f32.gmra.mxu0 %v2749
  %v2751 = vpop.f32.mrf.mxu0
  %v2752 = vadd.f32 %v2648, %v2751
  %v2753 = vpop.f32.mrf.mxu0
  %2754 = vdwg.mxu0
  %2755 = vmatprep.subr.mxu0 0.0
  %v2756 = vand.u32 %v145, 4294901760
  %2757 = vmatpush1.msra.mxu0 %v2756
  %2758 = vmatprep.subr.mxu0 0.0
  %v2759 = vand.u32 %v144, 4294901760
  %2760 = vmatpush1.msra.mxu0 %v2759
  %2761 = vmatprep.subr.mxu0 0.0
  %v2762 = vand.u32 %v143, 4294901760
  %2763 = vmatpush1.msra.mxu0 %v2762
  %2764 = vmatprep.subr.mxu0 0.0
  %v2765 = vand.u32 %v142, 4294901760
  %2766 = vmatpush1.msra.mxu0 %v2765
  %2767 = vmatprep.subr.mxu0 0.0
  %v2768 = vand.u32 %v141, 4294901760
  %2769 = vmatpush1.msra.mxu0 %v2768
  %2770 = vmatprep.subr.mxu0 0.0
  %v2771 = vand.u32 %v140, 4294901760
  %2772 = vmatpush1.msra.mxu0 %v2771
  %2773 = vmatprep.subr.mxu0 0.0
  %v2774 = vand.u32 %v139, 4294901760
  %2775 = vmatpush1.msra.mxu0 %v2774
  %2776 = vmatprep.subr.mxu0 0.0
  %v2777 = vand.u32 %v138, 4294901760
  %2778 = vmatpush1.msra.mxu0 %v2777
  %2779 = vmatprep.subr.mxu0 0.0
  %v2780 = vand.u32 %v137, 4294901760
  %2781 = vmatpush1.msra.mxu0 %v2780
  %2782 = vmatprep.subr.mxu0 0.0
  %v2783 = vand.u32 %v136, 4294901760
  %2784 = vmatpush1.msra.mxu0 %v2783
  %2785 = vmatprep.subr.mxu0 0.0
  %v2786 = vand.u32 %v135, 4294901760
  %2787 = vmatpush1.msra.mxu0 %v2786
  %2788 = vmatprep.subr.mxu0 0.0
  %v2789 = vand.u32 %v134, 4294901760
  %2790 = vmatpush1.msra.mxu0 %v2789
  %2791 = vmatprep.subr.mxu0 0.0
  %v2792 = vand.u32 %v133, 4294901760
  %2793 = vmatpush1.msra.mxu0 %v2792
  %2794 = vmatprep.subr.mxu0 0.0
  %v2795 = vand.u32 %v132, 4294901760
  %2796 = vmatpush1.msra.mxu0 %v2795
  %2797 = vmatprep.subr.mxu0 0.0
  %v2798 = vand.u32 %v131, 4294901760
  %2799 = vmatpush1.msra.mxu0 %v2798
  %2800 = vmatprep.subr.mxu0 0.0
  %v2801 = vand.u32 %v130, 4294901760
  %2802 = vmatpush1.msra.mxu0 %v2801
  %2803 = vmatprep.subr.mxu0 0.0
  %v2804 = vand.u32 %v161, 4294901760
  %2805 = vmatpush2.msra.mxu0 %v2804
  %2806 = vmatprep.subr.mxu0 0.0
  %v2807 = vand.u32 %v160, 4294901760
  %2808 = vmatpush2.msra.mxu0 %v2807
  %2809 = vmatprep.subr.mxu0 0.0
  %v2810 = vand.u32 %v159, 4294901760
  %2811 = vmatpush2.msra.mxu0 %v2810
  %2812 = vmatprep.subr.mxu0 0.0
  %v2813 = vand.u32 %v158, 4294901760
  %2814 = vmatpush2.msra.mxu0 %v2813
  %2815 = vmatprep.subr.mxu0 0.0
  %v2816 = vand.u32 %v157, 4294901760
  %2817 = vmatpush2.msra.mxu0 %v2816
  %2818 = vmatprep.subr.mxu0 0.0
  %v2819 = vand.u32 %v156, 4294901760
  %2820 = vmatpush2.msra.mxu0 %v2819
  %2821 = vmatprep.subr.mxu0 0.0
  %v2822 = vand.u32 %v155, 4294901760
  %2823 = vmatpush2.msra.mxu0 %v2822
  %2824 = vmatprep.subr.mxu0 0.0
  %v2825 = vand.u32 %v154, 4294901760
  %2826 = vmatpush2.msra.mxu0 %v2825
  %2827 = vmatprep.subr.mxu0 0.0
  %v2828 = vand.u32 %v153, 4294901760
  %2829 = vmatpush2.msra.mxu0 %v2828
  %2830 = vmatprep.subr.mxu0 0.0
  %v2831 = vand.u32 %v152, 4294901760
  %2832 = vmatpush2.msra.mxu0 %v2831
  %2833 = vmatprep.subr.mxu0 0.0
  %v2834 = vand.u32 %v151, 4294901760
  %2835 = vmatpush2.msra.mxu0 %v2834
  %2836 = vmatprep.subr.mxu0 0.0
  %v2837 = vand.u32 %v150, 4294901760
  %2838 = vmatpush2.msra.mxu0 %v2837
  %2839 = vmatprep.subr.mxu0 0.0
  %v2840 = vand.u32 %v149, 4294901760
  %2841 = vmatpush2.msra.mxu0 %v2840
  %2842 = vmatprep.subr.mxu0 0.0
  %v2843 = vand.u32 %v148, 4294901760
  %2844 = vmatpush2.msra.mxu0 %v2843
  %2845 = vmatprep.subr.mxu0 0.0
  %v2846 = vand.u32 %v147, 4294901760
  %2847 = vmatpush2.msra.mxu0 %v2846
  %2848 = vmatprep.subr.mxu0 0.0
  %v2849 = vand.u32 %v146, 4294901760
  %2850 = vmatpush2.msra.mxu0 %v2849
  %v2851 = vand.u32 %v33, 4294901760
  %v2852 = vsub.f32 %v33, %v2851
  %v2853 = vand.u32 %v2852, 4294901760
  %v2854 = vsub.f32 %v2852, %v2853
  %v2855 = vand.u32 %v2854, 4294901760
  %2856 = vmatprep.mubr.f32.mxu0 %v2855
  %v2857 = vand.u32 %v32, 4294901760
  %v2858 = vsub.f32 %v32, %v2857
  %v2859 = vand.u32 %v2858, 4294901760
  %v2860 = vsub.f32 %v2858, %v2859
  %v2861 = vand.u32 %v2860, 4294901760
  %2862 = vmatmul.mubr.f32.gmra.mxu0 %v2861
  %v2863 = vpop.f32.mrf.mxu0
  %v2864 = vadd.f32 %v2752, %v2863
  %v2865 = vpop.f32.mrf.mxu0
  %2866 = vdwg.mxu0
  %2867 = vmatprep.subr.mxu0 0.0
  %v2868 = vand.u32 %v145, 4294901760
  %v2869 = vsub.f32 %v145, %v2868
  %v2870 = vand.u32 %v2869, 4294901760
  %v2871 = vsub.f32 %v2869, %v2870
  %v2872 = vand.u32 %v2871, 4294901760
  %2873 = vmatpush1.msra.mxu0 %v2872
  %2874 = vmatprep.subr.mxu0 0.0
  %v2875 = vand.u32 %v144, 4294901760
  %v2876 = vsub.f32 %v144, %v2875
  %v2877 = vand.u32 %v2876, 4294901760
  %v2878 = vsub.f32 %v2876, %v2877
  %v2879 = vand.u32 %v2878, 4294901760
  %2880 = vmatpush1.msra.mxu0 %v2879
  %2881 = vmatprep.subr.mxu0 0.0
  %v2882 = vand.u32 %v143, 4294901760
  %v2883 = vsub.f32 %v143, %v2882
  %v2884 = vand.u32 %v2883, 4294901760
  %v2885 = vsub.f32 %v2883, %v2884
  %v2886 = vand.u32 %v2885, 4294901760
  %2887 = vmatpush1.msra.mxu0 %v2886
  %2888 = vmatprep.subr.mxu0 0.0
  %v2889 = vand.u32 %v142, 4294901760
  %v2890 = vsub.f32 %v142, %v2889
  %v2891 = vand.u32 %v2890, 4294901760
  %v2892 = vsub.f32 %v2890, %v2891
  %v2893 = vand.u32 %v2892, 4294901760
  %2894 = vmatpush1.msra.mxu0 %v2893
  %2895 = vmatprep.subr.mxu0 0.0
  %v2896 = vand.u32 %v141, 4294901760
  %v2897 = vsub.f32 %v141, %v2896
  %v2898 = vand.u32 %v2897, 4294901760
  %v2899 = vsub.f32 %v2897, %v2898
  %v2900 = vand.u32 %v2899, 4294901760
  %2901 = vmatpush1.msra.mxu0 %v2900
  %2902 = vmatprep.subr.mxu0 0.0
  %v2903 = vand.u32 %v140, 4294901760
  %v2904 = vsub.f32 %v140, %v2903
  %v2905 = vand.u32 %v2904, 4294901760
  %v2906 = vsub.f32 %v2904, %v2905
  %v2907 = vand.u32 %v2906, 4294901760
  %2908 = vmatpush1.msra.mxu0 %v2907
  %2909 = vmatprep.subr.mxu0 0.0
  %v2910 = vand.u32 %v139, 4294901760
  %v2911 = vsub.f32 %v139, %v2910
  %v2912 = vand.u32 %v2911, 4294901760
  %v2913 = vsub.f32 %v2911, %v2912
  %v2914 = vand.u32 %v2913, 4294901760
  %2915 = vmatpush1.msra.mxu0 %v2914
  %2916 = vmatprep.subr.mxu0 0.0
  %v2917 = vand.u32 %v138, 4294901760
  %v2918 = vsub.f32 %v138, %v2917
  %v2919 = vand.u32 %v2918, 4294901760
  %v2920 = vsub.f32 %v2918, %v2919
  %v2921 = vand.u32 %v2920, 4294901760
  %2922 = vmatpush1.msra.mxu0 %v2921
  %2923 = vmatprep.subr.mxu0 0.0
  %v2924 = vand.u32 %v137, 4294901760
  %v2925 = vsub.f32 %v137, %v2924
  %v2926 = vand.u32 %v2925, 4294901760
  %v2927 = vsub.f32 %v2925, %v2926
  %v2928 = vand.u32 %v2927, 4294901760
  %2929 = vmatpush1.msra.mxu0 %v2928
  %2930 = vmatprep.subr.mxu0 0.0
  %v2931 = vand.u32 %v136, 4294901760
  %v2932 = vsub.f32 %v136, %v2931
  %v2933 = vand.u32 %v2932, 4294901760
  %v2934 = vsub.f32 %v2932, %v2933
  %v2935 = vand.u32 %v2934, 4294901760
  %2936 = vmatpush1.msra.mxu0 %v2935
  %2937 = vmatprep.subr.mxu0 0.0
  %v2938 = vand.u32 %v135, 4294901760
  %v2939 = vsub.f32 %v135, %v2938
  %v2940 = vand.u32 %v2939, 4294901760
  %v2941 = vsub.f32 %v2939, %v2940
  %v2942 = vand.u32 %v2941, 4294901760
  %2943 = vmatpush1.msra.mxu0 %v2942
  %2944 = vmatprep.subr.mxu0 0.0
  %v2945 = vand.u32 %v134, 4294901760
  %v2946 = vsub.f32 %v134, %v2945
  %v2947 = vand.u32 %v2946, 4294901760
  %v2948 = vsub.f32 %v2946, %v2947
  %v2949 = vand.u32 %v2948, 4294901760
  %2950 = vmatpush1.msra.mxu0 %v2949
  %2951 = vmatprep.subr.mxu0 0.0
  %v2952 = vand.u32 %v133, 4294901760
  %v2953 = vsub.f32 %v133, %v2952
  %v2954 = vand.u32 %v2953, 4294901760
  %v2955 = vsub.f32 %v2953, %v2954
  %v2956 = vand.u32 %v2955, 4294901760
  %2957 = vmatpush1.msra.mxu0 %v2956
  %2958 = vmatprep.subr.mxu0 0.0
  %v2959 = vand.u32 %v132, 4294901760
  %v2960 = vsub.f32 %v132, %v2959
  %v2961 = vand.u32 %v2960, 4294901760
  %v2962 = vsub.f32 %v2960, %v2961
  %v2963 = vand.u32 %v2962, 4294901760
  %2964 = vmatpush1.msra.mxu0 %v2963
  %2965 = vmatprep.subr.mxu0 0.0
  %v2966 = vand.u32 %v131, 4294901760
  %v2967 = vsub.f32 %v131, %v2966
  %v2968 = vand.u32 %v2967, 4294901760
  %v2969 = vsub.f32 %v2967, %v2968
  %v2970 = vand.u32 %v2969, 4294901760
  %2971 = vmatpush1.msra.mxu0 %v2970
  %2972 = vmatprep.subr.mxu0 0.0
  %v2973 = vand.u32 %v130, 4294901760
  %v2974 = vsub.f32 %v130, %v2973
  %v2975 = vand.u32 %v2974, 4294901760
  %v2976 = vsub.f32 %v2974, %v2975
  %v2977 = vand.u32 %v2976, 4294901760
  %2978 = vmatpush1.msra.mxu0 %v2977
  %2979 = vmatprep.subr.mxu0 0.0
  %v2980 = vand.u32 %v161, 4294901760
  %v2981 = vsub.f32 %v161, %v2980
  %v2982 = vand.u32 %v2981, 4294901760
  %v2983 = vsub.f32 %v2981, %v2982
  %v2984 = vand.u32 %v2983, 4294901760
  %2985 = vmatpush2.msra.mxu0 %v2984
  %2986 = vmatprep.subr.mxu0 0.0
  %v2987 = vand.u32 %v160, 4294901760
  %v2988 = vsub.f32 %v160, %v2987
  %v2989 = vand.u32 %v2988, 4294901760
  %v2990 = vsub.f32 %v2988, %v2989
  %v2991 = vand.u32 %v2990, 4294901760
  %2992 = vmatpush2.msra.mxu0 %v2991
  %2993 = vmatprep.subr.mxu0 0.0
  %v2994 = vand.u32 %v159, 4294901760
  %v2995 = vsub.f32 %v159, %v2994
  %v2996 = vand.u32 %v2995, 4294901760
  %v2997 = vsub.f32 %v2995, %v2996
  %v2998 = vand.u32 %v2997, 4294901760
  %2999 = vmatpush2.msra.mxu0 %v2998
  %3000 = vmatprep.subr.mxu0 0.0
  %v3001 = vand.u32 %v158, 4294901760
  %v3002 = vsub.f32 %v158, %v3001
  %v3003 = vand.u32 %v3002, 4294901760
  %v3004 = vsub.f32 %v3002, %v3003
  %v3005 = vand.u32 %v3004, 4294901760
  %3006 = vmatpush2.msra.mxu0 %v3005
  %3007 = vmatprep.subr.mxu0 0.0
  %v3008 = vand.u32 %v157, 4294901760
  %v3009 = vsub.f32 %v157, %v3008
  %v3010 = vand.u32 %v3009, 4294901760
  %v3011 = vsub.f32 %v3009, %v3010
  %v3012 = vand.u32 %v3011, 4294901760
  %3013 = vmatpush2.msra.mxu0 %v3012
  %3014 = vmatprep.subr.mxu0 0.0
  %v3015 = vand.u32 %v156, 4294901760
  %v3016 = vsub.f32 %v156, %v3015
  %v3017 = vand.u32 %v3016, 4294901760
  %v3018 = vsub.f32 %v3016, %v3017
  %v3019 = vand.u32 %v3018, 4294901760
  %3020 = vmatpush2.msra.mxu0 %v3019
  %3021 = vmatprep.subr.mxu0 0.0
  %v3022 = vand.u32 %v155, 4294901760
  %v3023 = vsub.f32 %v155, %v3022
  %v3024 = vand.u32 %v3023, 4294901760
  %v3025 = vsub.f32 %v3023, %v3024
  %v3026 = vand.u32 %v3025, 4294901760
  %3027 = vmatpush2.msra.mxu0 %v3026
  %3028 = vmatprep.subr.mxu0 0.0
  %v3029 = vand.u32 %v154, 4294901760
  %v3030 = vsub.f32 %v154, %v3029
  %v3031 = vand.u32 %v3030, 4294901760
  %v3032 = vsub.f32 %v3030, %v3031
  %v3033 = vand.u32 %v3032, 4294901760
  %3034 = vmatpush2.msra.mxu0 %v3033
  %3035 = vmatprep.subr.mxu0 0.0
  %v3036 = vand.u32 %v153, 4294901760
  %v3037 = vsub.f32 %v153, %v3036
  %v3038 = vand.u32 %v3037, 4294901760
  %v3039 = vsub.f32 %v3037, %v3038
  %v3040 = vand.u32 %v3039, 4294901760
  %3041 = vmatpush2.msra.mxu0 %v3040
  %3042 = vmatprep.subr.mxu0 0.0
  %v3043 = vand.u32 %v152, 4294901760
  %v3044 = vsub.f32 %v152, %v3043
  %v3045 = vand.u32 %v3044, 4294901760
  %v3046 = vsub.f32 %v3044, %v3045
  %v3047 = vand.u32 %v3046, 4294901760
  %3048 = vmatpush2.msra.mxu0 %v3047
  %3049 = vmatprep.subr.mxu0 0.0
  %v3050 = vand.u32 %v151, 4294901760
  %v3051 = vsub.f32 %v151, %v3050
  %v3052 = vand.u32 %v3051, 4294901760
  %v3053 = vsub.f32 %v3051, %v3052
  %v3054 = vand.u32 %v3053, 4294901760
  %3055 = vmatpush2.msra.mxu0 %v3054
  %3056 = vmatprep.subr.mxu0 0.0
  %v3057 = vand.u32 %v150, 4294901760
  %v3058 = vsub.f32 %v150, %v3057
  %v3059 = vand.u32 %v3058, 4294901760
  %v3060 = vsub.f32 %v3058, %v3059
  %v3061 = vand.u32 %v3060, 4294901760
  %3062 = vmatpush2.msra.mxu0 %v3061
  %3063 = vmatprep.subr.mxu0 0.0
  %v3064 = vand.u32 %v149, 4294901760
  %v3065 = vsub.f32 %v149, %v3064
  %v3066 = vand.u32 %v3065, 4294901760
  %v3067 = vsub.f32 %v3065, %v3066
  %v3068 = vand.u32 %v3067, 4294901760
  %3069 = vmatpush2.msra.mxu0 %v3068
  %3070 = vmatprep.subr.mxu0 0.0
  %v3071 = vand.u32 %v148, 4294901760
  %v3072 = vsub.f32 %v148, %v3071
  %v3073 = vand.u32 %v3072, 4294901760
  %v3074 = vsub.f32 %v3072, %v3073
  %v3075 = vand.u32 %v3074, 4294901760
  %3076 = vmatpush2.msra.mxu0 %v3075
  %3077 = vmatprep.subr.mxu0 0.0
  %v3078 = vand.u32 %v147, 4294901760
  %v3079 = vsub.f32 %v147, %v3078
  %v3080 = vand.u32 %v3079, 4294901760
  %v3081 = vsub.f32 %v3079, %v3080
  %v3082 = vand.u32 %v3081, 4294901760
  %3083 = vmatpush2.msra.mxu0 %v3082
  %3084 = vmatprep.subr.mxu0 0.0
  %v3085 = vand.u32 %v146, 4294901760
  %v3086 = vsub.f32 %v146, %v3085
  %v3087 = vand.u32 %v3086, 4294901760
  %v3088 = vsub.f32 %v3086, %v3087
  %v3089 = vand.u32 %v3088, 4294901760
  %3090 = vmatpush2.msra.mxu0 %v3089
  %v3091 = vand.u32 %v33, 4294901760
  %3092 = vmatprep.mubr.f32.mxu0 %v3091
  %v3093 = vand.u32 %v32, 4294901760
  %3094 = vmatmul.mubr.f32.gmra.mxu0 %v3093
  %v3095 = vpop.f32.mrf.mxu0
  %v3096 = vadd.f32 %v2864, %v3095
  %v3097 = vpop.f32.mrf.mxu0
  %3098 = vdwg.mxu0
  %3099 = vmatprep.subr.mxu0 0.0
  %v3100 = vand.u32 %v145, 4294901760
  %v3101 = vsub.f32 %v145, %v3100
  %3102 = vmatpush1.msra.mxu0 %v3101
  %3103 = vmatprep.subr.mxu0 0.0
  %v3104 = vand.u32 %v144, 4294901760
  %v3105 = vsub.f32 %v144, %v3104
  %3106 = vmatpush1.msra.mxu0 %v3105
  %3107 = vmatprep.subr.mxu0 0.0
  %v3108 = vand.u32 %v143, 4294901760
  %v3109 = vsub.f32 %v143, %v3108
  %3110 = vmatpush1.msra.mxu0 %v3109
  %3111 = vmatprep.subr.mxu0 0.0
  %v3112 = vand.u32 %v142, 4294901760
  %v3113 = vsub.f32 %v142, %v3112
  %3114 = vmatpush1.msra.mxu0 %v3113
  %3115 = vmatprep.subr.mxu0 0.0
  %v3116 = vand.u32 %v141, 4294901760
  %v3117 = vsub.f32 %v141, %v3116
  %3118 = vmatpush1.msra.mxu0 %v3117
  %3119 = vmatprep.subr.mxu0 0.0
  %v3120 = vand.u32 %v140, 4294901760
  %v3121 = vsub.f32 %v140, %v3120
  %3122 = vmatpush1.msra.mxu0 %v3121
  %3123 = vmatprep.subr.mxu0 0.0
  %v3124 = vand.u32 %v139, 4294901760
  %v3125 = vsub.f32 %v139, %v3124
  %3126 = vmatpush1.msra.mxu0 %v3125
  %3127 = vmatprep.subr.mxu0 0.0
  %v3128 = vand.u32 %v138, 4294901760
  %v3129 = vsub.f32 %v138, %v3128
  %3130 = vmatpush1.msra.mxu0 %v3129
  %3131 = vmatprep.subr.mxu0 0.0
  %v3132 = vand.u32 %v137, 4294901760
  %v3133 = vsub.f32 %v137, %v3132
  %3134 = vmatpush1.msra.mxu0 %v3133
  %3135 = vmatprep.subr.mxu0 0.0
  %v3136 = vand.u32 %v136, 4294901760
  %v3137 = vsub.f32 %v136, %v3136
  %3138 = vmatpush1.msra.mxu0 %v3137
  %3139 = vmatprep.subr.mxu0 0.0
  %v3140 = vand.u32 %v135, 4294901760
  %v3141 = vsub.f32 %v135, %v3140
  %3142 = vmatpush1.msra.mxu0 %v3141
  %3143 = vmatprep.subr.mxu0 0.0
  %v3144 = vand.u32 %v134, 4294901760
  %v3145 = vsub.f32 %v134, %v3144
  %3146 = vmatpush1.msra.mxu0 %v3145
  %3147 = vmatprep.subr.mxu0 0.0
  %v3148 = vand.u32 %v133, 4294901760
  %v3149 = vsub.f32 %v133, %v3148
  %3150 = vmatpush1.msra.mxu0 %v3149
  %3151 = vmatprep.subr.mxu0 0.0
  %v3152 = vand.u32 %v132, 4294901760
  %v3153 = vsub.f32 %v132, %v3152
  %3154 = vmatpush1.msra.mxu0 %v3153
  %3155 = vmatprep.subr.mxu0 0.0
  %v3156 = vand.u32 %v131, 4294901760
  %v3157 = vsub.f32 %v131, %v3156
  %3158 = vmatpush1.msra.mxu0 %v3157
  %3159 = vmatprep.subr.mxu0 0.0
  %v3160 = vand.u32 %v130, 4294901760
  %v3161 = vsub.f32 %v130, %v3160
  %3162 = vmatpush1.msra.mxu0 %v3161
  %3163 = vmatprep.subr.mxu0 0.0
  %v3164 = vand.u32 %v161, 4294901760
  %v3165 = vsub.f32 %v161, %v3164
  %3166 = vmatpush2.msra.mxu0 %v3165
  %3167 = vmatprep.subr.mxu0 0.0
  %v3168 = vand.u32 %v160, 4294901760
  %v3169 = vsub.f32 %v160, %v3168
  %3170 = vmatpush2.msra.mxu0 %v3169
  %3171 = vmatprep.subr.mxu0 0.0
  %v3172 = vand.u32 %v159, 4294901760
  %v3173 = vsub.f32 %v159, %v3172
  %3174 = vmatpush2.msra.mxu0 %v3173
  %3175 = vmatprep.subr.mxu0 0.0
  %v3176 = vand.u32 %v158, 4294901760
  %v3177 = vsub.f32 %v158, %v3176
  %3178 = vmatpush2.msra.mxu0 %v3177
  %3179 = vmatprep.subr.mxu0 0.0
  %v3180 = vand.u32 %v157, 4294901760
  %v3181 = vsub.f32 %v157, %v3180
  %3182 = vmatpush2.msra.mxu0 %v3181
  %3183 = vmatprep.subr.mxu0 0.0
  %v3184 = vand.u32 %v156, 4294901760
  %v3185 = vsub.f32 %v156, %v3184
  %3186 = vmatpush2.msra.mxu0 %v3185
  %3187 = vmatprep.subr.mxu0 0.0
  %v3188 = vand.u32 %v155, 4294901760
  %v3189 = vsub.f32 %v155, %v3188
  %3190 = vmatpush2.msra.mxu0 %v3189
  %3191 = vmatprep.subr.mxu0 0.0
  %v3192 = vand.u32 %v154, 4294901760
  %v3193 = vsub.f32 %v154, %v3192
  %3194 = vmatpush2.msra.mxu0 %v3193
  %3195 = vmatprep.subr.mxu0 0.0
  %v3196 = vand.u32 %v153, 4294901760
  %v3197 = vsub.f32 %v153, %v3196
  %3198 = vmatpush2.msra.mxu0 %v3197
  %3199 = vmatprep.subr.mxu0 0.0
  %v3200 = vand.u32 %v152, 4294901760
  %v3201 = vsub.f32 %v152, %v3200
  %3202 = vmatpush2.msra.mxu0 %v3201
  %3203 = vmatprep.subr.mxu0 0.0
  %v3204 = vand.u32 %v151, 4294901760
  %v3205 = vsub.f32 %v151, %v3204
  %3206 = vmatpush2.msra.mxu0 %v3205
  %3207 = vmatprep.subr.mxu0 0.0
  %v3208 = vand.u32 %v150, 4294901760
  %v3209 = vsub.f32 %v150, %v3208
  %3210 = vmatpush2.msra.mxu0 %v3209
  %3211 = vmatprep.subr.mxu0 0.0
  %v3212 = vand.u32 %v149, 4294901760
  %v3213 = vsub.f32 %v149, %v3212
  %3214 = vmatpush2.msra.mxu0 %v3213
  %3215 = vmatprep.subr.mxu0 0.0
  %v3216 = vand.u32 %v148, 4294901760
  %v3217 = vsub.f32 %v148, %v3216
  %3218 = vmatpush2.msra.mxu0 %v3217
  %3219 = vmatprep.subr.mxu0 0.0
  %v3220 = vand.u32 %v147, 4294901760
  %v3221 = vsub.f32 %v147, %v3220
  %3222 = vmatpush2.msra.mxu0 %v3221
  %3223 = vmatprep.subr.mxu0 0.0
  %v3224 = vand.u32 %v146, 4294901760
  %v3225 = vsub.f32 %v146, %v3224
  %3226 = vmatpush2.msra.mxu0 %v3225
  %v3227 = vand.u32 %v33, 4294901760
  %v3228 = vsub.f32 %v33, %v3227
  %3229 = vmatprep.mubr.f32.mxu0 %v3228
  %v3230 = vand.u32 %v32, 4294901760
  %v3231 = vsub.f32 %v32, %v3230
  %3232 = vmatmul.mubr.f32.gmra.mxu0 %v3231
  %v3233 = vpop.f32.mrf.mxu0
  %v3234 = vadd.f32 %v3096, %v3233
  %v3235 = vpop.f32.mrf.mxu0
  %3236 = vdwg.mxu0
  %3237 = vmatprep.subr.mxu0 0.0
  %v3238 = vand.u32 %v145, 4294901760
  %3239 = vmatpush1.msra.mxu0 %v3238
  %3240 = vmatprep.subr.mxu0 0.0
  %v3241 = vand.u32 %v144, 4294901760
  %3242 = vmatpush1.msra.mxu0 %v3241
  %3243 = vmatprep.subr.mxu0 0.0
  %v3244 = vand.u32 %v143, 4294901760
  %3245 = vmatpush1.msra.mxu0 %v3244
  %3246 = vmatprep.subr.mxu0 0.0
  %v3247 = vand.u32 %v142, 4294901760
  %3248 = vmatpush1.msra.mxu0 %v3247
  %3249 = vmatprep.subr.mxu0 0.0
  %v3250 = vand.u32 %v141, 4294901760
  %3251 = vmatpush1.msra.mxu0 %v3250
  %3252 = vmatprep.subr.mxu0 0.0
  %v3253 = vand.u32 %v140, 4294901760
  %3254 = vmatpush1.msra.mxu0 %v3253
  %3255 = vmatprep.subr.mxu0 0.0
  %v3256 = vand.u32 %v139, 4294901760
  %3257 = vmatpush1.msra.mxu0 %v3256
  %3258 = vmatprep.subr.mxu0 0.0
  %v3259 = vand.u32 %v138, 4294901760
  %3260 = vmatpush1.msra.mxu0 %v3259
  %3261 = vmatprep.subr.mxu0 0.0
  %v3262 = vand.u32 %v137, 4294901760
  %3263 = vmatpush1.msra.mxu0 %v3262
  %3264 = vmatprep.subr.mxu0 0.0
  %v3265 = vand.u32 %v136, 4294901760
  %3266 = vmatpush1.msra.mxu0 %v3265
  %3267 = vmatprep.subr.mxu0 0.0
  %v3268 = vand.u32 %v135, 4294901760
  %3269 = vmatpush1.msra.mxu0 %v3268
  %3270 = vmatprep.subr.mxu0 0.0
  %v3271 = vand.u32 %v134, 4294901760
  %3272 = vmatpush1.msra.mxu0 %v3271
  %3273 = vmatprep.subr.mxu0 0.0
  %v3274 = vand.u32 %v133, 4294901760
  %3275 = vmatpush1.msra.mxu0 %v3274
  %3276 = vmatprep.subr.mxu0 0.0
  %v3277 = vand.u32 %v132, 4294901760
  %3278 = vmatpush1.msra.mxu0 %v3277
  %3279 = vmatprep.subr.mxu0 0.0
  %v3280 = vand.u32 %v131, 4294901760
  %3281 = vmatpush1.msra.mxu0 %v3280
  %3282 = vmatprep.subr.mxu0 0.0
  %v3283 = vand.u32 %v130, 4294901760
  %3284 = vmatpush1.msra.mxu0 %v3283
  %3285 = vmatprep.subr.mxu0 0.0
  %v3286 = vand.u32 %v161, 4294901760
  %3287 = vmatpush2.msra.mxu0 %v3286
  %3288 = vmatprep.subr.mxu0 0.0
  %v3289 = vand.u32 %v160, 4294901760
  %3290 = vmatpush2.msra.mxu0 %v3289
  %3291 = vmatprep.subr.mxu0 0.0
  %v3292 = vand.u32 %v159, 4294901760
  %3293 = vmatpush2.msra.mxu0 %v3292
  %3294 = vmatprep.subr.mxu0 0.0
  %v3295 = vand.u32 %v158, 4294901760
  %3296 = vmatpush2.msra.mxu0 %v3295
  %3297 = vmatprep.subr.mxu0 0.0
  %v3298 = vand.u32 %v157, 4294901760
  %3299 = vmatpush2.msra.mxu0 %v3298
  %3300 = vmatprep.subr.mxu0 0.0
  %v3301 = vand.u32 %v156, 4294901760
  %3302 = vmatpush2.msra.mxu0 %v3301
  %3303 = vmatprep.subr.mxu0 0.0
  %v3304 = vand.u32 %v155, 4294901760
  %3305 = vmatpush2.msra.mxu0 %v3304
  %3306 = vmatprep.subr.mxu0 0.0
  %v3307 = vand.u32 %v154, 4294901760
  %3308 = vmatpush2.msra.mxu0 %v3307
  %3309 = vmatprep.subr.mxu0 0.0
  %v3310 = vand.u32 %v153, 4294901760
  %3311 = vmatpush2.msra.mxu0 %v3310
  %3312 = vmatprep.subr.mxu0 0.0
  %v3313 = vand.u32 %v152, 4294901760
  %3314 = vmatpush2.msra.mxu0 %v3313
  %3315 = vmatprep.subr.mxu0 0.0
  %v3316 = vand.u32 %v151, 4294901760
  %3317 = vmatpush2.msra.mxu0 %v3316
  %3318 = vmatprep.subr.mxu0 0.0
  %v3319 = vand.u32 %v150, 4294901760
  %3320 = vmatpush2.msra.mxu0 %v3319
  %3321 = vmatprep.subr.mxu0 0.0
  %v3322 = vand.u32 %v149, 4294901760
  %3323 = vmatpush2.msra.mxu0 %v3322
  %3324 = vmatprep.subr.mxu0 0.0
  %v3325 = vand.u32 %v148, 4294901760
  %3326 = vmatpush2.msra.mxu0 %v3325
  %3327 = vmatprep.subr.mxu0 0.0
  %v3328 = vand.u32 %v147, 4294901760
  %3329 = vmatpush2.msra.mxu0 %v3328
  %3330 = vmatprep.subr.mxu0 0.0
  %v3331 = vand.u32 %v146, 4294901760
  %3332 = vmatpush2.msra.mxu0 %v3331
  %v3333 = vand.u32 %v33, 4294901760
  %v3334 = vsub.f32 %v33, %v3333
  %v3335 = vand.u32 %v3334, 4294901760
  %3336 = vmatprep.mubr.f32.mxu0 %v3335
  %v3337 = vand.u32 %v32, 4294901760
  %v3338 = vsub.f32 %v32, %v3337
  %v3339 = vand.u32 %v3338, 4294901760
  %3340 = vmatmul.mubr.f32.gmra.mxu0 %v3339
  %v3341 = vpop.f32.mrf.mxu0
  %v3342 = vadd.f32 %v3234, %v3341
  %v3343 = vpop.f32.mrf.mxu0
  %3344 = vdwg.mxu0
  %3345 = vmatprep.subr.mxu0 0.0
  %v3346 = vand.u32 %v145, 4294901760
  %v3347 = vsub.f32 %v145, %v3346
  %v3348 = vand.u32 %v3347, 4294901760
  %3349 = vmatpush1.msra.mxu0 %v3348
  %3350 = vmatprep.subr.mxu0 0.0
  %v3351 = vand.u32 %v144, 4294901760
  %v3352 = vsub.f32 %v144, %v3351
  %v3353 = vand.u32 %v3352, 4294901760
  %3354 = vmatpush1.msra.mxu0 %v3353
  %3355 = vmatprep.subr.mxu0 0.0
  %v3356 = vand.u32 %v143, 4294901760
  %v3357 = vsub.f32 %v143, %v3356
  %v3358 = vand.u32 %v3357, 4294901760
  %3359 = vmatpush1.msra.mxu0 %v3358
  %3360 = vmatprep.subr.mxu0 0.0
  %v3361 = vand.u32 %v142, 4294901760
  %v3362 = vsub.f32 %v142, %v3361
  %v3363 = vand.u32 %v3362, 4294901760
  %3364 = vmatpush1.msra.mxu0 %v3363
  %3365 = vmatprep.subr.mxu0 0.0
  %v3366 = vand.u32 %v141, 4294901760
  %v3367 = vsub.f32 %v141, %v3366
  %v3368 = vand.u32 %v3367, 4294901760
  %3369 = vmatpush1.msra.mxu0 %v3368
  %3370 = vmatprep.subr.mxu0 0.0
  %v3371 = vand.u32 %v140, 4294901760
  %v3372 = vsub.f32 %v140, %v3371
  %v3373 = vand.u32 %v3372, 4294901760
  %3374 = vmatpush1.msra.mxu0 %v3373
  %3375 = vmatprep.subr.mxu0 0.0
  %v3376 = vand.u32 %v139, 4294901760
  %v3377 = vsub.f32 %v139, %v3376
  %v3378 = vand.u32 %v3377, 4294901760
  %3379 = vmatpush1.msra.mxu0 %v3378
  %3380 = vmatprep.subr.mxu0 0.0
  %v3381 = vand.u32 %v138, 4294901760
  %v3382 = vsub.f32 %v138, %v3381
  %v3383 = vand.u32 %v3382, 4294901760
  %3384 = vmatpush1.msra.mxu0 %v3383
  %3385 = vmatprep.subr.mxu0 0.0
  %v3386 = vand.u32 %v137, 4294901760
  %v3387 = vsub.f32 %v137, %v3386
  %v3388 = vand.u32 %v3387, 4294901760
  %3389 = vmatpush1.msra.mxu0 %v3388
  %3390 = vmatprep.subr.mxu0 0.0
  %v3391 = vand.u32 %v136, 4294901760
  %v3392 = vsub.f32 %v136, %v3391
  %v3393 = vand.u32 %v3392, 4294901760
  %3394 = vmatpush1.msra.mxu0 %v3393
  %3395 = vmatprep.subr.mxu0 0.0
  %v3396 = vand.u32 %v135, 4294901760
  %v3397 = vsub.f32 %v135, %v3396
  %v3398 = vand.u32 %v3397, 4294901760
  %3399 = vmatpush1.msra.mxu0 %v3398
  %3400 = vmatprep.subr.mxu0 0.0
  %v3401 = vand.u32 %v134, 4294901760
  %v3402 = vsub.f32 %v134, %v3401
  %v3403 = vand.u32 %v3402, 4294901760
  %3404 = vmatpush1.msra.mxu0 %v3403
  %3405 = vmatprep.subr.mxu0 0.0
  %v3406 = vand.u32 %v133, 4294901760
  %v3407 = vsub.f32 %v133, %v3406
  %v3408 = vand.u32 %v3407, 4294901760
  %3409 = vmatpush1.msra.mxu0 %v3408
  %3410 = vmatprep.subr.mxu0 0.0
  %v3411 = vand.u32 %v132, 4294901760
  %v3412 = vsub.f32 %v132, %v3411
  %v3413 = vand.u32 %v3412, 4294901760
  %3414 = vmatpush1.msra.mxu0 %v3413
  %3415 = vmatprep.subr.mxu0 0.0
  %v3416 = vand.u32 %v131, 4294901760
  %v3417 = vsub.f32 %v131, %v3416
  %v3418 = vand.u32 %v3417, 4294901760
  %3419 = vmatpush1.msra.mxu0 %v3418
  %3420 = vmatprep.subr.mxu0 0.0
  %v3421 = vand.u32 %v130, 4294901760
  %v3422 = vsub.f32 %v130, %v3421
  %v3423 = vand.u32 %v3422, 4294901760
  %3424 = vmatpush1.msra.mxu0 %v3423
  %3425 = vmatprep.subr.mxu0 0.0
  %v3426 = vand.u32 %v161, 4294901760
  %v3427 = vsub.f32 %v161, %v3426
  %v3428 = vand.u32 %v3427, 4294901760
  %3429 = vmatpush2.msra.mxu0 %v3428
  %3430 = vmatprep.subr.mxu0 0.0
  %v3431 = vand.u32 %v160, 4294901760
  %v3432 = vsub.f32 %v160, %v3431
  %v3433 = vand.u32 %v3432, 4294901760
  %3434 = vmatpush2.msra.mxu0 %v3433
  %3435 = vmatprep.subr.mxu0 0.0
  %v3436 = vand.u32 %v159, 4294901760
  %v3437 = vsub.f32 %v159, %v3436
  %v3438 = vand.u32 %v3437, 4294901760
  %3439 = vmatpush2.msra.mxu0 %v3438
  %3440 = vmatprep.subr.mxu0 0.0
  %v3441 = vand.u32 %v158, 4294901760
  %v3442 = vsub.f32 %v158, %v3441
  %v3443 = vand.u32 %v3442, 4294901760
  %3444 = vmatpush2.msra.mxu0 %v3443
  %3445 = vmatprep.subr.mxu0 0.0
  %v3446 = vand.u32 %v157, 4294901760
  %v3447 = vsub.f32 %v157, %v3446
  %v3448 = vand.u32 %v3447, 4294901760
  %3449 = vmatpush2.msra.mxu0 %v3448
  %3450 = vmatprep.subr.mxu0 0.0
  %v3451 = vand.u32 %v156, 4294901760
  %v3452 = vsub.f32 %v156, %v3451
  %v3453 = vand.u32 %v3452, 4294901760
  %3454 = vmatpush2.msra.mxu0 %v3453
  %3455 = vmatprep.subr.mxu0 0.0
  %v3456 = vand.u32 %v155, 4294901760
  %v3457 = vsub.f32 %v155, %v3456
  %v3458 = vand.u32 %v3457, 4294901760
  %3459 = vmatpush2.msra.mxu0 %v3458
  %3460 = vmatprep.subr.mxu0 0.0
  %v3461 = vand.u32 %v154, 4294901760
  %v3462 = vsub.f32 %v154, %v3461
  %v3463 = vand.u32 %v3462, 4294901760
  %3464 = vmatpush2.msra.mxu0 %v3463
  %3465 = vmatprep.subr.mxu0 0.0
  %v3466 = vand.u32 %v153, 4294901760
  %v3467 = vsub.f32 %v153, %v3466
  %v3468 = vand.u32 %v3467, 4294901760
  %3469 = vmatpush2.msra.mxu0 %v3468
  %3470 = vmatprep.subr.mxu0 0.0
  %v3471 = vand.u32 %v152, 4294901760
  %v3472 = vsub.f32 %v152, %v3471
  %v3473 = vand.u32 %v3472, 4294901760
  %3474 = vmatpush2.msra.mxu0 %v3473
  %3475 = vmatprep.subr.mxu0 0.0
  %v3476 = vand.u32 %v151, 4294901760
  %v3477 = vsub.f32 %v151, %v3476
  %v3478 = vand.u32 %v3477, 4294901760
  %3479 = vmatpush2.msra.mxu0 %v3478
  %3480 = vmatprep.subr.mxu0 0.0
  %v3481 = vand.u32 %v150, 4294901760
  %v3482 = vsub.f32 %v150, %v3481
  %v3483 = vand.u32 %v3482, 4294901760
  %3484 = vmatpush2.msra.mxu0 %v3483
  %3485 = vmatprep.subr.mxu0 0.0
  %v3486 = vand.u32 %v149, 4294901760
  %v3487 = vsub.f32 %v149, %v3486
  %v3488 = vand.u32 %v3487, 4294901760
  %3489 = vmatpush2.msra.mxu0 %v3488
  %3490 = vmatprep.subr.mxu0 0.0
  %v3491 = vand.u32 %v148, 4294901760
  %v3492 = vsub.f32 %v148, %v3491
  %v3493 = vand.u32 %v3492, 4294901760
  %3494 = vmatpush2.msra.mxu0 %v3493
  %3495 = vmatprep.subr.mxu0 0.0
  %v3496 = vand.u32 %v147, 4294901760
  %v3497 = vsub.f32 %v147, %v3496
  %v3498 = vand.u32 %v3497, 4294901760
  %3499 = vmatpush2.msra.mxu0 %v3498
  %3500 = vmatprep.subr.mxu0 0.0
  %v3501 = vand.u32 %v146, 4294901760
  %v3502 = vsub.f32 %v146, %v3501
  %v3503 = vand.u32 %v3502, 4294901760
  %3504 = vmatpush2.msra.mxu0 %v3503
  %v3505 = vand.u32 %v33, 4294901760
  %3506 = vmatprep.mubr.f32.mxu0 %v3505
  %v3507 = vand.u32 %v32, 4294901760
  %3508 = vmatmul.mubr.f32.gmra.mxu0 %v3507
  %v3509 = vpop.f32.mrf.mxu0
  %v3510 = vadd.f32 %v3342, %v3509
  %v3511 = vpop.f32.mrf.mxu0
  %3512 = vdwg.mxu0
  %3513 = vmatprep.subr.mxu0 0.0
  %v3514 = vand.u32 %v145, 4294901760
  %3515 = vmatpush1.msra.mxu0 %v3514
  %3516 = vmatprep.subr.mxu0 0.0
  %v3517 = vand.u32 %v144, 4294901760
  %3518 = vmatpush1.msra.mxu0 %v3517
  %3519 = vmatprep.subr.mxu0 0.0
  %v3520 = vand.u32 %v143, 4294901760
  %3521 = vmatpush1.msra.mxu0 %v3520
  %3522 = vmatprep.subr.mxu0 0.0
  %v3523 = vand.u32 %v142, 4294901760
  %3524 = vmatpush1.msra.mxu0 %v3523
  %3525 = vmatprep.subr.mxu0 0.0
  %v3526 = vand.u32 %v141, 4294901760
  %3527 = vmatpush1.msra.mxu0 %v3526
  %3528 = vmatprep.subr.mxu0 0.0
  %v3529 = vand.u32 %v140, 4294901760
  %3530 = vmatpush1.msra.mxu0 %v3529
  %3531 = vmatprep.subr.mxu0 0.0
  %v3532 = vand.u32 %v139, 4294901760
  %3533 = vmatpush1.msra.mxu0 %v3532
  %3534 = vmatprep.subr.mxu0 0.0
  %v3535 = vand.u32 %v138, 4294901760
  %3536 = vmatpush1.msra.mxu0 %v3535
  %3537 = vmatprep.subr.mxu0 0.0
  %v3538 = vand.u32 %v137, 4294901760
  %3539 = vmatpush1.msra.mxu0 %v3538
  %3540 = vmatprep.subr.mxu0 0.0
  %v3541 = vand.u32 %v136, 4294901760
  %3542 = vmatpush1.msra.mxu0 %v3541
  %3543 = vmatprep.subr.mxu0 0.0
  %v3544 = vand.u32 %v135, 4294901760
  %3545 = vmatpush1.msra.mxu0 %v3544
  %3546 = vmatprep.subr.mxu0 0.0
  %v3547 = vand.u32 %v134, 4294901760
  %3548 = vmatpush1.msra.mxu0 %v3547
  %3549 = vmatprep.subr.mxu0 0.0
  %v3550 = vand.u32 %v133, 4294901760
  %3551 = vmatpush1.msra.mxu0 %v3550
  %3552 = vmatprep.subr.mxu0 0.0
  %v3553 = vand.u32 %v132, 4294901760
  %3554 = vmatpush1.msra.mxu0 %v3553
  %3555 = vmatprep.subr.mxu0 0.0
  %v3556 = vand.u32 %v131, 4294901760
  %3557 = vmatpush1.msra.mxu0 %v3556
  %3558 = vmatprep.subr.mxu0 0.0
  %v3559 = vand.u32 %v130, 4294901760
  %3560 = vmatpush1.msra.mxu0 %v3559
  %3561 = vmatprep.subr.mxu0 0.0
  %v3562 = vand.u32 %v161, 4294901760
  %3563 = vmatpush2.msra.mxu0 %v3562
  %3564 = vmatprep.subr.mxu0 0.0
  %v3565 = vand.u32 %v160, 4294901760
  %3566 = vmatpush2.msra.mxu0 %v3565
  %3567 = vmatprep.subr.mxu0 0.0
  %v3568 = vand.u32 %v159, 4294901760
  %3569 = vmatpush2.msra.mxu0 %v3568
  %3570 = vmatprep.subr.mxu0 0.0
  %v3571 = vand.u32 %v158, 4294901760
  %3572 = vmatpush2.msra.mxu0 %v3571
  %3573 = vmatprep.subr.mxu0 0.0
  %v3574 = vand.u32 %v157, 4294901760
  %3575 = vmatpush2.msra.mxu0 %v3574
  %3576 = vmatprep.subr.mxu0 0.0
  %v3577 = vand.u32 %v156, 4294901760
  %3578 = vmatpush2.msra.mxu0 %v3577
  %3579 = vmatprep.subr.mxu0 0.0
  %v3580 = vand.u32 %v155, 4294901760
  %3581 = vmatpush2.msra.mxu0 %v3580
  %3582 = vmatprep.subr.mxu0 0.0
  %v3583 = vand.u32 %v154, 4294901760
  %3584 = vmatpush2.msra.mxu0 %v3583
  %3585 = vmatprep.subr.mxu0 0.0
  %v3586 = vand.u32 %v153, 4294901760
  %3587 = vmatpush2.msra.mxu0 %v3586
  %3588 = vmatprep.subr.mxu0 0.0
  %v3589 = vand.u32 %v152, 4294901760
  %3590 = vmatpush2.msra.mxu0 %v3589
  %3591 = vmatprep.subr.mxu0 0.0
  %v3592 = vand.u32 %v151, 4294901760
  %3593 = vmatpush2.msra.mxu0 %v3592
  %3594 = vmatprep.subr.mxu0 0.0
  %v3595 = vand.u32 %v150, 4294901760
  %3596 = vmatpush2.msra.mxu0 %v3595
  %3597 = vmatprep.subr.mxu0 0.0
  %v3598 = vand.u32 %v149, 4294901760
  %3599 = vmatpush2.msra.mxu0 %v3598
  %3600 = vmatprep.subr.mxu0 0.0
  %v3601 = vand.u32 %v148, 4294901760
  %3602 = vmatpush2.msra.mxu0 %v3601
  %3603 = vmatprep.subr.mxu0 0.0
  %v3604 = vand.u32 %v147, 4294901760
  %3605 = vmatpush2.msra.mxu0 %v3604
  %3606 = vmatprep.subr.mxu0 0.0
  %v3607 = vand.u32 %v146, 4294901760
  %3608 = vmatpush2.msra.mxu0 %v3607
  %v3609 = vand.u32 %v33, 4294901760
  %3610 = vmatprep.mubr.f32.mxu0 %v3609
  %v3611 = vand.u32 %v32, 4294901760
  %3612 = vmatmul.mubr.f32.gmra.mxu0 %v3611
  %v3613 = vpop.f32.mrf.mxu0
  %v3614 = vadd.f32 %v3510, %v3613
  %v3615 = vpop.f32.mrf.mxu0
  %3616 = vdwg.mxu0
  %vm3617 = vcmp.gt.f32.partialorder %v3614, 0.0
  %v3618 = vmul.f32 %v3614, 0.2
  %v3619 = vsel %vm3617, %v3614, %v3618
  %v3620 = vld [vmem:[%s3] sm:$0xff]
  %v3621 = vld [vmem:[%s3 + $0x8] sm:$0xff]
  %v3622 = vld [vmem:[%s3 + $0x10] sm:$0xff]
  %v3623 = vld [vmem:[%s3 + $0x18] sm:$0xff]
  %v3624 = vld [vmem:[%s3 + $0x20] sm:$0xff]
  %v3625 = vld [vmem:[%s3 + $0x28] sm:$0xff]
  %v3626 = vld [vmem:[%s3 + $0x30] sm:$0xff]
  %v3627 = vld [vmem:[%s3 + $0x38] sm:$0xff]
  %v3628 = vld [vmem:[%s4] sm:$0x1]
  %v3630 = vlaneseq
  %v3631 = vshrl.u32 %v3630, 7
  %v3632 = vsub.s32 0, %v3631
  %v3633 = vrot.slane %v3628, %v3632
  %vm3635 = vcmask 523264
  %v3637 = vsel %vm3635, %v3619, 0
  %3639 = vmatprep.subr.mxu0 0.0
  %3640 = vmatpush1.msra.mxu0 0.0
  %3641 = vmatprep.subr.mxu0 0.0
  %3642 = vmatpush1.msra.mxu0 0.0
  %3643 = vmatprep.subr.mxu0 0.0
  %3644 = vmatpush1.msra.mxu0 0.0
  %3645 = vmatprep.subr.mxu0 0.0
  %3646 = vmatpush1.msra.mxu0 0.0
  %3647 = vmatprep.subr.mxu0 0.0
  %3648 = vmatpush1.msra.mxu0 0.0
  %3649 = vmatprep.subr.mxu0 0.0
  %3650 = vmatpush1.msra.mxu0 0.0
  %3651 = vmatprep.subr.mxu0 0.0
  %3652 = vmatpush1.msra.mxu0 0.0
  %3653 = vmatprep.subr.mxu0 0.0
  %3654 = vmatpush1.msra.mxu0 0.0
  %3655 = vmatprep.subr.mxu0 0.0
  %v3656 = vand.u32 %v3627, 4294901760
  %3657 = vmatpush1.msra.mxu0 %v3656
  %3658 = vmatprep.subr.mxu0 0.0
  %v3659 = vand.u32 %v3626, 4294901760
  %3660 = vmatpush1.msra.mxu0 %v3659
  %3661 = vmatprep.subr.mxu0 0.0
  %v3662 = vand.u32 %v3625, 4294901760
  %3663 = vmatpush1.msra.mxu0 %v3662
  %3664 = vmatprep.subr.mxu0 0.0
  %v3665 = vand.u32 %v3624, 4294901760
  %3666 = vmatpush1.msra.mxu0 %v3665
  %3667 = vmatprep.subr.mxu0 0.0
  %v3668 = vand.u32 %v3623, 4294901760
  %3669 = vmatpush1.msra.mxu0 %v3668
  %3670 = vmatprep.subr.mxu0 0.0
  %v3671 = vand.u32 %v3622, 4294901760
  %3672 = vmatpush1.msra.mxu0 %v3671
  %3673 = vmatprep.subr.mxu0 0.0
  %v3674 = vand.u32 %v3621, 4294901760
  %3675 = vmatpush1.msra.mxu0 %v3674
  %3676 = vmatprep.subr.mxu0 0.0
  %v3677 = vand.u32 %v3620, 4294901760
  %3678 = vmatpush1.msra.mxu0 %v3677
  %3679 = vmatprep.subr.mxu0 0.0
  %3680 = vmatpush2.msra.mxu0 0.0
  %3681 = vmatprep.subr.mxu0 0.0
  %3682 = vmatpush2.msra.mxu0 0.0
  %3683 = vmatprep.subr.mxu0 0.0
  %3684 = vmatpush2.msra.mxu0 0.0
  %3685 = vmatprep.subr.mxu0 0.0
  %3686 = vmatpush2.msra.mxu0 0.0
  %3687 = vmatprep.subr.mxu0 0.0
  %3688 = vmatpush2.msra.mxu0 0.0
  %3689 = vmatprep.subr.mxu0 0.0
  %3690 = vmatpush2.msra.mxu0 0.0
  %3691 = vmatprep.subr.mxu0 0.0
  %3692 = vmatpush2.msra.mxu0 0.0
  %3693 = vmatprep.subr.mxu0 0.0
  %3694 = vmatpush2.msra.mxu0 0.0
  %3695 = vmatprep.subr.mxu0 0.0
  %3696 = vmatpush2.msra.mxu0 0.0
  %3697 = vmatprep.subr.mxu0 0.0
  %3698 = vmatpush2.msra.mxu0 0.0
  %3699 = vmatprep.subr.mxu0 0.0
  %3700 = vmatpush2.msra.mxu0 0.0
  %3701 = vmatprep.subr.mxu0 0.0
  %3702 = vmatpush2.msra.mxu0 0.0
  %3703 = vmatprep.subr.mxu0 0.0
  %3704 = vmatpush2.msra.mxu0 0.0
  %3705 = vmatprep.subr.mxu0 0.0
  %3706 = vmatpush2.msra.mxu0 0.0
  %3707 = vmatprep.subr.mxu0 0.0
  %3708 = vmatpush2.msra.mxu0 0.0
  %3709 = vmatprep.subr.mxu0 0.0
  %3710 = vmatpush2.msra.mxu0 0.0
  %3711 = vmatprep.mubr.f32.mxu0 0.0
  %v3712 = vand.u32 %v3637, 4294901760
  %v3713 = vsub.f32 %v3637, %v3712
  %v3714 = vand.u32 %v3713, 4294901760
  %v3715 = vsub.f32 %v3713, %v3714
  %v3716 = vand.u32 %v3715, 4294901760
  %3717 = vmatmul.mubr.f32.gmra.mxu0 %v3716
  %v3718 = vpop.f32.mrf.mxu0
  %v3719 = vadd.f32 %v3633, %v3718
  %v3720 = vpop.f32.mrf.mxu0
  %3721 = vdwg.mxu0
  %3722 = vmatprep.subr.mxu0 0.0
  %3723 = vmatpush1.msra.mxu0 0.0
  %3724 = vmatprep.subr.mxu0 0.0
  %3725 = vmatpush1.msra.mxu0 0.0
  %3726 = vmatprep.subr.mxu0 0.0
  %3727 = vmatpush1.msra.mxu0 0.0
  %3728 = vmatprep.subr.mxu0 0.0
  %3729 = vmatpush1.msra.mxu0 0.0
  %3730 = vmatprep.subr.mxu0 0.0
  %3731 = vmatpush1.msra.mxu0 0.0
  %3732 = vmatprep.subr.mxu0 0.0
  %3733 = vmatpush1.msra.mxu0 0.0
  %3734 = vmatprep.subr.mxu0 0.0
  %3735 = vmatpush1.msra.mxu0 0.0
  %3736 = vmatprep.subr.mxu0 0.0
  %3737 = vmatpush1.msra.mxu0 0.0
  %3738 = vmatprep.subr.mxu0 0.0
  %v3739 = vand.u32 %v3627, 4294901760
  %v3740 = vsub.f32 %v3627, %v3739
  %v3741 = vand.u32 %v3740, 4294901760
  %v3742 = vsub.f32 %v3740, %v3741
  %v3743 = vand.u32 %v3742, 4294901760
  %3744 = vmatpush1.msra.mxu0 %v3743
  %3745 = vmatprep.subr.mxu0 0.0
  %v3746 = vand.u32 %v3626, 4294901760
  %v3747 = vsub.f32 %v3626, %v3746
  %v3748 = vand.u32 %v3747, 4294901760
  %v3749 = vsub.f32 %v3747, %v3748
  %v3750 = vand.u32 %v3749, 4294901760
  %3751 = vmatpush1.msra.mxu0 %v3750
  %3752 = vmatprep.subr.mxu0 0.0
  %v3753 = vand.u32 %v3625, 4294901760
  %v3754 = vsub.f32 %v3625, %v3753
  %v3755 = vand.u32 %v3754, 4294901760
  %v3756 = vsub.f32 %v3754, %v3755
  %v3757 = vand.u32 %v3756, 4294901760
  %3758 = vmatpush1.msra.mxu0 %v3757
  %3759 = vmatprep.subr.mxu0 0.0
  %v3760 = vand.u32 %v3624, 4294901760
  %v3761 = vsub.f32 %v3624, %v3760
  %v3762 = vand.u32 %v3761, 4294901760
  %v3763 = vsub.f32 %v3761, %v3762
  %v3764 = vand.u32 %v3763, 4294901760
  %3765 = vmatpush1.msra.mxu0 %v3764
  %3766 = vmatprep.subr.mxu0 0.0
  %v3767 = vand.u32 %v3623, 4294901760
  %v3768 = vsub.f32 %v3623, %v3767
  %v3769 = vand.u32 %v3768, 4294901760
  %v3770 = vsub.f32 %v3768, %v3769
  %v3771 = vand.u32 %v3770, 4294901760
  %3772 = vmatpush1.msra.mxu0 %v3771
  %3773 = vmatprep.subr.mxu0 0.0
  %v3774 = vand.u32 %v3622, 4294901760
  %v3775 = vsub.f32 %v3622, %v3774
  %v3776 = vand.u32 %v3775, 4294901760
  %v3777 = vsub.f32 %v3775, %v3776
  %v3778 = vand.u32 %v3777, 4294901760
  %3779 = vmatpush1.msra.mxu0 %v3778
  %3780 = vmatprep.subr.mxu0 0.0
  %v3781 = vand.u32 %v3621, 4294901760
  %v3782 = vsub.f32 %v3621, %v3781
  %v3783 = vand.u32 %v3782, 4294901760
  %v3784 = vsub.f32 %v3782, %v3783
  %v3785 = vand.u32 %v3784, 4294901760
  %3786 = vmatpush1.msra.mxu0 %v3785
  %3787 = vmatprep.subr.mxu0 0.0
  %v3788 = vand.u32 %v3620, 4294901760
  %v3789 = vsub.f32 %v3620, %v3788
  %v3790 = vand.u32 %v3789, 4294901760
  %v3791 = vsub.f32 %v3789, %v3790
  %v3792 = vand.u32 %v3791, 4294901760
  %3793 = vmatpush1.msra.mxu0 %v3792
  %3794 = vmatprep.subr.mxu0 0.0
  %3795 = vmatpush2.msra.mxu0 0.0
  %3796 = vmatprep.subr.mxu0 0.0
  %3797 = vmatpush2.msra.mxu0 0.0
  %3798 = vmatprep.subr.mxu0 0.0
  %3799 = vmatpush2.msra.mxu0 0.0
  %3800 = vmatprep.subr.mxu0 0.0
  %3801 = vmatpush2.msra.mxu0 0.0
  %3802 = vmatprep.subr.mxu0 0.0
  %3803 = vmatpush2.msra.mxu0 0.0
  %3804 = vmatprep.subr.mxu0 0.0
  %3805 = vmatpush2.msra.mxu0 0.0
  %3806 = vmatprep.subr.mxu0 0.0
  %3807 = vmatpush2.msra.mxu0 0.0
  %3808 = vmatprep.subr.mxu0 0.0
  %3809 = vmatpush2.msra.mxu0 0.0
  %3810 = vmatprep.subr.mxu0 0.0
  %3811 = vmatpush2.msra.mxu0 0.0
  %3812 = vmatprep.subr.mxu0 0.0
  %3813 = vmatpush2.msra.mxu0 0.0
  %3814 = vmatprep.subr.mxu0 0.0
  %3815 = vmatpush2.msra.mxu0 0.0
  %3816 = vmatprep.subr.mxu0 0.0
  %3817 = vmatpush2.msra.mxu0 0.0
  %3818 = vmatprep.subr.mxu0 0.0
  %3819 = vmatpush2.msra.mxu0 0.0
  %3820 = vmatprep.subr.mxu0 0.0
  %3821 = vmatpush2.msra.mxu0 0.0
  %3822 = vmatprep.subr.mxu0 0.0
  %3823 = vmatpush2.msra.mxu0 0.0
  %3824 = vmatprep.subr.mxu0 0.0
  %3825 = vmatpush2.msra.mxu0 0.0
  %3826 = vmatprep.mubr.f32.mxu0 0.0
  %v3827 = vand.u32 %v3637, 4294901760
  %3828 = vmatmul.mubr.f32.gmra.mxu0 %v3827
  %v3829 = vpop.f32.mrf.mxu0
  %v3830 = vadd.f32 %v3719, %v3829
  %v3831 = vpop.f32.mrf.mxu0
  %3832 = vdwg.mxu0
  %3833 = vmatprep.subr.mxu0 0.0
  %3834 = vmatpush1.msra.mxu0 0.0
  %3835 = vmatprep.subr.mxu0 0.0
  %3836 = vmatpush1.msra.mxu0 0.0
  %3837 = vmatprep.subr.mxu0 0.0
  %3838 = vmatpush1.msra.mxu0 0.0
  %3839 = vmatprep.subr.mxu0 0.0
  %3840 = vmatpush1.msra.mxu0 0.0
  %3841 = vmatprep.subr.mxu0 0.0
  %3842 = vmatpush1.msra.mxu0 0.0
  %3843 = vmatprep.subr.mxu0 0.0
  %3844 = vmatpush1.msra.mxu0 0.0
  %3845 = vmatprep.subr.mxu0 0.0
  %3846 = vmatpush1.msra.mxu0 0.0
  %3847 = vmatprep.subr.mxu0 0.0
  %3848 = vmatpush1.msra.mxu0 0.0
  %3849 = vmatprep.subr.mxu0 0.0
  %v3850 = vand.u32 %v3627, 4294901760
  %v3851 = vsub.f32 %v3627, %v3850
  %3852 = vmatpush1.msra.mxu0 %v3851
  %3853 = vmatprep.subr.mxu0 0.0
  %v3854 = vand.u32 %v3626, 4294901760
  %v3855 = vsub.f32 %v3626, %v3854
  %3856 = vmatpush1.msra.mxu0 %v3855
  %3857 = vmatprep.subr.mxu0 0.0
  %v3858 = vand.u32 %v3625, 4294901760
  %v3859 = vsub.f32 %v3625, %v3858
  %3860 = vmatpush1.msra.mxu0 %v3859
  %3861 = vmatprep.subr.mxu0 0.0
  %v3862 = vand.u32 %v3624, 4294901760
  %v3863 = vsub.f32 %v3624, %v3862
  %3864 = vmatpush1.msra.mxu0 %v3863
  %3865 = vmatprep.subr.mxu0 0.0
  %v3866 = vand.u32 %v3623, 4294901760
  %v3867 = vsub.f32 %v3623, %v3866
  %3868 = vmatpush1.msra.mxu0 %v3867
  %3869 = vmatprep.subr.mxu0 0.0
  %v3870 = vand.u32 %v3622, 4294901760
  %v3871 = vsub.f32 %v3622, %v3870
  %3872 = vmatpush1.msra.mxu0 %v3871
  %3873 = vmatprep.subr.mxu0 0.0
  %v3874 = vand.u32 %v3621, 4294901760
  %v3875 = vsub.f32 %v3621, %v3874
  %3876 = vmatpush1.msra.mxu0 %v3875
  %3877 = vmatprep.subr.mxu0 0.0
  %v3878 = vand.u32 %v3620, 4294901760
  %v3879 = vsub.f32 %v3620, %v3878
  %3880 = vmatpush1.msra.mxu0 %v3879
  %3881 = vmatprep.subr.mxu0 0.0
  %3882 = vmatpush2.msra.mxu0 0.0
  %3883 = vmatprep.subr.mxu0 0.0
  %3884 = vmatpush2.msra.mxu0 0.0
  %3885 = vmatprep.subr.mxu0 0.0
  %3886 = vmatpush2.msra.mxu0 0.0
  %3887 = vmatprep.subr.mxu0 0.0
  %3888 = vmatpush2.msra.mxu0 0.0
  %3889 = vmatprep.subr.mxu0 0.0
  %3890 = vmatpush2.msra.mxu0 0.0
  %3891 = vmatprep.subr.mxu0 0.0
  %3892 = vmatpush2.msra.mxu0 0.0
  %3893 = vmatprep.subr.mxu0 0.0
  %3894 = vmatpush2.msra.mxu0 0.0
  %3895 = vmatprep.subr.mxu0 0.0
  %3896 = vmatpush2.msra.mxu0 0.0
  %3897 = vmatprep.subr.mxu0 0.0
  %3898 = vmatpush2.msra.mxu0 0.0
  %3899 = vmatprep.subr.mxu0 0.0
  %3900 = vmatpush2.msra.mxu0 0.0
  %3901 = vmatprep.subr.mxu0 0.0
  %3902 = vmatpush2.msra.mxu0 0.0
  %3903 = vmatprep.subr.mxu0 0.0
  %3904 = vmatpush2.msra.mxu0 0.0
  %3905 = vmatprep.subr.mxu0 0.0
  %3906 = vmatpush2.msra.mxu0 0.0
  %3907 = vmatprep.subr.mxu0 0.0
  %3908 = vmatpush2.msra.mxu0 0.0
  %3909 = vmatprep.subr.mxu0 0.0
  %3910 = vmatpush2.msra.mxu0 0.0
  %3911 = vmatprep.subr.mxu0 0.0
  %3912 = vmatpush2.msra.mxu0 0.0
  %3913 = vmatprep.mubr.f32.mxu0 0.0
  %v3914 = vand.u32 %v3637, 4294901760
  %v3915 = vsub.f32 %v3637, %v3914
  %3916 = vmatmul.mubr.f32.gmra.mxu0 %v3915
  %v3917 = vpop.f32.mrf.mxu0
  %v3918 = vadd.f32 %v3830, %v3917
  %v3919 = vpop.f32.mrf.mxu0
  %3920 = vdwg.mxu0
  %3921 = vmatprep.subr.mxu0 0.0
  %3922 = vmatpush1.msra.mxu0 0.0
  %3923 = vmatprep.subr.mxu0 0.0
  %3924 = vmatpush1.msra.mxu0 0.0
  %3925 = vmatprep.subr.mxu0 0.0
  %3926 = vmatpush1.msra.mxu0 0.0
  %3927 = vmatprep.subr.mxu0 0.0
  %3928 = vmatpush1.msra.mxu0 0.0
  %3929 = vmatprep.subr.mxu0 0.0
  %3930 = vmatpush1.msra.mxu0 0.0
  %3931 = vmatprep.subr.mxu0 0.0
  %3932 = vmatpush1.msra.mxu0 0.0
  %3933 = vmatprep.subr.mxu0 0.0
  %3934 = vmatpush1.msra.mxu0 0.0
  %3935 = vmatprep.subr.mxu0 0.0
  %3936 = vmatpush1.msra.mxu0 0.0
  %3937 = vmatprep.subr.mxu0 0.0
  %v3938 = vand.u32 %v3627, 4294901760
  %3939 = vmatpush1.msra.mxu0 %v3938
  %3940 = vmatprep.subr.mxu0 0.0
  %v3941 = vand.u32 %v3626, 4294901760
  %3942 = vmatpush1.msra.mxu0 %v3941
  %3943 = vmatprep.subr.mxu0 0.0
  %v3944 = vand.u32 %v3625, 4294901760
  %3945 = vmatpush1.msra.mxu0 %v3944
  %3946 = vmatprep.subr.mxu0 0.0
  %v3947 = vand.u32 %v3624, 4294901760
  %3948 = vmatpush1.msra.mxu0 %v3947
  %3949 = vmatprep.subr.mxu0 0.0
  %v3950 = vand.u32 %v3623, 4294901760
  %3951 = vmatpush1.msra.mxu0 %v3950
  %3952 = vmatprep.subr.mxu0 0.0
  %v3953 = vand.u32 %v3622, 4294901760
  %3954 = vmatpush1.msra.mxu0 %v3953
  %3955 = vmatprep.subr.mxu0 0.0
  %v3956 = vand.u32 %v3621, 4294901760
  %3957 = vmatpush1.msra.mxu0 %v3956
  %3958 = vmatprep.subr.mxu0 0.0
  %v3959 = vand.u32 %v3620, 4294901760
  %3960 = vmatpush1.msra.mxu0 %v3959
  %3961 = vmatprep.subr.mxu0 0.0
  %3962 = vmatpush2.msra.mxu0 0.0
  %3963 = vmatprep.subr.mxu0 0.0
  %3964 = vmatpush2.msra.mxu0 0.0
  %3965 = vmatprep.subr.mxu0 0.0
  %3966 = vmatpush2.msra.mxu0 0.0
  %3967 = vmatprep.subr.mxu0 0.0
  %3968 = vmatpush2.msra.mxu0 0.0
  %3969 = vmatprep.subr.mxu0 0.0
  %3970 = vmatpush2.msra.mxu0 0.0
  %3971 = vmatprep.subr.mxu0 0.0
  %3972 = vmatpush2.msra.mxu0 0.0
  %3973 = vmatprep.subr.mxu0 0.0
  %3974 = vmatpush2.msra.mxu0 0.0
  %3975 = vmatprep.subr.mxu0 0.0
  %3976 = vmatpush2.msra.mxu0 0.0
  %3977 = vmatprep.subr.mxu0 0.0
  %3978 = vmatpush2.msra.mxu0 0.0
  %3979 = vmatprep.subr.mxu0 0.0
  %3980 = vmatpush2.msra.mxu0 0.0
  %3981 = vmatprep.subr.mxu0 0.0
  %3982 = vmatpush2.msra.mxu0 0.0
  %3983 = vmatprep.subr.mxu0 0.0
  %3984 = vmatpush2.msra.mxu0 0.0
  %3985 = vmatprep.subr.mxu0 0.0
  %3986 = vmatpush2.msra.mxu0 0.0
  %3987 = vmatprep.subr.mxu0 0.0
  %3988 = vmatpush2.msra.mxu0 0.0
  %3989 = vmatprep.subr.mxu0 0.0
  %3990 = vmatpush2.msra.mxu0 0.0
  %3991 = vmatprep.subr.mxu0 0.0
  %3992 = vmatpush2.msra.mxu0 0.0
  %3993 = vmatprep.mubr.f32.mxu0 0.0
  %v3994 = vand.u32 %v3637, 4294901760
  %v3995 = vsub.f32 %v3637, %v3994
  %v3996 = vand.u32 %v3995, 4294901760
  %3997 = vmatmul.mubr.f32.gmra.mxu0 %v3996
  %v3998 = vpop.f32.mrf.mxu0
  %v3999 = vadd.f32 %v3918, %v3998
  %v4000 = vpop.f32.mrf.mxu0
  %4001 = vdwg.mxu0
  %4002 = vmatprep.subr.mxu0 0.0
  %4003 = vmatpush1.msra.mxu0 0.0
  %4004 = vmatprep.subr.mxu0 0.0
  %4005 = vmatpush1.msra.mxu0 0.0
  %4006 = vmatprep.subr.mxu0 0.0
  %4007 = vmatpush1.msra.mxu0 0.0
  %4008 = vmatprep.subr.mxu0 0.0
  %4009 = vmatpush1.msra.mxu0 0.0
  %4010 = vmatprep.subr.mxu0 0.0
  %4011 = vmatpush1.msra.mxu0 0.0
  %4012 = vmatprep.subr.mxu0 0.0
  %4013 = vmatpush1.msra.mxu0 0.0
  %4014 = vmatprep.subr.mxu0 0.0
  %4015 = vmatpush1.msra.mxu0 0.0
  %4016 = vmatprep.subr.mxu0 0.0
  %4017 = vmatpush1.msra.mxu0 0.0
  %4018 = vmatprep.subr.mxu0 0.0
  %v4019 = vand.u32 %v3627, 4294901760
  %v4020 = vsub.f32 %v3627, %v4019
  %v4021 = vand.u32 %v4020, 4294901760
  %4022 = vmatpush1.msra.mxu0 %v4021
  %4023 = vmatprep.subr.mxu0 0.0
  %v4024 = vand.u32 %v3626, 4294901760
  %v4025 = vsub.f32 %v3626, %v4024
  %v4026 = vand.u32 %v4025, 4294901760
  %4027 = vmatpush1.msra.mxu0 %v4026
  %4028 = vmatprep.subr.mxu0 0.0
  %v4029 = vand.u32 %v3625, 4294901760
  %v4030 = vsub.f32 %v3625, %v4029
  %v4031 = vand.u32 %v4030, 4294901760
  %4032 = vmatpush1.msra.mxu0 %v4031
  %4033 = vmatprep.subr.mxu0 0.0
  %v4034 = vand.u32 %v3624, 4294901760
  %v4035 = vsub.f32 %v3624, %v4034
  %v4036 = vand.u32 %v4035, 4294901760
  %4037 = vmatpush1.msra.mxu0 %v4036
  %4038 = vmatprep.subr.mxu0 0.0
  %v4039 = vand.u32 %v3623, 4294901760
  %v4040 = vsub.f32 %v3623, %v4039
  %v4041 = vand.u32 %v4040, 4294901760
  %4042 = vmatpush1.msra.mxu0 %v4041
  %4043 = vmatprep.subr.mxu0 0.0
  %v4044 = vand.u32 %v3622, 4294901760
  %v4045 = vsub.f32 %v3622, %v4044
  %v4046 = vand.u32 %v4045, 4294901760
  %4047 = vmatpush1.msra.mxu0 %v4046
  %4048 = vmatprep.subr.mxu0 0.0
  %v4049 = vand.u32 %v3621, 4294901760
  %v4050 = vsub.f32 %v3621, %v4049
  %v4051 = vand.u32 %v4050, 4294901760
  %4052 = vmatpush1.msra.mxu0 %v4051
  %4053 = vmatprep.subr.mxu0 0.0
  %v4054 = vand.u32 %v3620, 4294901760
  %v4055 = vsub.f32 %v3620, %v4054
  %v4056 = vand.u32 %v4055, 4294901760
  %4057 = vmatpush1.msra.mxu0 %v4056
  %4058 = vmatprep.subr.mxu0 0.0
  %4059 = vmatpush2.msra.mxu0 0.0
  %4060 = vmatprep.subr.mxu0 0.0
  %4061 = vmatpush2.msra.mxu0 0.0
  %4062 = vmatprep.subr.mxu0 0.0
  %4063 = vmatpush2.msra.mxu0 0.0
  %4064 = vmatprep.subr.mxu0 0.0
  %4065 = vmatpush2.msra.mxu0 0.0
  %4066 = vmatprep.subr.mxu0 0.0
  %4067 = vmatpush2.msra.mxu0 0.0
  %4068 = vmatprep.subr.mxu0 0.0
  %4069 = vmatpush2.msra.mxu0 0.0
  %4070 = vmatprep.subr.mxu0 0.0
  %4071 = vmatpush2.msra.mxu0 0.0
  %4072 = vmatprep.subr.mxu0 0.0
  %4073 = vmatpush2.msra.mxu0 0.0
  %4074 = vmatprep.subr.mxu0 0.0
  %4075 = vmatpush2.msra.mxu0 0.0
  %4076 = vmatprep.subr.mxu0 0.0
  %4077 = vmatpush2.msra.mxu0 0.0
  %4078 = vmatprep.subr.mxu0 0.0
  %4079 = vmatpush2.msra.mxu0 0.0
  %4080 = vmatprep.subr.mxu0 0.0
  %4081 = vmatpush2.msra.mxu0 0.0
  %4082 = vmatprep.subr.mxu0 0.0
  %4083 = vmatpush2.msra.mxu0 0.0
  %4084 = vmatprep.subr.mxu0 0.0
  %4085 = vmatpush2.msra.mxu0 0.0
  %4086 = vmatprep.subr.mxu0 0.0
  %4087 = vmatpush2.msra.mxu0 0.0
  %4088 = vmatprep.subr.mxu0 0.0
  %4089 = vmatpush2.msra.mxu0 0.0
  %4090 = vmatprep.mubr.f32.mxu0 0.0
  %v4091 = vand.u32 %v3637, 4294901760
  %4092 = vmatmul.mubr.f32.gmra.mxu0 %v4091
  %v4093 = vpop.f32.mrf.mxu0
  %v4094 = vadd.f32 %v3999, %v4093
  %v4095 = vpop.f32.mrf.mxu0
  %4096 = vdwg.mxu0
  %4097 = vmatprep.subr.mxu0 0.0
  %4098 = vmatpush1.msra.mxu0 0.0
  %4099 = vmatprep.subr.mxu0 0.0
  %4100 = vmatpush1.msra.mxu0 0.0
  %4101 = vmatprep.subr.mxu0 0.0
  %4102 = vmatpush1.msra.mxu0 0.0
  %4103 = vmatprep.subr.mxu0 0.0
  %4104 = vmatpush1.msra.mxu0 0.0
  %4105 = vmatprep.subr.mxu0 0.0
  %4106 = vmatpush1.msra.mxu0 0.0
  %4107 = vmatprep.subr.mxu0 0.0
  %4108 = vmatpush1.msra.mxu0 0.0
  %4109 = vmatprep.subr.mxu0 0.0
  %4110 = vmatpush1.msra.mxu0 0.0
  %4111 = vmatprep.subr.mxu0 0.0
  %4112 = vmatpush1.msra.mxu0 0.0
  %4113 = vmatprep.subr.mxu0 0.0
  %v4114 = vand.u32 %v3627, 4294901760
  %4115 = vmatpush1.msra.mxu0 %v4114
  %4116 = vmatprep.subr.mxu0 0.0
  %v4117 = vand.u32 %v3626, 4294901760
  %4118 = vmatpush1.msra.mxu0 %v4117
  %4119 = vmatprep.subr.mxu0 0.0
  %v4120 = vand.u32 %v3625, 4294901760
  %4121 = vmatpush1.msra.mxu0 %v4120
  %4122 = vmatprep.subr.mxu0 0.0
  %v4123 = vand.u32 %v3624, 4294901760
  %4124 = vmatpush1.msra.mxu0 %v4123
  %4125 = vmatprep.subr.mxu0 0.0
  %v4126 = vand.u32 %v3623, 4294901760
  %4127 = vmatpush1.msra.mxu0 %v4126
  %4128 = vmatprep.subr.mxu0 0.0
  %v4129 = vand.u32 %v3622, 4294901760
  %4130 = vmatpush1.msra.mxu0 %v4129
  %4131 = vmatprep.subr.mxu0 0.0
  %v4132 = vand.u32 %v3621, 4294901760
  %4133 = vmatpush1.msra.mxu0 %v4132
  %4134 = vmatprep.subr.mxu0 0.0
  %v4135 = vand.u32 %v3620, 4294901760
  %4136 = vmatpush1.msra.mxu0 %v4135
  %4137 = vmatprep.subr.mxu0 0.0
  %4138 = vmatpush2.msra.mxu0 0.0
  %4139 = vmatprep.subr.mxu0 0.0
  %4140 = vmatpush2.msra.mxu0 0.0
  %4141 = vmatprep.subr.mxu0 0.0
  %4142 = vmatpush2.msra.mxu0 0.0
  %4143 = vmatprep.subr.mxu0 0.0
  %4144 = vmatpush2.msra.mxu0 0.0
  %4145 = vmatprep.subr.mxu0 0.0
  %4146 = vmatpush2.msra.mxu0 0.0
  %4147 = vmatprep.subr.mxu0 0.0
  %4148 = vmatpush2.msra.mxu0 0.0
  %4149 = vmatprep.subr.mxu0 0.0
  %4150 = vmatpush2.msra.mxu0 0.0
  %4151 = vmatprep.subr.mxu0 0.0
  %4152 = vmatpush2.msra.mxu0 0.0
  %4153 = vmatprep.subr.mxu0 0.0
  %4154 = vmatpush2.msra.mxu0 0.0
  %4155 = vmatprep.subr.mxu0 0.0
  %4156 = vmatpush2.msra.mxu0 0.0
  %4157 = vmatprep.subr.mxu0 0.0
  %4158 = vmatpush2.msra.mxu0 0.0
  %4159 = vmatprep.subr.mxu0 0.0
  %4160 = vmatpush2.msra.mxu0 0.0
  %4161 = vmatprep.subr.mxu0 0.0
  %4162 = vmatpush2.msra.mxu0 0.0
  %4163 = vmatprep.subr.mxu0 0.0
  %4164 = vmatpush2.msra.mxu0 0.0
  %4165 = vmatprep.subr.mxu0 0.0
  %4166 = vmatpush2.msra.mxu0 0.0
  %4167 = vmatprep.subr.mxu0 0.0
  %4168 = vmatpush2.msra.mxu0 0.0
  %4169 = vmatprep.mubr.f32.mxu0 0.0
  %v4170 = vand.u32 %v3637, 4294901760
  %4171 = vmatmul.mubr.f32.gmra.mxu0 %v4170
  %v4172 = vpop.f32.mrf.mxu0
  %v4173 = vadd.f32 %v4094, %v4172
  %v4174 = vpop.f32.mrf.mxu0
  %4175 = vdwg.mxu0
  %vm4176 = vcmp.gt.f32.partialorder %v4173, 0.0
  %v4177 = vmul.f32 %v4173, 0.2
  %v4178 = vsel %vm4176, %v4173, %v4177
  %v4179 = vld [vmem:[%s5] sm:$0xff]
  %v4180 = vld [vmem:[%s5 + $0x8] sm:$0xff]
  %v4181 = vld [vmem:[%s5 + $0x10] sm:$0xff]
  %v4182 = vld [vmem:[%s5 + $0x18] sm:$0xff]
  %v4183 = vld [vmem:[%s6] sm:$0x1]
  %v4185 = vlaneseq
  %v4186 = vshrl.u32 %v4185, 7
  %v4187 = vsub.s32 0, %v4186
  %v4188 = vrot.slane %v4183, %v4187
  %vm4190 = vcmask 261120
  %v4192 = vsel %vm4190, %v4178, 0
  %4194 = vmatprep.subr.mxu0 0.0
  %4195 = vmatpush1.msra.mxu0 0.0
  %4196 = vmatprep.subr.mxu0 0.0
  %4197 = vmatpush1.msra.mxu0 0.0
  %4198 = vmatprep.subr.mxu0 0.0
  %4199 = vmatpush1.msra.mxu0 0.0
  %4200 = vmatprep.subr.mxu0 0.0
  %4201 = vmatpush1.msra.mxu0 0.0
  %4202 = vmatprep.subr.mxu0 0.0
  %4203 = vmatpush1.msra.mxu0 0.0
  %4204 = vmatprep.subr.mxu0 0.0
  %4205 = vmatpush1.msra.mxu0 0.0
  %4206 = vmatprep.subr.mxu0 0.0
  %4207 = vmatpush1.msra.mxu0 0.0
  %4208 = vmatprep.subr.mxu0 0.0
  %4209 = vmatpush1.msra.mxu0 0.0
  %4210 = vmatprep.subr.mxu0 0.0
  %4211 = vmatpush1.msra.mxu0 0.0
  %4212 = vmatprep.subr.mxu0 0.0
  %4213 = vmatpush1.msra.mxu0 0.0
  %4214 = vmatprep.subr.mxu0 0.0
  %4215 = vmatpush1.msra.mxu0 0.0
  %4216 = vmatprep.subr.mxu0 0.0
  %4217 = vmatpush1.msra.mxu0 0.0
  %4218 = vmatprep.subr.mxu0 0.0
  %v4219 = vand.u32 %v4182, 4294901760
  %4220 = vmatpush1.msra.mxu0 %v4219
  %4221 = vmatprep.subr.mxu0 0.0
  %v4222 = vand.u32 %v4181, 4294901760
  %4223 = vmatpush1.msra.mxu0 %v4222
  %4224 = vmatprep.subr.mxu0 0.0
  %v4225 = vand.u32 %v4180, 4294901760
  %4226 = vmatpush1.msra.mxu0 %v4225
  %4227 = vmatprep.subr.mxu0 0.0
  %v4228 = vand.u32 %v4179, 4294901760
  %4229 = vmatpush1.msra.mxu0 %v4228
  %4230 = vmatprep.subr.mxu0 0.0
  %4231 = vmatpush2.msra.mxu0 0.0
  %4232 = vmatprep.subr.mxu0 0.0
  %4233 = vmatpush2.msra.mxu0 0.0
  %4234 = vmatprep.subr.mxu0 0.0
  %4235 = vmatpush2.msra.mxu0 0.0
  %4236 = vmatprep.subr.mxu0 0.0
  %4237 = vmatpush2.msra.mxu0 0.0
  %4238 = vmatprep.subr.mxu0 0.0
  %4239 = vmatpush2.msra.mxu0 0.0
  %4240 = vmatprep.subr.mxu0 0.0
  %4241 = vmatpush2.msra.mxu0 0.0
  %4242 = vmatprep.subr.mxu0 0.0
  %4243 = vmatpush2.msra.mxu0 0.0
  %4244 = vmatprep.subr.mxu0 0.0
  %4245 = vmatpush2.msra.mxu0 0.0
  %4246 = vmatprep.subr.mxu0 0.0
  %4247 = vmatpush2.msra.mxu0 0.0
  %4248 = vmatprep.subr.mxu0 0.0
  %4249 = vmatpush2.msra.mxu0 0.0
  %4250 = vmatprep.subr.mxu0 0.0
  %4251 = vmatpush2.msra.mxu0 0.0
  %4252 = vmatprep.subr.mxu0 0.0
  %4253 = vmatpush2.msra.mxu0 0.0
  %4254 = vmatprep.subr.mxu0 0.0
  %4255 = vmatpush2.msra.mxu0 0.0
  %4256 = vmatprep.subr.mxu0 0.0
  %4257 = vmatpush2.msra.mxu0 0.0
  %4258 = vmatprep.subr.mxu0 0.0
  %4259 = vmatpush2.msra.mxu0 0.0
  %4260 = vmatprep.subr.mxu0 0.0
  %4261 = vmatpush2.msra.mxu0 0.0
  %4262 = vmatprep.mubr.f32.mxu0 0.0
  %v4263 = vand.u32 %v4192, 4294901760
  %v4264 = vsub.f32 %v4192, %v4263
  %v4265 = vand.u32 %v4264, 4294901760
  %v4266 = vsub.f32 %v4264, %v4265
  %v4267 = vand.u32 %v4266, 4294901760
  %4268 = vmatmul.mubr.f32.gmra.mxu0 %v4267
  %v4269 = vpop.f32.mrf.mxu0
  %v4270 = vadd.f32 %v4188, %v4269
  %v4271 = vpop.f32.mrf.mxu0
  %4272 = vdwg.mxu0
  %4273 = vmatprep.subr.mxu0 0.0
  %4274 = vmatpush1.msra.mxu0 0.0
  %4275 = vmatprep.subr.mxu0 0.0
  %4276 = vmatpush1.msra.mxu0 0.0
  %4277 = vmatprep.subr.mxu0 0.0
  %4278 = vmatpush1.msra.mxu0 0.0
  %4279 = vmatprep.subr.mxu0 0.0
  %4280 = vmatpush1.msra.mxu0 0.0
  %4281 = vmatprep.subr.mxu0 0.0
  %4282 = vmatpush1.msra.mxu0 0.0
  %4283 = vmatprep.subr.mxu0 0.0
  %4284 = vmatpush1.msra.mxu0 0.0
  %4285 = vmatprep.subr.mxu0 0.0
  %4286 = vmatpush1.msra.mxu0 0.0
  %4287 = vmatprep.subr.mxu0 0.0
  %4288 = vmatpush1.msra.mxu0 0.0
  %4289 = vmatprep.subr.mxu0 0.0
  %4290 = vmatpush1.msra.mxu0 0.0
  %4291 = vmatprep.subr.mxu0 0.0
  %4292 = vmatpush1.msra.mxu0 0.0
  %4293 = vmatprep.subr.mxu0 0.0
  %4294 = vmatpush1.msra.mxu0 0.0
  %4295 = vmatprep.subr.mxu0 0.0
  %4296 = vmatpush1.msra.mxu0 0.0
  %4297 = vmatprep.subr.mxu0 0.0
  %v4298 = vand.u32 %v4182, 4294901760
  %v4299 = vsub.f32 %v4182, %v4298
  %v4300 = vand.u32 %v4299, 4294901760
  %v4301 = vsub.f32 %v4299, %v4300
  %v4302 = vand.u32 %v4301, 4294901760
  %4303 = vmatpush1.msra.mxu0 %v4302
  %4304 = vmatprep.subr.mxu0 0.0
  %v4305 = vand.u32 %v4181, 4294901760
  %v4306 = vsub.f32 %v4181, %v4305
  %v4307 = vand.u32 %v4306, 4294901760
  %v4308 = vsub.f32 %v4306, %v4307
  %v4309 = vand.u32 %v4308, 4294901760
  %4310 = vmatpush1.msra.mxu0 %v4309
  %4311 = vmatprep.subr.mxu0 0.0
  %v4312 = vand.u32 %v4180, 4294901760
  %v4313 = vsub.f32 %v4180, %v4312
  %v4314 = vand.u32 %v4313, 4294901760
  %v4315 = vsub.f32 %v4313, %v4314
  %v4316 = vand.u32 %v4315, 4294901760
  %4317 = vmatpush1.msra.mxu0 %v4316
  %4318 = vmatprep.subr.mxu0 0.0
  %v4319 = vand.u32 %v4179, 4294901760
  %v4320 = vsub.f32 %v4179, %v4319
  %v4321 = vand.u32 %v4320, 4294901760
  %v4322 = vsub.f32 %v4320, %v4321
  %v4323 = vand.u32 %v4322, 4294901760
  %4324 = vmatpush1.msra.mxu0 %v4323
  %4325 = vmatprep.subr.mxu0 0.0
  %4326 = vmatpush2.msra.mxu0 0.0
  %4327 = vmatprep.subr.mxu0 0.0
  %4328 = vmatpush2.msra.mxu0 0.0
  %4329 = vmatprep.subr.mxu0 0.0
  %4330 = vmatpush2.msra.mxu0 0.0
  %4331 = vmatprep.subr.mxu0 0.0
  %4332 = vmatpush2.msra.mxu0 0.0
  %4333 = vmatprep.subr.mxu0 0.0
  %4334 = vmatpush2.msra.mxu0 0.0
  %4335 = vmatprep.subr.mxu0 0.0
  %4336 = vmatpush2.msra.mxu0 0.0
  %4337 = vmatprep.subr.mxu0 0.0
  %4338 = vmatpush2.msra.mxu0 0.0
  %4339 = vmatprep.subr.mxu0 0.0
  %4340 = vmatpush2.msra.mxu0 0.0
  %4341 = vmatprep.subr.mxu0 0.0
  %4342 = vmatpush2.msra.mxu0 0.0
  %4343 = vmatprep.subr.mxu0 0.0
  %4344 = vmatpush2.msra.mxu0 0.0
  %4345 = vmatprep.subr.mxu0 0.0
  %4346 = vmatpush2.msra.mxu0 0.0
  %4347 = vmatprep.subr.mxu0 0.0
  %4348 = vmatpush2.msra.mxu0 0.0
  %4349 = vmatprep.subr.mxu0 0.0
  %4350 = vmatpush2.msra.mxu0 0.0
  %4351 = vmatprep.subr.mxu0 0.0
  %4352 = vmatpush2.msra.mxu0 0.0
  %4353 = vmatprep.subr.mxu0 0.0
  %4354 = vmatpush2.msra.mxu0 0.0
  %4355 = vmatprep.subr.mxu0 0.0
  %4356 = vmatpush2.msra.mxu0 0.0
  %4357 = vmatprep.mubr.f32.mxu0 0.0
  %v4358 = vand.u32 %v4192, 4294901760
  %4359 = vmatmul.mubr.f32.gmra.mxu0 %v4358
  %v4360 = vpop.f32.mrf.mxu0
  %v4361 = vadd.f32 %v4270, %v4360
  %v4362 = vpop.f32.mrf.mxu0
  %4363 = vdwg.mxu0
  %4364 = vmatprep.subr.mxu0 0.0
  %4365 = vmatpush1.msra.mxu0 0.0
  %4366 = vmatprep.subr.mxu0 0.0
  %4367 = vmatpush1.msra.mxu0 0.0
  %4368 = vmatprep.subr.mxu0 0.0
  %4369 = vmatpush1.msra.mxu0 0.0
  %4370 = vmatprep.subr.mxu0 0.0
  %4371 = vmatpush1.msra.mxu0 0.0
  %4372 = vmatprep.subr.mxu0 0.0
  %4373 = vmatpush1.msra.mxu0 0.0
  %4374 = vmatprep.subr.mxu0 0.0
  %4375 = vmatpush1.msra.mxu0 0.0
  %4376 = vmatprep.subr.mxu0 0.0
  %4377 = vmatpush1.msra.mxu0 0.0
  %4378 = vmatprep.subr.mxu0 0.0
  %4379 = vmatpush1.msra.mxu0 0.0
  %4380 = vmatprep.subr.mxu0 0.0
  %4381 = vmatpush1.msra.mxu0 0.0
  %4382 = vmatprep.subr.mxu0 0.0
  %4383 = vmatpush1.msra.mxu0 0.0
  %4384 = vmatprep.subr.mxu0 0.0
  %4385 = vmatpush1.msra.mxu0 0.0
  %4386 = vmatprep.subr.mxu0 0.0
  %4387 = vmatpush1.msra.mxu0 0.0
  %4388 = vmatprep.subr.mxu0 0.0
  %v4389 = vand.u32 %v4182, 4294901760
  %v4390 = vsub.f32 %v4182, %v4389
  %4391 = vmatpush1.msra.mxu0 %v4390
  %4392 = vmatprep.subr.mxu0 0.0
  %v4393 = vand.u32 %v4181, 4294901760
  %v4394 = vsub.f32 %v4181, %v4393
  %4395 = vmatpush1.msra.mxu0 %v4394
  %4396 = vmatprep.subr.mxu0 0.0
  %v4397 = vand.u32 %v4180, 4294901760
  %v4398 = vsub.f32 %v4180, %v4397
  %4399 = vmatpush1.msra.mxu0 %v4398
  %4400 = vmatprep.subr.mxu0 0.0
  %v4401 = vand.u32 %v4179, 4294901760
  %v4402 = vsub.f32 %v4179, %v4401
  %4403 = vmatpush1.msra.mxu0 %v4402
  %4404 = vmatprep.subr.mxu0 0.0
  %4405 = vmatpush2.msra.mxu0 0.0
  %4406 = vmatprep.subr.mxu0 0.0
  %4407 = vmatpush2.msra.mxu0 0.0
  %4408 = vmatprep.subr.mxu0 0.0
  %4409 = vmatpush2.msra.mxu0 0.0
  %4410 = vmatprep.subr.mxu0 0.0
  %4411 = vmatpush2.msra.mxu0 0.0
  %4412 = vmatprep.subr.mxu0 0.0
  %4413 = vmatpush2.msra.mxu0 0.0
  %4414 = vmatprep.subr.mxu0 0.0
  %4415 = vmatpush2.msra.mxu0 0.0
  %4416 = vmatprep.subr.mxu0 0.0
  %4417 = vmatpush2.msra.mxu0 0.0
  %4418 = vmatprep.subr.mxu0 0.0
  %4419 = vmatpush2.msra.mxu0 0.0
  %4420 = vmatprep.subr.mxu0 0.0
  %4421 = vmatpush2.msra.mxu0 0.0
  %4422 = vmatprep.subr.mxu0 0.0
  %4423 = vmatpush2.msra.mxu0 0.0
  %4424 = vmatprep.subr.mxu0 0.0
  %4425 = vmatpush2.msra.mxu0 0.0
  %4426 = vmatprep.subr.mxu0 0.0
  %4427 = vmatpush2.msra.mxu0 0.0
  %4428 = vmatprep.subr.mxu0 0.0
  %4429 = vmatpush2.msra.mxu0 0.0
  %4430 = vmatprep.subr.mxu0 0.0
  %4431 = vmatpush2.msra.mxu0 0.0
  %4432 = vmatprep.subr.mxu0 0.0
  %4433 = vmatpush2.msra.mxu0 0.0
  %4434 = vmatprep.subr.mxu0 0.0
  %4435 = vmatpush2.msra.mxu0 0.0
  %4436 = vmatprep.mubr.f32.mxu0 0.0
  %v4437 = vand.u32 %v4192, 4294901760
  %v4438 = vsub.f32 %v4192, %v4437
  %4439 = vmatmul.mubr.f32.gmra.mxu0 %v4438
  %v4440 = vpop.f32.mrf.mxu0
  %v4441 = vadd.f32 %v4361, %v4440
  %v4442 = vpop.f32.mrf.mxu0
  %4443 = vdwg.mxu0
  %4444 = vmatprep.subr.mxu0 0.0
  %4445 = vmatpush1.msra.mxu0 0.0
  %4446 = vmatprep.subr.mxu0 0.0
  %4447 = vmatpush1.msra.mxu0 0.0
  %4448 = vmatprep.subr.mxu0 0.0
  %4449 = vmatpush1.msra.mxu0 0.0
  %4450 = vmatprep.subr.mxu0 0.0
  %4451 = vmatpush1.msra.mxu0 0.0
  %4452 = vmatprep.subr.mxu0 0.0
  %4453 = vmatpush1.msra.mxu0 0.0
  %4454 = vmatprep.subr.mxu0 0.0
  %4455 = vmatpush1.msra.mxu0 0.0
  %4456 = vmatprep.subr.mxu0 0.0
  %4457 = vmatpush1.msra.mxu0 0.0
  %4458 = vmatprep.subr.mxu0 0.0
  %4459 = vmatpush1.msra.mxu0 0.0
  %4460 = vmatprep.subr.mxu0 0.0
  %4461 = vmatpush1.msra.mxu0 0.0
  %4462 = vmatprep.subr.mxu0 0.0
  %4463 = vmatpush1.msra.mxu0 0.0
  %4464 = vmatprep.subr.mxu0 0.0
  %4465 = vmatpush1.msra.mxu0 0.0
  %4466 = vmatprep.subr.mxu0 0.0
  %4467 = vmatpush1.msra.mxu0 0.0
  %4468 = vmatprep.subr.mxu0 0.0
  %v4469 = vand.u32 %v4182, 4294901760
  %4470 = vmatpush1.msra.mxu0 %v4469
  %4471 = vmatprep.subr.mxu0 0.0
  %v4472 = vand.u32 %v4181, 4294901760
  %4473 = vmatpush1.msra.mxu0 %v4472
  %4474 = vmatprep.subr.mxu0 0.0
  %v4475 = vand.u32 %v4180, 4294901760
  %4476 = vmatpush1.msra.mxu0 %v4475
  %4477 = vmatprep.subr.mxu0 0.0
  %v4478 = vand.u32 %v4179, 4294901760
  %4479 = vmatpush1.msra.mxu0 %v4478
  %4480 = vmatprep.subr.mxu0 0.0
  %4481 = vmatpush2.msra.mxu0 0.0
  %4482 = vmatprep.subr.mxu0 0.0
  %4483 = vmatpush2.msra.mxu0 0.0
  %4484 = vmatprep.subr.mxu0 0.0
  %4485 = vmatpush2.msra.mxu0 0.0
  %4486 = vmatprep.subr.mxu0 0.0
  %4487 = vmatpush2.msra.mxu0 0.0
  %4488 = vmatprep.subr.mxu0 0.0
  %4489 = vmatpush2.msra.mxu0 0.0
  %4490 = vmatprep.subr.mxu0 0.0
  %4491 = vmatpush2.msra.mxu0 0.0
  %4492 = vmatprep.subr.mxu0 0.0
  %4493 = vmatpush2.msra.mxu0 0.0
  %4494 = vmatprep.subr.mxu0 0.0
  %4495 = vmatpush2.msra.mxu0 0.0
  %4496 = vmatprep.subr.mxu0 0.0
  %4497 = vmatpush2.msra.mxu0 0.0
  %4498 = vmatprep.subr.mxu0 0.0
  %4499 = vmatpush2.msra.mxu0 0.0
  %4500 = vmatprep.subr.mxu0 0.0
  %4501 = vmatpush2.msra.mxu0 0.0
  %4502 = vmatprep.subr.mxu0 0.0
  %4503 = vmatpush2.msra.mxu0 0.0
  %4504 = vmatprep.subr.mxu0 0.0
  %4505 = vmatpush2.msra.mxu0 0.0
  %4506 = vmatprep.subr.mxu0 0.0
  %4507 = vmatpush2.msra.mxu0 0.0
  %4508 = vmatprep.subr.mxu0 0.0
  %4509 = vmatpush2.msra.mxu0 0.0
  %4510 = vmatprep.subr.mxu0 0.0
  %4511 = vmatpush2.msra.mxu0 0.0
  %4512 = vmatprep.mubr.f32.mxu0 0.0
  %v4513 = vand.u32 %v4192, 4294901760
  %v4514 = vsub.f32 %v4192, %v4513
  %v4515 = vand.u32 %v4514, 4294901760
  %4516 = vmatmul.mubr.f32.gmra.mxu0 %v4515
  %v4517 = vpop.f32.mrf.mxu0
  %v4518 = vadd.f32 %v4441, %v4517
  %v4519 = vpop.f32.mrf.mxu0
  %4520 = vdwg.mxu0
  %4521 = vmatprep.subr.mxu0 0.0
  %4522 = vmatpush1.msra.mxu0 0.0
  %4523 = vmatprep.subr.mxu0 0.0
  %4524 = vmatpush1.msra.mxu0 0.0
  %4525 = vmatprep.subr.mxu0 0.0
  %4526 = vmatpush1.msra.mxu0 0.0
  %4527 = vmatprep.subr.mxu0 0.0
  %4528 = vmatpush1.msra.mxu0 0.0
  %4529 = vmatprep.subr.mxu0 0.0
  %4530 = vmatpush1.msra.mxu0 0.0
  %4531 = vmatprep.subr.mxu0 0.0
  %4532 = vmatpush1.msra.mxu0 0.0
  %4533 = vmatprep.subr.mxu0 0.0
  %4534 = vmatpush1.msra.mxu0 0.0
  %4535 = vmatprep.subr.mxu0 0.0
  %4536 = vmatpush1.msra.mxu0 0.0
  %4537 = vmatprep.subr.mxu0 0.0
  %4538 = vmatpush1.msra.mxu0 0.0
  %4539 = vmatprep.subr.mxu0 0.0
  %4540 = vmatpush1.msra.mxu0 0.0
  %4541 = vmatprep.subr.mxu0 0.0
  %4542 = vmatpush1.msra.mxu0 0.0
  %4543 = vmatprep.subr.mxu0 0.0
  %4544 = vmatpush1.msra.mxu0 0.0
  %4545 = vmatprep.subr.mxu0 0.0
  %v4546 = vand.u32 %v4182, 4294901760
  %v4547 = vsub.f32 %v4182, %v4546
  %v4548 = vand.u32 %v4547, 4294901760
  %4549 = vmatpush1.msra.mxu0 %v4548
  %4550 = vmatprep.subr.mxu0 0.0
  %v4551 = vand.u32 %v4181, 4294901760
  %v4552 = vsub.f32 %v4181, %v4551
  %v4553 = vand.u32 %v4552, 4294901760
  %4554 = vmatpush1.msra.mxu0 %v4553
  %4555 = vmatprep.subr.mxu0 0.0
  %v4556 = vand.u32 %v4180, 4294901760
  %v4557 = vsub.f32 %v4180, %v4556
  %v4558 = vand.u32 %v4557, 4294901760
  %4559 = vmatpush1.msra.mxu0 %v4558
  %4560 = vmatprep.subr.mxu0 0.0
  %v4561 = vand.u32 %v4179, 4294901760
  %v4562 = vsub.f32 %v4179, %v4561
  %v4563 = vand.u32 %v4562, 4294901760
  %4564 = vmatpush1.msra.mxu0 %v4563
  %4565 = vmatprep.subr.mxu0 0.0
  %4566 = vmatpush2.msra.mxu0 0.0
  %4567 = vmatprep.subr.mxu0 0.0
  %4568 = vmatpush2.msra.mxu0 0.0
  %4569 = vmatprep.subr.mxu0 0.0
  %4570 = vmatpush2.msra.mxu0 0.0
  %4571 = vmatprep.subr.mxu0 0.0
  %4572 = vmatpush2.msra.mxu0 0.0
  %4573 = vmatprep.subr.mxu0 0.0
  %4574 = vmatpush2.msra.mxu0 0.0
  %4575 = vmatprep.subr.mxu0 0.0
  %4576 = vmatpush2.msra.mxu0 0.0
  %4577 = vmatprep.subr.mxu0 0.0
  %4578 = vmatpush2.msra.mxu0 0.0
  %4579 = vmatprep.subr.mxu0 0.0
  %4580 = vmatpush2.msra.mxu0 0.0
  %4581 = vmatprep.subr.mxu0 0.0
  %4582 = vmatpush2.msra.mxu0 0.0
  %4583 = vmatprep.subr.mxu0 0.0
  %4584 = vmatpush2.msra.mxu0 0.0
  %4585 = vmatprep.subr.mxu0 0.0
  %4586 = vmatpush2.msra.mxu0 0.0
  %4587 = vmatprep.subr.mxu0 0.0
  %4588 = vmatpush2.msra.mxu0 0.0
  %4589 = vmatprep.subr.mxu0 0.0
  %4590 = vmatpush2.msra.mxu0 0.0
  %4591 = vmatprep.subr.mxu0 0.0
  %4592 = vmatpush2.msra.mxu0 0.0
  %4593 = vmatprep.subr.mxu0 0.0
  %4594 = vmatpush2.msra.mxu0 0.0
  %4595 = vmatprep.subr.mxu0 0.0
  %4596 = vmatpush2.msra.mxu0 0.0
  %4597 = vmatprep.mubr.f32.mxu0 0.0
  %v4598 = vand.u32 %v4192, 4294901760
  %4599 = vmatmul.mubr.f32.gmra.mxu0 %v4598
  %v4600 = vpop.f32.mrf.mxu0
  %v4601 = vadd.f32 %v4518, %v4600
  %v4602 = vpop.f32.mrf.mxu0
  %4603 = vdwg.mxu0
  %4604 = vmatprep.subr.mxu0 0.0
  %4605 = vmatpush1.msra.mxu0 0.0
  %4606 = vmatprep.subr.mxu0 0.0
  %4607 = vmatpush1.msra.mxu0 0.0
  %4608 = vmatprep.subr.mxu0 0.0
  %4609 = vmatpush1.msra.mxu0 0.0
  %4610 = vmatprep.subr.mxu0 0.0
  %4611 = vmatpush1.msra.mxu0 0.0
  %4612 = vmatprep.subr.mxu0 0.0
  %4613 = vmatpush1.msra.mxu0 0.0
  %4614 = vmatprep.subr.mxu0 0.0
  %4615 = vmatpush1.msra.mxu0 0.0
  %4616 = vmatprep.subr.mxu0 0.0
  %4617 = vmatpush1.msra.mxu0 0.0
  %4618 = vmatprep.subr.mxu0 0.0
  %4619 = vmatpush1.msra.mxu0 0.0
  %4620 = vmatprep.subr.mxu0 0.0
  %4621 = vmatpush1.msra.mxu0 0.0
  %4622 = vmatprep.subr.mxu0 0.0
  %4623 = vmatpush1.msra.mxu0 0.0
  %4624 = vmatprep.subr.mxu0 0.0
  %4625 = vmatpush1.msra.mxu0 0.0
  %4626 = vmatprep.subr.mxu0 0.0
  %4627 = vmatpush1.msra.mxu0 0.0
  %4628 = vmatprep.subr.mxu0 0.0
  %v4629 = vand.u32 %v4182, 4294901760
  %4630 = vmatpush1.msra.mxu0 %v4629
  %4631 = vmatprep.subr.mxu0 0.0
  %v4632 = vand.u32 %v4181, 4294901760
  %4633 = vmatpush1.msra.mxu0 %v4632
  %4634 = vmatprep.subr.mxu0 0.0
  %v4635 = vand.u32 %v4180, 4294901760
  %4636 = vmatpush1.msra.mxu0 %v4635
  %4637 = vmatprep.subr.mxu0 0.0
  %v4638 = vand.u32 %v4179, 4294901760
  %4639 = vmatpush1.msra.mxu0 %v4638
  %4640 = vmatprep.subr.mxu0 0.0
  %4641 = vmatpush2.msra.mxu0 0.0
  %4642 = vmatprep.subr.mxu0 0.0
  %4643 = vmatpush2.msra.mxu0 0.0
  %4644 = vmatprep.subr.mxu0 0.0
  %4645 = vmatpush2.msra.mxu0 0.0
  %4646 = vmatprep.subr.mxu0 0.0
  %4647 = vmatpush2.msra.mxu0 0.0
  %4648 = vmatprep.subr.mxu0 0.0
  %4649 = vmatpush2.msra.mxu0 0.0
  %4650 = vmatprep.subr.mxu0 0.0
  %4651 = vmatpush2.msra.mxu0 0.0
  %4652 = vmatprep.subr.mxu0 0.0
  %4653 = vmatpush2.msra.mxu0 0.0
  %4654 = vmatprep.subr.mxu0 0.0
  %4655 = vmatpush2.msra.mxu0 0.0
  %4656 = vmatprep.subr.mxu0 0.0
  %4657 = vmatpush2.msra.mxu0 0.0
  %4658 = vmatprep.subr.mxu0 0.0
  %4659 = vmatpush2.msra.mxu0 0.0
  %4660 = vmatprep.subr.mxu0 0.0
  %4661 = vmatpush2.msra.mxu0 0.0
  %4662 = vmatprep.subr.mxu0 0.0
  %4663 = vmatpush2.msra.mxu0 0.0
  %4664 = vmatprep.subr.mxu0 0.0
  %4665 = vmatpush2.msra.mxu0 0.0
  %4666 = vmatprep.subr.mxu0 0.0
  %4667 = vmatpush2.msra.mxu0 0.0
  %4668 = vmatprep.subr.mxu0 0.0
  %4669 = vmatpush2.msra.mxu0 0.0
  %4670 = vmatprep.subr.mxu0 0.0
  %4671 = vmatpush2.msra.mxu0 0.0
  %4672 = vmatprep.mubr.f32.mxu0 0.0
  %v4673 = vand.u32 %v4192, 4294901760
  %4674 = vmatmul.mubr.f32.gmra.mxu0 %v4673
  %v4675 = vpop.f32.mrf.mxu0
  %v4676 = vadd.f32 %v4601, %v4675
  %v4677 = vpop.f32.mrf.mxu0
  %4678 = vdwg.mxu0
  %4679 = vst [vmem:[%s7] sm:$0xff] %v4676
  // Predicated region
  $region30: #{fc_classifier_forward.1} parent=0 // pred_check
    _
  $region31: #{fc_classifier_forward.1} parent=0 // pred_check_branch
    %4681 = sbr.rel (0) target = $region33
  $region32: #{fc_classifier_forward.1} parent=0 // pred_region
    _
  $region33: #{fc_classifier_forward.1} parent=0 // pred_fallthru
    _
  // Predicated region
  $region34: #{fc_classifier_forward.1} parent=0 // pred_check
    _
  $region35: #{fc_classifier_forward.1} parent=0 // pred_check_branch
    %4683 = sbr.rel (0) target = $region37
  $region36: #{fc_classifier_forward.1} parent=0 // pred_region
    _
  $region37: #{fc_classifier_forward.1} parent=0 // pred_fallthru
    _

</llo_original>
